<compile_context>
chip_gen: v7x
topology: tpu7x:2x2x1
jax: 0.10.0
libtpu: 0.0.40
codegen_flags: <defaults>
</compile_context>

<pallas_src>
import functools

import jax
import jax.numpy as jnp
from jax.experimental import pallas as pl
from jax.experimental.pallas import tpu as pltpu


def _generator_kernel(x_ref,
                      w0_ref, b0_ref,
                      w1_ref, b1_ref, g1_ref, bt1_ref,
                      w2_ref, b2_ref, g2_ref, bt2_ref,
                      w3_ref, b3_ref, g3_ref, bt3_ref,
                      w4_ref, b4_ref,
                      o_ref, *, eps, slope):
    """Fully fused generator forward: 5 x (Linear [+BN] [+act]) in one kernel."""

    def linear(x, w_ref, b_ref):
        # bf16 MXU inputs, f32 accumulation, f32 bias add.
        return jnp.dot(x.astype(jnp.bfloat16), w_ref[...],
                       preferred_element_type=jnp.float32) + b_ref[...]

    def batchnorm(y, g_ref, bt_ref):
        # Training-mode BatchNorm1d: full-batch mean / biased variance, f32.
        mean = jnp.mean(y, axis=0, keepdims=True)
        centered = y - mean
        var = jnp.mean(centered * centered, axis=0, keepdims=True)
        return centered * jax.lax.rsqrt(var + eps) * g_ref[...] + bt_ref[...]

    def leaky_relu(y):
        return jnp.maximum(y, slope * y)

    x = x_ref[...].astype(jnp.float32)

    h = leaky_relu(linear(x, w0_ref, b0_ref))
    h = leaky_relu(batchnorm(linear(h, w1_ref, b1_ref), g1_ref, bt1_ref))
    h = leaky_relu(batchnorm(linear(h, w2_ref, b2_ref), g2_ref, bt2_ref))
    h = leaky_relu(batchnorm(linear(h, w3_ref, b3_ref), g3_ref, bt3_ref))
    h = jnp.tanh(linear(h, w4_ref, b4_ref))

    o_ref[...] = h.astype(o_ref.dtype)


def _round_up(x, m):
    return ((x + m - 1) // m) * m


def init_generator_params(key, latent_dim, img_shape):
    """Deterministic synthetic parameter init (PyTorch-Linear-like uniform).

    Weights are stored in bf16 (MXU inputs); bias / gamma / beta stay f32.
    The final layer's out_features is padded up to a multiple of 128 so the
    kernel's output store is lane-dense; padding is sliced off in the wrapper.
    """
    c, h, w_ = img_shape
    out_dim = c * h * w_
    out_dim_padded = _round_up(out_dim, 128)
    dims = [latent_dim, 128, 256, 512, 1024, out_dim]
    padded_dims = [latent_dim, 128, 256, 512, 1024, out_dim_padded]
    # (use_bn, activation) per layer
    cfg = [(False, "leaky"), (True, "leaky"), (True, "leaky"),
           (True, "leaky"), (False, "tanh")]

    params = []
    for i, (use_bn, act) in enumerate(cfg):
        fan_in, fan_out = dims[i], dims[i + 1]
        fan_out_p = padded_dims[i + 1]
        key, kw, kb = jax.random.split(key, 3)
        bound = 1.0 / jnp.sqrt(jnp.float32(fan_in))
        W = jax.random.uniform(kw, (fan_in, fan_out), jnp.float32, -bound, bound)
        bias = jax.random.uniform(kb, (1, fan_out), jnp.float32, -bound, bound)
        if fan_out_p != fan_out:  # pad final layer to lane-dense width
            W = jnp.pad(W, ((0, 0), (0, fan_out_p - fan_out)))
            bias = jnp.pad(bias, ((0, 0), (0, fan_out_p - fan_out)))
        gamma = jnp.ones((1, fan_out_p), jnp.float32)    # BN default init
        beta = jnp.zeros((1, fan_out_p), jnp.float32)
        params.append(dict(W=W.astype(jnp.bfloat16), b=bias,
                           gamma=gamma, beta=beta,
                           use_bn=use_bn, activation=act))
    return params, out_dim, out_dim_padded


def generator_forward(z, params, img_shape, out_dim, out_dim_padded,
                      *, eps=0.8, slope=0.2):
    B = z.shape[0]
    c, h, w_ = img_shape

    # Flatten operands in the order the kernel expects.
    flat_inputs = [z]
    for p in params:
        flat_inputs.append(p["W"])
        flat_inputs.append(p["b"])
        if p["use_bn"]:
            flat_inputs.append(p["gamma"])
            flat_inputs.append(p["beta"])

    # Cost estimate: 2*B*K*N flops per matmul; tanh + rsqrt transcendentals.
    layer_dims = [(p["W"].shape[0], p["W"].shape[1]) for p in params]
    flops = sum(2 * B * k * n for k, n in layer_dims)
    transcendentals = B * out_dim_padded + sum(
        p["W"].shape[1] for p in params if p["use_bn"])
    bytes_accessed = sum(x.size * x.dtype.itemsize for x in flat_inputs) \
        + B * out_dim_padded * 4

    kernel = functools.partial(_generator_kernel, eps=eps, slope=slope)
    vmem_spec = pl.BlockSpec(memory_space=pltpu.MemorySpace.VMEM)

    out = pl.pallas_call(
        kernel,
        out_shape=jax.ShapeDtypeStruct((B, out_dim_padded), jnp.float32),
        in_specs=[vmem_spec] * len(flat_inputs),
        out_specs=vmem_spec,
        compiler_params=pltpu.CompilerParams(
            vmem_limit_bytes=24 * 1024 * 1024),
        cost_estimate=pl.CostEstimate(
            flops=flops,
            transcendentals=transcendentals,
            bytes_accessed=bytes_accessed),
    )(*flat_inputs)

    # Drop lane padding and reshape to NCHW (matches img.view(B, *img_shape)).
    return out[:, :out_dim].reshape(B, c, h, w_)


if __name__ == "__main__":
    # Small shapes consistent with the module: latent_dim=32, channels=2,
    # img_size=8 -> final Linear(1024, 2*8*8=128).  Batch > 1 so BatchNorm1d
    # batch statistics are well defined.
    latent_dim = 32
    img_shape = (2, 8, 8)
    batch = 8

    key = jax.random.PRNGKey(0)
    key_params, key_z = jax.random.split(key)
    params, out_dim, out_dim_padded = init_generator_params(
        key_params, latent_dim, img_shape)
    z = jax.random.normal(key_z, (batch, latent_dim), jnp.float32)

    img = generator_forward(z, params, img_shape, out_dim, out_dim_padded)
    img = jax.block_until_ready(img)

    assert img.shape == (batch, *img_shape), img.shape
    assert jnp.all(jnp.isfinite(img)), "non-finite output"
    assert float(jnp.max(jnp.abs(img))) <= 1.0 + 1e-6, "tanh range violated"
    print("KERNEL_OK")
</pallas_src>

<mosaic_0001>
module attributes {stable_mosaic.version = 11 : i64} {
  func.func @_generator_kernel(%arg0: memref<8x32xf32, #tpu.memory_space<vmem>>, %arg1: memref<32x128xbf16, #tpu.memory_space<vmem>>, %arg2: memref<1x128xf32, #tpu.memory_space<vmem>>, %arg3: memref<128x256xbf16, #tpu.memory_space<vmem>>, %arg4: memref<1x256xf32, #tpu.memory_space<vmem>>, %arg5: memref<1x256xf32, #tpu.memory_space<vmem>>, %arg6: memref<1x256xf32, #tpu.memory_space<vmem>>, %arg7: memref<256x512xbf16, #tpu.memory_space<vmem>>, %arg8: memref<1x512xf32, #tpu.memory_space<vmem>>, %arg9: memref<1x512xf32, #tpu.memory_space<vmem>>, %arg10: memref<1x512xf32, #tpu.memory_space<vmem>>, %arg11: memref<512x1024xbf16, #tpu.memory_space<vmem>>, %arg12: memref<1x1024xf32, #tpu.memory_space<vmem>>, %arg13: memref<1x1024xf32, #tpu.memory_space<vmem>>, %arg14: memref<1x1024xf32, #tpu.memory_space<vmem>>, %arg15: memref<1024x128xbf16, #tpu.memory_space<vmem>>, %arg16: memref<1x128xf32, #tpu.memory_space<vmem>>, %arg17: memref<8x128xf32, #tpu.memory_space<vmem>>) attributes {dimension_semantics = [], scalar_prefetch = 0 : i64, scratch_operands = 0 : i64, tpu.core_type = #tpu.core_type<tc>} {
    %c0 = arith.constant 0 : index
    %c0_0 = arith.constant 0 : index
    %0 = vector.load %arg0[%c0, %c0_0] : memref<8x32xf32, #tpu.memory_space<vmem>>, vector<8x32xf32>
    %1 = arith.truncf %0 : vector<8x32xf32> to vector<8x32xbf16>
    %c0_1 = arith.constant 0 : index
    %c0_2 = arith.constant 0 : index
    %2 = vector.load %arg1[%c0_1, %c0_2] : memref<32x128xbf16, #tpu.memory_space<vmem>>, vector<32x128xbf16>
    %cst = arith.constant dense<0.000000e+00> : vector<8x128xf32>
    %3 = tpu.matmul %1, %2, %cst {dimension_numbers = #tpu.dot_dimension_numbers<[1], [0], [0], [1], [0, 0, 1, 1], [], []>} : vector<8x32xbf16>, vector<32x128xbf16>, vector<8x128xf32> -> vector<8x128xf32>
    %c0_3 = arith.constant 0 : index
    %c0_4 = arith.constant 0 : index
    %4 = vector.load %arg2[%c0_3, %c0_4] : memref<1x128xf32, #tpu.memory_space<vmem>>, vector<1x128xf32>
    %5 = vector.broadcast %4 : vector<1x128xf32> to vector<8x128xf32>
    %6 = arith.addf %3, %5 : vector<8x128xf32>
    %cst_5 = arith.constant 2.000000e-01 : f32
    %7 = vector.broadcast %cst_5 : f32 to vector<8x128xf32>
    %8 = arith.mulf %7, %6 : vector<8x128xf32>
    %9 = arith.maximumf %6, %8 : vector<8x128xf32>
    %10 = arith.truncf %9 : vector<8x128xf32> to vector<8x128xbf16>
    %c0_6 = arith.constant 0 : index
    %c0_7 = arith.constant 0 : index
    %11 = vector.load %arg3[%c0_6, %c0_7] : memref<128x256xbf16, #tpu.memory_space<vmem>>, vector<128x256xbf16>
    %cst_8 = arith.constant dense<0.000000e+00> : vector<8x256xf32>
    %12 = tpu.matmul %10, %11, %cst_8 {dimension_numbers = #tpu.dot_dimension_numbers<[1], [0], [0], [1], [0, 0, 1, 1], [], []>} : vector<8x128xbf16>, vector<128x256xbf16>, vector<8x256xf32> -> vector<8x256xf32>
    %c0_9 = arith.constant 0 : index
    %c0_10 = arith.constant 0 : index
    %13 = vector.load %arg4[%c0_9, %c0_10] : memref<1x256xf32, #tpu.memory_space<vmem>>, vector<1x256xf32>
    %14 = vector.broadcast %13 : vector<1x256xf32> to vector<8x256xf32>
    %15 = arith.addf %12, %14 : vector<8x256xf32>
    %cst_11 = arith.constant dense<0.000000e+00> : vector<256xf32>
    %16 = vector.multi_reduction <add>, %15, %cst_11 [0] : vector<8x256xf32> to vector<256xf32>
    %17 = vector.shape_cast %16 : vector<256xf32> to vector<1x256xf32>
    %cst_12 = arith.constant 8.000000e+00 : f32
    %18 = vector.broadcast %cst_12 : f32 to vector<1x256xf32>
    %19 = arith.divf %17, %18 : vector<1x256xf32>
    %20 = vector.broadcast %19 : vector<1x256xf32> to vector<8x256xf32>
    %21 = arith.subf %15, %20 : vector<8x256xf32>
    %22 = arith.mulf %21, %21 : vector<8x256xf32>
    %cst_13 = arith.constant dense<0.000000e+00> : vector<256xf32>
    %23 = vector.multi_reduction <add>, %22, %cst_13 [0] : vector<8x256xf32> to vector<256xf32>
    %24 = vector.shape_cast %23 : vector<256xf32> to vector<1x256xf32>
    %cst_14 = arith.constant 8.000000e+00 : f32
    %25 = vector.broadcast %cst_14 : f32 to vector<1x256xf32>
    %26 = arith.divf %24, %25 : vector<1x256xf32>
    %cst_15 = arith.constant 8.000000e-01 : f32
    %27 = vector.broadcast %cst_15 : f32 to vector<1x256xf32>
    %28 = arith.addf %26, %27 : vector<1x256xf32>
    %29 = math.rsqrt %28 : vector<1x256xf32>
    %30 = vector.broadcast %29 : vector<1x256xf32> to vector<8x256xf32>
    %31 = arith.mulf %21, %30 : vector<8x256xf32>
    %c0_16 = arith.constant 0 : index
    %c0_17 = arith.constant 0 : index
    %32 = vector.load %arg5[%c0_16, %c0_17] : memref<1x256xf32, #tpu.memory_space<vmem>>, vector<1x256xf32>
    %33 = vector.broadcast %32 : vector<1x256xf32> to vector<8x256xf32>
    %34 = arith.mulf %31, %33 : vector<8x256xf32>
    %c0_18 = arith.constant 0 : index
    %c0_19 = arith.constant 0 : index
    %35 = vector.load %arg6[%c0_18, %c0_19] : memref<1x256xf32, #tpu.memory_space<vmem>>, vector<1x256xf32>
    %36 = vector.broadcast %35 : vector<1x256xf32> to vector<8x256xf32>
    %37 = arith.addf %34, %36 : vector<8x256xf32>
    %cst_20 = arith.constant 2.000000e-01 : f32
    %38 = vector.broadcast %cst_20 : f32 to vector<8x256xf32>
    %39 = arith.mulf %38, %37 : vector<8x256xf32>
    %40 = arith.maximumf %37, %39 : vector<8x256xf32>
    %41 = arith.truncf %40 : vector<8x256xf32> to vector<8x256xbf16>
    %c0_21 = arith.constant 0 : index
    %c0_22 = arith.constant 0 : index
    %42 = vector.load %arg7[%c0_21, %c0_22] : memref<256x512xbf16, #tpu.memory_space<vmem>>, vector<256x512xbf16>
    %cst_23 = arith.constant dense<0.000000e+00> : vector<8x512xf32>
    %43 = tpu.matmul %41, %42, %cst_23 {dimension_numbers = #tpu.dot_dimension_numbers<[1], [0], [0], [1], [0, 0, 1, 1], [], []>} : vector<8x256xbf16>, vector<256x512xbf16>, vector<8x512xf32> -> vector<8x512xf32>
    %c0_24 = arith.constant 0 : index
    %c0_25 = arith.constant 0 : index
    %44 = vector.load %arg8[%c0_24, %c0_25] : memref<1x512xf32, #tpu.memory_space<vmem>>, vector<1x512xf32>
    %45 = vector.broadcast %44 : vector<1x512xf32> to vector<8x512xf32>
    %46 = arith.addf %43, %45 : vector<8x512xf32>
    %cst_26 = arith.constant dense<0.000000e+00> : vector<512xf32>
    %47 = vector.multi_reduction <add>, %46, %cst_26 [0] : vector<8x512xf32> to vector<512xf32>
    %48 = vector.shape_cast %47 : vector<512xf32> to vector<1x512xf32>
    %cst_27 = arith.constant 8.000000e+00 : f32
    %49 = vector.broadcast %cst_27 : f32 to vector<1x512xf32>
    %50 = arith.divf %48, %49 : vector<1x512xf32>
    %51 = vector.broadcast %50 : vector<1x512xf32> to vector<8x512xf32>
    %52 = arith.subf %46, %51 : vector<8x512xf32>
    %53 = arith.mulf %52, %52 : vector<8x512xf32>
    %cst_28 = arith.constant dense<0.000000e+00> : vector<512xf32>
    %54 = vector.multi_reduction <add>, %53, %cst_28 [0] : vector<8x512xf32> to vector<512xf32>
    %55 = vector.shape_cast %54 : vector<512xf32> to vector<1x512xf32>
    %cst_29 = arith.constant 8.000000e+00 : f32
    %56 = vector.broadcast %cst_29 : f32 to vector<1x512xf32>
    %57 = arith.divf %55, %56 : vector<1x512xf32>
    %cst_30 = arith.constant 8.000000e-01 : f32
    %58 = vector.broadcast %cst_30 : f32 to vector<1x512xf32>
    %59 = arith.addf %57, %58 : vector<1x512xf32>
    %60 = math.rsqrt %59 : vector<1x512xf32>
    %61 = vector.broadcast %60 : vector<1x512xf32> to vector<8x512xf32>
    %62 = arith.mulf %52, %61 : vector<8x512xf32>
    %c0_31 = arith.constant 0 : index
    %c0_32 = arith.constant 0 : index
    %63 = vector.load %arg9[%c0_31, %c0_32] : memref<1x512xf32, #tpu.memory_space<vmem>>, vector<1x512xf32>
    %64 = vector.broadcast %63 : vector<1x512xf32> to vector<8x512xf32>
    %65 = arith.mulf %62, %64 : vector<8x512xf32>
    %c0_33 = arith.constant 0 : index
    %c0_34 = arith.constant 0 : index
    %66 = vector.load %arg10[%c0_33, %c0_34] : memref<1x512xf32, #tpu.memory_space<vmem>>, vector<1x512xf32>
    %67 = vector.broadcast %66 : vector<1x512xf32> to vector<8x512xf32>
    %68 = arith.addf %65, %67 : vector<8x512xf32>
    %cst_35 = arith.constant 2.000000e-01 : f32
    %69 = vector.broadcast %cst_35 : f32 to vector<8x512xf32>
    %70 = arith.mulf %69, %68 : vector<8x512xf32>
    %71 = arith.maximumf %68, %70 : vector<8x512xf32>
    %72 = arith.truncf %71 : vector<8x512xf32> to vector<8x512xbf16>
    %c0_36 = arith.constant 0 : index
    %c0_37 = arith.constant 0 : index
    %73 = vector.load %arg11[%c0_36, %c0_37] : memref<512x1024xbf16, #tpu.memory_space<vmem>>, vector<512x1024xbf16>
    %cst_38 = arith.constant dense<0.000000e+00> : vector<8x1024xf32>
    %74 = tpu.matmul %72, %73, %cst_38 {dimension_numbers = #tpu.dot_dimension_numbers<[1], [0], [0], [1], [0, 0, 1, 1], [], []>} : vector<8x512xbf16>, vector<512x1024xbf16>, vector<8x1024xf32> -> vector<8x1024xf32>
    %c0_39 = arith.constant 0 : index
    %c0_40 = arith.constant 0 : index
    %75 = vector.load %arg12[%c0_39, %c0_40] : memref<1x1024xf32, #tpu.memory_space<vmem>>, vector<1x1024xf32>
    %76 = vector.broadcast %75 : vector<1x1024xf32> to vector<8x1024xf32>
    %77 = arith.addf %74, %76 : vector<8x1024xf32>
    %cst_41 = arith.constant dense<0.000000e+00> : vector<1024xf32>
    %78 = vector.multi_reduction <add>, %77, %cst_41 [0] : vector<8x1024xf32> to vector<1024xf32>
    %79 = vector.shape_cast %78 : vector<1024xf32> to vector<1x1024xf32>
    %cst_42 = arith.constant 8.000000e+00 : f32
    %80 = vector.broadcast %cst_42 : f32 to vector<1x1024xf32>
    %81 = arith.divf %79, %80 : vector<1x1024xf32>
    %82 = vector.broadcast %81 : vector<1x1024xf32> to vector<8x1024xf32>
    %83 = arith.subf %77, %82 : vector<8x1024xf32>
    %84 = arith.mulf %83, %83 : vector<8x1024xf32>
    %cst_43 = arith.constant dense<0.000000e+00> : vector<1024xf32>
    %85 = vector.multi_reduction <add>, %84, %cst_43 [0] : vector<8x1024xf32> to vector<1024xf32>
    %86 = vector.shape_cast %85 : vector<1024xf32> to vector<1x1024xf32>
    %cst_44 = arith.constant 8.000000e+00 : f32
    %87 = vector.broadcast %cst_44 : f32 to vector<1x1024xf32>
    %88 = arith.divf %86, %87 : vector<1x1024xf32>
    %cst_45 = arith.constant 8.000000e-01 : f32
    %89 = vector.broadcast %cst_45 : f32 to vector<1x1024xf32>
    %90 = arith.addf %88, %89 : vector<1x1024xf32>
    %91 = math.rsqrt %90 : vector<1x1024xf32>
    %92 = vector.broadcast %91 : vector<1x1024xf32> to vector<8x1024xf32>
    %93 = arith.mulf %83, %92 : vector<8x1024xf32>
    %c0_46 = arith.constant 0 : index
    %c0_47 = arith.constant 0 : index
    %94 = vector.load %arg13[%c0_46, %c0_47] : memref<1x1024xf32, #tpu.memory_space<vmem>>, vector<1x1024xf32>
    %95 = vector.broadcast %94 : vector<1x1024xf32> to vector<8x1024xf32>
    %96 = arith.mulf %93, %95 : vector<8x1024xf32>
    %c0_48 = arith.constant 0 : index
    %c0_49 = arith.constant 0 : index
    %97 = vector.load %arg14[%c0_48, %c0_49] : memref<1x1024xf32, #tpu.memory_space<vmem>>, vector<1x1024xf32>
    %98 = vector.broadcast %97 : vector<1x1024xf32> to vector<8x1024xf32>
    %99 = arith.addf %96, %98 : vector<8x1024xf32>
    %cst_50 = arith.constant 2.000000e-01 : f32
    %100 = vector.broadcast %cst_50 : f32 to vector<8x1024xf32>
    %101 = arith.mulf %100, %99 : vector<8x1024xf32>
    %102 = arith.maximumf %99, %101 : vector<8x1024xf32>
    %103 = arith.truncf %102 : vector<8x1024xf32> to vector<8x1024xbf16>
    %c0_51 = arith.constant 0 : index
    %c0_52 = arith.constant 0 : index
    %104 = vector.load %arg15[%c0_51, %c0_52] : memref<1024x128xbf16, #tpu.memory_space<vmem>>, vector<1024x128xbf16>
    %cst_53 = arith.constant dense<0.000000e+00> : vector<8x128xf32>
    %105 = tpu.matmul %103, %104, %cst_53 {dimension_numbers = #tpu.dot_dimension_numbers<[1], [0], [0], [1], [0, 0, 1, 1], [], []>} : vector<8x1024xbf16>, vector<1024x128xbf16>, vector<8x128xf32> -> vector<8x128xf32>
    %c0_54 = arith.constant 0 : index
    %c0_55 = arith.constant 0 : index
    %106 = vector.load %arg16[%c0_54, %c0_55] : memref<1x128xf32, #tpu.memory_space<vmem>>, vector<1x128xf32>
    %107 = vector.broadcast %106 : vector<1x128xf32> to vector<8x128xf32>
    %108 = arith.addf %105, %107 : vector<8x128xf32>
    %109 = math.tanh %108 : vector<8x128xf32>
    %c0_56 = arith.constant 0 : index
    %c0_57 = arith.constant 0 : index
    %110 = vector.load %arg17[%c0_56, %c0_57] : memref<8x128xf32, #tpu.memory_space<vmem>>, vector<8x128xf32>
    tpu.vector_store %arg17[%c0_56, %c0_57], %109 {strides = array<i32>} : memref<8x128xf32, #tpu.memory_space<vmem>>, vector<8x128xf32>,
    return
  }
}

</mosaic_0001>

<llo_original>
// kernel: tpu_custom_call.1
$region0: #{tpu_custom_call.1}
  #allocation0 [shape = 'u32[]', space=smem, size = 0x4, offset = 0x4, fixed_abs, tag = 'smem constant byte address 0x4 - core index']
  #allocation1 [shape = 'u32[144,128]{1,0:T(1,128)}', space=vmem, size = 0x12000, scoped, tag = 'internal scratch']
  %s0 = inlined_call_operand.hbm [shape: f32[8,32], index: 0, kind: input, shape index: {}]
  %s1 = inlined_call_operand.hbm [shape: bf16[32,128], index: 1, kind: input, shape index: {}]
  %s2 = inlined_call_operand.vmem [shape: f32[1,128], index: 2, kind: input, shape index: {}]
  %s3 = inlined_call_operand.hbm [shape: bf16[128,256], index: 3, kind: input, shape index: {}]
  %s4 = inlined_call_operand.hbm [shape: f32[1,256], index: 4, kind: input, shape index: {}]
  %s5 = inlined_call_operand.hbm [shape: f32[1,256], index: 5, kind: input, shape index: {}]
  %s6 = inlined_call_operand.hbm [shape: f32[1,256], index: 6, kind: input, shape index: {}]
  %s7 = inlined_call_operand.hbm [shape: bf16[256,512], index: 7, kind: input, shape index: {}]
  %s8 = inlined_call_operand.vmem [shape: f32[1,512], index: 8, kind: input, shape index: {}]
  %s9 = inlined_call_operand.vmem [shape: f32[1,512], index: 9, kind: input, shape index: {}]
  %s10 = inlined_call_operand.vmem [shape: f32[1,512], index: 10, kind: input, shape index: {}]
  %s11 = inlined_call_operand.hbm [shape: bf16[512,1024], index: 11, kind: input, shape index: {}]
  %s12 = inlined_call_operand.vmem [shape: f32[1,1024], index: 12, kind: input, shape index: {}]
  %s13 = inlined_call_operand.vmem [shape: f32[1,1024], index: 13, kind: input, shape index: {}]
  %s14 = inlined_call_operand.vmem [shape: f32[1,1024], index: 14, kind: input, shape index: {}]
  %s15 = inlined_call_operand.hbm [shape: bf16[1024,128], index: 15, kind: input, shape index: {}]
  %s16 = inlined_call_operand.vmem [shape: f32[1,128], index: 16, kind: input, shape index: {}]
  %s17 = inlined_call_operand.hbm [shape: f32[8,128], index: 17, kind: output, shape index: {}]
  %s18 = sld [smem:[#allocation0]]
  $region114: #{tpu_custom_call.1} parent=0
    _
  %s20 = ssub.s32 1, %s18
  %s21 = scalar_select 0, %s20, %s18
  $region1: #{tpu_custom_call.1} parent=0
    #allocation2 [shape = 'u8[4096]{0}', space=vmem, size = 0x1000, scoped, tag = 'input window, operand 0, single buffered']
    #allocation3 [shape = 's32[1]{0}', space=sflag, size = 0x4, scoped, tag = 'scoped memory for tpu_custom_call.1']
    #allocation4 [shape = 's32[1]{0}', space=sflag, size = 0x4, scoped, tag = 'scoped memory for tpu_custom_call.1']
    #allocation5 [shape = 'u8[8192]{0}', space=vmem, size = 0x2000, scoped, tag = 'input window, operand 1, single buffered']
    #allocation6 [shape = 's32[1]{0}', space=sflag, size = 0x4, scoped, tag = 'scoped memory for tpu_custom_call.1']
    #allocation7 [shape = 'u8[65536]{0}', space=vmem, size = 0x10000, scoped, tag = 'input window, operand 3, single buffered']
    #allocation8 [shape = 'u8[1024]{0}', space=vmem, size = 0x400, scoped, tag = 'input window, operand 4, single buffered']
    #allocation9 [shape = 's32[1]{0}', space=sflag, size = 0x4, scoped, tag = 'scoped memory for tpu_custom_call.1']
    #allocation10 [shape = 'u8[1024]{0}', space=vmem, size = 0x400, scoped, tag = 'input window, operand 5, single buffered']
    #allocation11 [shape = 'u8[1024]{0}', space=vmem, size = 0x400, scoped, tag = 'input window, operand 6, single buffered']
    #allocation12 [shape = 's32[1]{0}', space=sflag, size = 0x4, scoped, tag = 'scoped memory for tpu_custom_call.1']
    #allocation13 [shape = 'u8[262144]{0}', space=vmem, size = 0x40000, scoped, tag = 'input window, operand 7, single buffered']
    #allocation14 [shape = 'u8[1048576]{0}', space=vmem, size = 0x100000, scoped, tag = 'input window, operand 11, single buffered']
    #allocation15 [shape = 's32[1]{0}', space=sflag, size = 0x4, scoped, tag = 'scoped memory for tpu_custom_call.1']
    #allocation16 [shape = 'u8[262144]{0}', space=vmem, size = 0x40000, scoped, tag = 'input window, operand 15, single buffered']
    #allocation17 [shape = 'u8[4096]{0}', space=vmem, size = 0x1000, scoped, tag = 'output window, operand 0, single buffered']
    %22 = vsyncpa [#allocation3], 0
    %23 = vsyncpa [#allocation6], 0
    %24 = vsyncpa [#allocation9], 0
    %25 = vsyncpa [#allocation12], 0
    %26 = vsyncpa [#allocation15], 0
    %27 = vsyncpa [#allocation4], 0
    // Predicated region
    $region2: #{tpu_custom_call.1} parent=1 // pred_check
      _
    $region3: #{tpu_custom_call.1} parent=1 // pred_check_branch
      %29 = sbr.rel (0) target = $region5
    $region4: #{tpu_custom_call.1} parent=1 // pred_region
      %s31 = ssub.s32 128, 128
      %32 = vsyncadd [#allocation3], %s31
      %s34 = sshll.u32 [#allocation2], 4
      %s35 = int_to_ptr.vmem [resolvable:$true] %s34
      %37 = dma.hbm_to_vmem [thread:$0]  %s0, 128, %s35, [#allocation3]
    $region5: #{tpu_custom_call.1} parent=1 // pred_fallthru
      _
    // Predicated region
    $region6: #{tpu_custom_call.1} parent=1 // pred_check
      _
    $region7: #{tpu_custom_call.1} parent=1 // pred_check_branch
      %39 = sbr.rel (0) target = $region9
    $region8: #{tpu_custom_call.1} parent=1 // pred_region
      %s41 = ssub.s32 256, 256
      %42 = vsyncadd [#allocation6], %s41
      %s43 = sshll.u32 [#allocation5], 4
      %s44 = int_to_ptr.vmem [resolvable:$true] %s43
      %49 = dma.hbm_to_vmem [thread:$0]  %s1, 256, %s44, [#allocation6], 64, 64, 4
    $region9: #{tpu_custom_call.1} parent=1 // pred_fallthru
      _
    // Predicated region
    $region10: #{tpu_custom_call.1} parent=1 // pred_check
      _
    $region11: #{tpu_custom_call.1} parent=1 // pred_check_branch
      %51 = sbr.rel (0) target = $region13
    $region12: #{tpu_custom_call.1} parent=1 // pred_region
      _
    $region13: #{tpu_custom_call.1} parent=1 // pred_fallthru
      _
    // Predicated region
    $region14: #{tpu_custom_call.1} parent=1 // pred_check
      _
    $region15: #{tpu_custom_call.1} parent=1 // pred_check_branch
      %53 = sbr.rel (0) target = $region17
    $region16: #{tpu_custom_call.1} parent=1 // pred_region
      %s55 = ssub.s32 2048, 2048
      %56 = vsyncadd [#allocation6], %s55
      %s57 = sshll.u32 [#allocation7], 4
      %s58 = int_to_ptr.vmem [resolvable:$true] %s57
      %63 = dma.hbm_to_vmem [thread:$0]  %s3, 2048, %s58, [#allocation6], 128, 128, 8
    $region17: #{tpu_custom_call.1} parent=1 // pred_fallthru
      _
    // Predicated region
    $region18: #{tpu_custom_call.1} parent=1 // pred_check
      _
    $region19: #{tpu_custom_call.1} parent=1 // pred_check_branch
      %65 = sbr.rel (0) target = $region21
    $region20: #{tpu_custom_call.1} parent=1 // pred_region
      %s67 = ssub.s32 32, 32
      %68 = vsyncadd [#allocation9], %s67
      %s70 = sshll.u32 [#allocation8], 4
      %s71 = int_to_ptr.vmem [resolvable:$true] %s70
      %73 = dma.hbm_to_vmem [thread:$0]  %s4, 32, %s71, [#allocation9]
    $region21: #{tpu_custom_call.1} parent=1 // pred_fallthru
      _
    // Predicated region
    $region22: #{tpu_custom_call.1} parent=1 // pred_check
      _
    $region23: #{tpu_custom_call.1} parent=1 // pred_check_branch
      %75 = sbr.rel (0) target = $region25
    $region24: #{tpu_custom_call.1} parent=1 // pred_region
      %s77 = ssub.s32 32, 32
      %78 = vsyncadd [#allocation9], %s77
      %s80 = sshll.u32 [#allocation10], 4
      %s81 = int_to_ptr.vmem [resolvable:$true] %s80
      %83 = dma.hbm_to_vmem [thread:$0]  %s5, 32, %s81, [#allocation9]
    $region25: #{tpu_custom_call.1} parent=1 // pred_fallthru
      _
    // Predicated region
    $region26: #{tpu_custom_call.1} parent=1 // pred_check
      _
    $region27: #{tpu_custom_call.1} parent=1 // pred_check_branch
      %85 = sbr.rel (0) target = $region29
    $region28: #{tpu_custom_call.1} parent=1 // pred_region
      %s87 = ssub.s32 32, 32
      %88 = vsyncadd [#allocation12], %s87
      %s90 = sshll.u32 [#allocation11], 4
      %s91 = int_to_ptr.vmem [resolvable:$true] %s90
      %93 = dma.hbm_to_vmem [thread:$0]  %s6, 32, %s91, [#allocation12]
    $region29: #{tpu_custom_call.1} parent=1 // pred_fallthru
      _
    // Predicated region
    $region30: #{tpu_custom_call.1} parent=1 // pred_check
      _
    $region31: #{tpu_custom_call.1} parent=1 // pred_check_branch
      %95 = sbr.rel (0) target = $region33
    $region32: #{tpu_custom_call.1} parent=1 // pred_region
      %s97 = ssub.s32 8192, 8192
      %98 = vsyncadd [#allocation12], %s97
      %s99 = sshll.u32 [#allocation13], 4
      %s100 = int_to_ptr.vmem [resolvable:$true] %s99
      %105 = dma.hbm_to_vmem [thread:$0]  %s7, 8192, %s100, [#allocation12], 256, 256, 16
    $region33: #{tpu_custom_call.1} parent=1 // pred_fallthru
      _
    // Predicated region
    $region34: #{tpu_custom_call.1} parent=1 // pred_check
      _
    $region35: #{tpu_custom_call.1} parent=1 // pred_check_branch
      %107 = sbr.rel (0) target = $region37
    $region36: #{tpu_custom_call.1} parent=1 // pred_region
      _
    $region37: #{tpu_custom_call.1} parent=1 // pred_fallthru
      _
    // Predicated region
    $region38: #{tpu_custom_call.1} parent=1 // pred_check
      _
    $region39: #{tpu_custom_call.1} parent=1 // pred_check_branch
      %109 = sbr.rel (0) target = $region41
    $region40: #{tpu_custom_call.1} parent=1 // pred_region
      _
    $region41: #{tpu_custom_call.1} parent=1 // pred_fallthru
      _
    // Predicated region
    $region42: #{tpu_custom_call.1} parent=1 // pred_check
      _
    $region43: #{tpu_custom_call.1} parent=1 // pred_check_branch
      %111 = sbr.rel (0) target = $region45
    $region44: #{tpu_custom_call.1} parent=1 // pred_region
      _
    $region45: #{tpu_custom_call.1} parent=1 // pred_fallthru
      _
    // Predicated region
    $region46: #{tpu_custom_call.1} parent=1 // pred_check
      _
    $region47: #{tpu_custom_call.1} parent=1 // pred_check_branch
      %113 = sbr.rel (0) target = $region49
    $region48: #{tpu_custom_call.1} parent=1 // pred_region
      %s115 = ssub.s32 32768, 32768
      %116 = vsyncadd [#allocation15], %s115
      %s117 = sshll.u32 [#allocation14], 4
      %s118 = int_to_ptr.vmem [resolvable:$true] %s117
      %123 = dma.hbm_to_vmem [thread:$0]  %s11, 32768, %s118, [#allocation15], 512, 512, 32
    $region49: #{tpu_custom_call.1} parent=1 // pred_fallthru
      _
    // Predicated region
    $region50: #{tpu_custom_call.1} parent=1 // pred_check
      _
    $region51: #{tpu_custom_call.1} parent=1 // pred_check_branch
      %125 = sbr.rel (0) target = $region53
    $region52: #{tpu_custom_call.1} parent=1 // pred_region
      _
    $region53: #{tpu_custom_call.1} parent=1 // pred_fallthru
      _
    // Predicated region
    $region54: #{tpu_custom_call.1} parent=1 // pred_check
      _
    $region55: #{tpu_custom_call.1} parent=1 // pred_check_branch
      %127 = sbr.rel (0) target = $region57
    $region56: #{tpu_custom_call.1} parent=1 // pred_region
      _
    $region57: #{tpu_custom_call.1} parent=1 // pred_fallthru
      _
    // Predicated region
    $region58: #{tpu_custom_call.1} parent=1 // pred_check
      _
    $region59: #{tpu_custom_call.1} parent=1 // pred_check_branch
      %129 = sbr.rel (0) target = $region61
    $region60: #{tpu_custom_call.1} parent=1 // pred_region
      _
    $region61: #{tpu_custom_call.1} parent=1 // pred_fallthru
      _
    // Predicated region
    $region62: #{tpu_custom_call.1} parent=1 // pred_check
      _
    $region63: #{tpu_custom_call.1} parent=1 // pred_check_branch
      %131 = sbr.rel (0) target = $region65
    $region64: #{tpu_custom_call.1} parent=1 // pred_region
      %s133 = ssub.s32 8192, 8192
      %134 = vsyncadd [#allocation15], %s133
      %s135 = sshll.u32 [#allocation16], 4
      %s136 = int_to_ptr.vmem [resolvable:$true] %s135
      %141 = dma.hbm_to_vmem [thread:$0]  %s15, 8192, %s136, [#allocation15], 64, 64, 4
    $region65: #{tpu_custom_call.1} parent=1 // pred_fallthru
      _
    // Predicated region
    $region66: #{tpu_custom_call.1} parent=1 // pred_check
      _
    $region67: #{tpu_custom_call.1} parent=1 // pred_check_branch
      %143 = sbr.rel (0) target = $region69
    $region68: #{tpu_custom_call.1} parent=1 // pred_region
      _
    $region69: #{tpu_custom_call.1} parent=1 // pred_fallthru
      _
    // Predicated region
    $region70: #{tpu_custom_call.1} parent=1 // pred_check
      _
    $region71: #{tpu_custom_call.1} parent=1 // pred_check_branch
      %145 = sbr.rel (0) target = $region73
    $region72: #{tpu_custom_call.1} parent=1 // pred_region
      %146 = dma.done [#allocation3], 128
    $region73: #{tpu_custom_call.1} parent=1 // pred_fallthru
      _
    // Predicated region
    $region74: #{tpu_custom_call.1} parent=1 // pred_check
      _
    $region75: #{tpu_custom_call.1} parent=1 // pred_check_branch
      %148 = sbr.rel (0) target = $region77
    $region76: #{tpu_custom_call.1} parent=1 // pred_region
      %149 = dma.done [#allocation6], 256
    $region77: #{tpu_custom_call.1} parent=1 // pred_fallthru
      _
    // Predicated region
    $region78: #{tpu_custom_call.1} parent=1 // pred_check
      _
    $region79: #{tpu_custom_call.1} parent=1 // pred_check_branch
      %151 = sbr.rel (0) target = $region81
    $region80: #{tpu_custom_call.1} parent=1 // pred_region
      %152 = dma.done [#allocation6], 2048
    $region81: #{tpu_custom_call.1} parent=1 // pred_fallthru
      _
    // Predicated region
    $region82: #{tpu_custom_call.1} parent=1 // pred_check
      _
    $region83: #{tpu_custom_call.1} parent=1 // pred_check_branch
      %154 = sbr.rel (0) target = $region85
    $region84: #{tpu_custom_call.1} parent=1 // pred_region
      %155 = dma.done [#allocation9], 32
    $region85: #{tpu_custom_call.1} parent=1 // pred_fallthru
      _
    // Predicated region
    $region86: #{tpu_custom_call.1} parent=1 // pred_check
      _
    $region87: #{tpu_custom_call.1} parent=1 // pred_check_branch
      %157 = sbr.rel (0) target = $region89
    $region88: #{tpu_custom_call.1} parent=1 // pred_region
      %158 = dma.done [#allocation9], 32
    $region89: #{tpu_custom_call.1} parent=1 // pred_fallthru
      _
    // Predicated region
    $region90: #{tpu_custom_call.1} parent=1 // pred_check
      _
    $region91: #{tpu_custom_call.1} parent=1 // pred_check_branch
      %160 = sbr.rel (0) target = $region93
    $region92: #{tpu_custom_call.1} parent=1 // pred_region
      %161 = dma.done [#allocation12], 32
    $region93: #{tpu_custom_call.1} parent=1 // pred_fallthru
      _
    // Predicated region
    $region94: #{tpu_custom_call.1} parent=1 // pred_check
      _
    $region95: #{tpu_custom_call.1} parent=1 // pred_check_branch
      %163 = sbr.rel (0) target = $region97
    $region96: #{tpu_custom_call.1} parent=1 // pred_region
      %164 = dma.done [#allocation12], 8192
    $region97: #{tpu_custom_call.1} parent=1 // pred_fallthru
      _
    // Predicated region
    $region98: #{tpu_custom_call.1} parent=1 // pred_check
      _
    $region99: #{tpu_custom_call.1} parent=1 // pred_check_branch
      %166 = sbr.rel (0) target = $region101
    $region100: #{tpu_custom_call.1} parent=1 // pred_region
      %167 = dma.done [#allocation15], 32768
    $region101: #{tpu_custom_call.1} parent=1 // pred_fallthru
      _
    // Predicated region
    $region102: #{tpu_custom_call.1} parent=1 // pred_check
      _
    $region103: #{tpu_custom_call.1} parent=1 // pred_check_branch
      %169 = sbr.rel (0) target = $region105
    $region104: #{tpu_custom_call.1} parent=1 // pred_region
      %170 = dma.done [#allocation15], 8192
    $region105: #{tpu_custom_call.1} parent=1 // pred_fallthru
      _
    %v172 = vld [vmem:[#allocation2] sm:$0xff]
    %v173 = vpack.c.bf16 %v172, %v172
    %v174 = vld [vmem:[#allocation5] sm:$0xf]
    %v175 = vld [vmem:[#allocation5 + $0x4] sm:$0xf]
    %v176 = vld [vmem:[#allocation5 + $0x8] sm:$0xf]
    %v177 = vld [vmem:[#allocation5 + $0xc] sm:$0xf]
    %v178 = vld [vmem:[%s2] sm:$0x1]
    %v180 = vlaneseq
    %v181 = vshrl.u32 %v180, 7
    %v182 = vsub.s32 0, %v181
    %v183 = vrot.slane %v178, %v182
    %v189 = vunpack.c.l.b16 %v174
    %v190 = vunpack.c.l.b16 %v175
    %v191 = vunpack.c.l.b16 %v176
    %v192 = vunpack.c.l.b16 %v177
    %v193 = vpack.c.b16 %v190, %v189
    %v194 = vpack.c.b16 %v192, %v191
    %vm197 = vcmask 261120
    %v199 = vsel %vm197, %v173, 0
    %201 = vmatprep.subr.bf16.mxu0 0
    %202 = vmatpush1.bf16.msra.mxu0 %v193
    %203 = vmatprep.subr.bf16.mxu0 0
    %204 = vmatpush1.bf16.msra.mxu0 %v194
    %205 = vmatprep.subr.bf16.mxu0 0
    %206 = vmatpush1.bf16.msra.mxu0 0
    %207 = vmatprep.subr.bf16.mxu0 0
    %208 = vmatpush1.bf16.msra.mxu0 0
    %209 = vmatprep.subr.bf16.mxu0 0
    %210 = vmatpush1.bf16.msra.mxu0 0
    %211 = vmatprep.subr.bf16.mxu0 0
    %212 = vmatpush1.bf16.msra.mxu0 0
    %213 = vmatprep.subr.bf16.mxu0 0
    %214 = vmatpush1.bf16.msra.mxu0 0
    %215 = vmatprep.subr.bf16.mxu0 0
    %216 = vmatpush1.bf16.msra.mxu0 0
    %217 = vmatprep.subr.bf16.mxu0 0
    %218 = vmatpush1.bf16.msra.mxu0 0
    %219 = vmatprep.subr.bf16.mxu0 0
    %220 = vmatpush1.bf16.msra.mxu0 0
    %221 = vmatprep.subr.bf16.mxu0 0
    %222 = vmatpush1.bf16.msra.mxu0 0
    %223 = vmatprep.subr.bf16.mxu0 0
    %224 = vmatpush1.bf16.msra.mxu0 0
    %225 = vmatprep.subr.bf16.mxu0 0
    %226 = vmatpush1.bf16.msra.mxu0 0
    %227 = vmatprep.subr.bf16.mxu0 0
    %228 = vmatpush1.bf16.msra.mxu0 0
    %229 = vmatprep.subr.bf16.mxu0 0
    %230 = vmatpush1.bf16.msra.mxu0 0
    %231 = vmatprep.subr.bf16.mxu0 0
    %232 = vmatpush1.bf16.msra.mxu0 0
    %233 = vmatprep.mubr.bf16.mxu0 0
    %234 = vmatmul.mubr.bf16.gmra.mrb[0].mxu0 %v199
    %v235 = vpop.f32.mrb[0].mxu0
    %v236 = vadd.f32 %v183, %v235
    %v237 = vpop.f32.mrb[0].mxu0
    %v238 = vpop.f32.mrb[0].mxu0
    %v239 = vpop.f32.mrb[0].mxu0
    %240 = vdwg.mxu0
    %v241 = vmul.f32 %v236, 0.2
    %v242 = vmax.f32 %v236, %v241
    %v243 = vpack.c.bf16 %v242, %v242
    %v244 = vld [vmem:[#allocation7] sm:$0xff]
    %v245 = vld [vmem:[#allocation7 + $0x8] sm:$0xff]
    %v246 = vld [vmem:[#allocation7 + $0x10] sm:$0xff]
    %v247 = vld [vmem:[#allocation7 + $0x18] sm:$0xff]
    %v248 = vld [vmem:[#allocation7 + $0x20] sm:$0xff]
    %v249 = vld [vmem:[#allocation7 + $0x28] sm:$0xff]
    %v250 = vld [vmem:[#allocation7 + $0x30] sm:$0xff]
    %v251 = vld [vmem:[#allocation7 + $0x38] sm:$0xff]
    %v252 = vld [vmem:[#allocation7 + $0x40] sm:$0xff]
    %v253 = vld [vmem:[#allocation7 + $0x48] sm:$0xff]
    %v254 = vld [vmem:[#allocation7 + $0x50] sm:$0xff]
    %v255 = vld [vmem:[#allocation7 + $0x58] sm:$0xff]
    %v256 = vld [vmem:[#allocation7 + $0x60] sm:$0xff]
    %v257 = vld [vmem:[#allocation7 + $0x68] sm:$0xff]
    %v258 = vld [vmem:[#allocation7 + $0x70] sm:$0xff]
    %v259 = vld [vmem:[#allocation7 + $0x78] sm:$0xff]
    %v260 = vld [vmem:[#allocation8] sm:$0x3]
    %v262 = vlaneseq
    %v263 = vshrl.u32 %v262, 7
    %v264 = vsub.s32 0, %v263
    %v265 = vrot.slane %v260, %v264
    %v266 = vlaneseq
    %v267 = vshrl.u32 %v266, 7
    %v268 = vsub.s32 1, %v267
    %v269 = vrot.slane %v260, %v268
    %v288 = vunpack.c.l.b16 %v244
    %v289 = vunpack.c.h.b16 %v244
    %v290 = vunpack.c.l.b16 %v245
    %v291 = vunpack.c.h.b16 %v245
    %v292 = vunpack.c.l.b16 %v246
    %v293 = vunpack.c.h.b16 %v246
    %v294 = vunpack.c.l.b16 %v247
    %v295 = vunpack.c.h.b16 %v247
    %v296 = vunpack.c.l.b16 %v248
    %v297 = vunpack.c.h.b16 %v248
    %v298 = vunpack.c.l.b16 %v249
    %v299 = vunpack.c.h.b16 %v249
    %v300 = vunpack.c.l.b16 %v250
    %v301 = vunpack.c.h.b16 %v250
    %v302 = vunpack.c.l.b16 %v251
    %v303 = vunpack.c.h.b16 %v251
    %v304 = vunpack.c.l.b16 %v252
    %v305 = vunpack.c.h.b16 %v252
    %v306 = vunpack.c.l.b16 %v253
    %v307 = vunpack.c.h.b16 %v253
    %v308 = vunpack.c.l.b16 %v254
    %v309 = vunpack.c.h.b16 %v254
    %v310 = vunpack.c.l.b16 %v255
    %v311 = vunpack.c.h.b16 %v255
    %v312 = vunpack.c.l.b16 %v256
    %v313 = vunpack.c.h.b16 %v256
    %v314 = vunpack.c.l.b16 %v257
    %v315 = vunpack.c.h.b16 %v257
    %v316 = vunpack.c.l.b16 %v258
    %v317 = vunpack.c.h.b16 %v258
    %v318 = vunpack.c.l.b16 %v259
    %v319 = vunpack.c.h.b16 %v259
    %v320 = vpack.c.b16 %v290, %v288
    %v321 = vpack.c.b16 %v291, %v289
    %v322 = vpack.c.b16 %v294, %v292
    %v323 = vpack.c.b16 %v295, %v293
    %v324 = vpack.c.b16 %v298, %v296
    %v325 = vpack.c.b16 %v299, %v297
    %v326 = vpack.c.b16 %v302, %v300
    %v327 = vpack.c.b16 %v303, %v301
    %v328 = vpack.c.b16 %v306, %v304
    %v329 = vpack.c.b16 %v307, %v305
    %v330 = vpack.c.b16 %v310, %v308
    %v331 = vpack.c.b16 %v311, %v309
    %v332 = vpack.c.b16 %v314, %v312
    %v333 = vpack.c.b16 %v315, %v313
    %v334 = vpack.c.b16 %v318, %v316
    %v335 = vpack.c.b16 %v319, %v317
    %352 = vmatprep.subr.bf16.mxu0 %v321
    %353 = vmatpush1.bf16.msra.mxu0 %v320
    %354 = vmatprep.subr.bf16.mxu0 %v323
    %355 = vmatpush1.bf16.msra.mxu0 %v322
    %356 = vmatprep.subr.bf16.mxu0 %v325
    %357 = vmatpush1.bf16.msra.mxu0 %v324
    %358 = vmatprep.subr.bf16.mxu0 %v327
    %359 = vmatpush1.bf16.msra.mxu0 %v326
    %360 = vmatprep.subr.bf16.mxu0 %v329
    %361 = vmatpush1.bf16.msra.mxu0 %v328
    %362 = vmatprep.subr.bf16.mxu0 %v331
    %363 = vmatpush1.bf16.msra.mxu0 %v330
    %364 = vmatprep.subr.bf16.mxu0 %v333
    %365 = vmatpush1.bf16.msra.mxu0 %v332
    %366 = vmatprep.subr.bf16.mxu0 %v335
    %367 = vmatpush1.bf16.msra.mxu0 %v334
    %368 = vmatprep.subr.bf16.mxu0 0
    %369 = vmatpush1.bf16.msra.mxu0 0
    %370 = vmatprep.subr.bf16.mxu0 0
    %371 = vmatpush1.bf16.msra.mxu0 0
    %372 = vmatprep.subr.bf16.mxu0 0
    %373 = vmatpush1.bf16.msra.mxu0 0
    %374 = vmatprep.subr.bf16.mxu0 0
    %375 = vmatpush1.bf16.msra.mxu0 0
    %376 = vmatprep.subr.bf16.mxu0 0
    %377 = vmatpush1.bf16.msra.mxu0 0
    %378 = vmatprep.subr.bf16.mxu0 0
    %379 = vmatpush1.bf16.msra.mxu0 0
    %380 = vmatprep.subr.bf16.mxu0 0
    %381 = vmatpush1.bf16.msra.mxu0 0
    %382 = vmatprep.subr.bf16.mxu0 0
    %383 = vmatpush1.bf16.msra.mxu0 0
    %384 = vmatprep.mubr.bf16.mxu0 0
    %385 = vmatmul.mubr.bf16.gmra.mrb[0].mxu0 %v243
    %v386 = vpop.f32.mrb[0].mxu0
    %v387 = vadd.f32 %v265, %v386
    %v388 = vpop.f32.mrb[0].mxu0
    %v389 = vadd.f32 %v269, %v388
    %v390 = vpop.f32.mrb[0].mxu0
    %v391 = vpop.f32.mrb[0].mxu0
    %392 = vdwg.mxu0
    %v393 = vrot.slane %v387, 4
    %v394 = vadd.f32 %v387, %v393
    %v395 = vrot.slane %v394, 2
    %v396 = vadd.f32 %v394, %v395
    %v397 = vrot.slane %v396, 1
    %v398 = vadd.f32 %v396, %v397
    %v399 = vrot.slane %v389, 4
    %v400 = vadd.f32 %v389, %v399
    %v401 = vrot.slane %v400, 2
    %v402 = vadd.f32 %v400, %v401
    %v403 = vrot.slane %v402, 1
    %v404 = vadd.f32 %v402, %v403
    %v405 = vrcp.pop 8.0
    %v406 = vmul.f32 %v398, %v405
    %v407 = vmul.f32 %v404, %v405
    %v408 = vsub.f32 %v387, %v406
    %v409 = vsub.f32 %v389, %v407
    %v410 = vmul.f32 %v408, %v408
    %v411 = vmul.f32 %v409, %v409
    %v412 = vrot.slane %v410, 4
    %v413 = vadd.f32 %v410, %v412
    %v414 = vrot.slane %v413, 2
    %v415 = vadd.f32 %v413, %v414
    %v416 = vrot.slane %v415, 1
    %v417 = vadd.f32 %v415, %v416
    %v418 = vrot.slane %v411, 4
    %v419 = vadd.f32 %v411, %v418
    %v420 = vrot.slane %v419, 2
    %v421 = vadd.f32 %v419, %v420
    %v422 = vrot.slane %v421, 1
    %v423 = vadd.f32 %v421, %v422
    %v424 = vmul.f32 %v417, %v405
    %v425 = vmul.f32 %v423, %v405
    %v426 = vadd.f32 %v424, 0.8
    %v427 = vadd.f32 %v425, 0.8
    %v428 = vrsqrt.pop %v426
    %v429 = vrsqrt.pop %v427
    %v430 = vmul.f32 %v408, %v428
    %v431 = vmul.f32 %v409, %v429
    %v432 = vld [vmem:[#allocation10] sm:$0x3]
    %v434 = vlaneseq
    %v435 = vshrl.u32 %v434, 7
    %v436 = vsub.s32 0, %v435
    %v437 = vrot.slane %v432, %v436
    %v438 = vlaneseq
    %v439 = vshrl.u32 %v438, 7
    %v440 = vsub.s32 1, %v439
    %v441 = vrot.slane %v432, %v440
    %v444 = vmul.f32 %v430, %v437
    %v445 = vmul.f32 %v431, %v441
    %v446 = vld [vmem:[#allocation11] sm:$0x3]
    %v448 = vlaneseq
    %v449 = vshrl.u32 %v448, 7
    %v450 = vsub.s32 0, %v449
    %v451 = vrot.slane %v446, %v450
    %v452 = vlaneseq
    %v453 = vshrl.u32 %v452, 7
    %v454 = vsub.s32 1, %v453
    %v455 = vrot.slane %v446, %v454
    %v458 = vadd.f32 %v444, %v451
    %v459 = vadd.f32 %v445, %v455
    %v460 = vmul.f32 %v458, 0.2
    %v461 = vmul.f32 %v459, 0.2
    %v462 = vmax.f32 %v458, %v460
    %v463 = vmax.f32 %v459, %v461
    %v464 = vpack.c.bf16 %v462, %v462
    %v465 = vpack.c.bf16 %v463, %v463
    %v466 = vld [vmem:[#allocation13] sm:$0xff]
    %v467 = vld [vmem:[#allocation13 + $0x8] sm:$0xff]
    %v468 = vld [vmem:[#allocation13 + $0x10] sm:$0xff]
    %v469 = vld [vmem:[#allocation13 + $0x18] sm:$0xff]
    %v470 = vld [vmem:[#allocation13 + $0x20] sm:$0xff]
    %v471 = vld [vmem:[#allocation13 + $0x28] sm:$0xff]
    %v472 = vld [vmem:[#allocation13 + $0x30] sm:$0xff]
    %v473 = vld [vmem:[#allocation13 + $0x38] sm:$0xff]
    %v474 = vld [vmem:[#allocation13 + $0x40] sm:$0xff]
    %v475 = vld [vmem:[#allocation13 + $0x48] sm:$0xff]
    %v476 = vld [vmem:[#allocation13 + $0x50] sm:$0xff]
    %v477 = vld [vmem:[#allocation13 + $0x58] sm:$0xff]
    %v478 = vld [vmem:[#allocation13 + $0x60] sm:$0xff]
    %v479 = vld [vmem:[#allocation13 + $0x68] sm:$0xff]
    %v480 = vld [vmem:[#allocation13 + $0x70] sm:$0xff]
    %v481 = vld [vmem:[#allocation13 + $0x78] sm:$0xff]
    %v482 = vld [vmem:[#allocation13 + $0x80] sm:$0xff]
    %v483 = vld [vmem:[#allocation13 + $0x88] sm:$0xff]
    %v484 = vld [vmem:[#allocation13 + $0x90] sm:$0xff]
    %v485 = vld [vmem:[#allocation13 + $0x98] sm:$0xff]
    %v486 = vld [vmem:[#allocation13 + $0xa0] sm:$0xff]
    %v487 = vld [vmem:[#allocation13 + $0xa8] sm:$0xff]
    %v488 = vld [vmem:[#allocation13 + $0xb0] sm:$0xff]
    %v489 = vld [vmem:[#allocation13 + $0xb8] sm:$0xff]
    %v490 = vld [vmem:[#allocation13 + $0xc0] sm:$0xff]
    %v491 = vld [vmem:[#allocation13 + $0xc8] sm:$0xff]
    %v492 = vld [vmem:[#allocation13 + $0xd0] sm:$0xff]
    %v493 = vld [vmem:[#allocation13 + $0xd8] sm:$0xff]
    %v494 = vld [vmem:[#allocation13 + $0xe0] sm:$0xff]
    %v495 = vld [vmem:[#allocation13 + $0xe8] sm:$0xff]
    %v496 = vld [vmem:[#allocation13 + $0xf0] sm:$0xff]
    %v497 = vld [vmem:[#allocation13 + $0xf8] sm:$0xff]
    %v498 = vld [vmem:[#allocation13 + $0x100] sm:$0xff]
    %v499 = vld [vmem:[#allocation13 + $0x108] sm:$0xff]
    %v500 = vld [vmem:[#allocation13 + $0x110] sm:$0xff]
    %v501 = vld [vmem:[#allocation13 + $0x118] sm:$0xff]
    %v502 = vld [vmem:[#allocation13 + $0x120] sm:$0xff]
    %v503 = vld [vmem:[#allocation13 + $0x128] sm:$0xff]
    %v504 = vld [vmem:[#allocation13 + $0x130] sm:$0xff]
    %v505 = vld [vmem:[#allocation13 + $0x138] sm:$0xff]
    %v506 = vld [vmem:[#allocation13 + $0x140] sm:$0xff]
    %v507 = vld [vmem:[#allocation13 + $0x148] sm:$0xff]
    %v508 = vld [vmem:[#allocation13 + $0x150] sm:$0xff]
    %v509 = vld [vmem:[#allocation13 + $0x158] sm:$0xff]
    %v510 = vld [vmem:[#allocation13 + $0x160] sm:$0xff]
    %v511 = vld [vmem:[#allocation13 + $0x168] sm:$0xff]
    %v512 = vld [vmem:[#allocation13 + $0x170] sm:$0xff]
    %v513 = vld [vmem:[#allocation13 + $0x178] sm:$0xff]
    %v514 = vld [vmem:[#allocation13 + $0x180] sm:$0xff]
    %v515 = vld [vmem:[#allocation13 + $0x188] sm:$0xff]
    %v516 = vld [vmem:[#allocation13 + $0x190] sm:$0xff]
    %v517 = vld [vmem:[#allocation13 + $0x198] sm:$0xff]
    %v518 = vld [vmem:[#allocation13 + $0x1a0] sm:$0xff]
    %v519 = vld [vmem:[#allocation13 + $0x1a8] sm:$0xff]
    %v520 = vld [vmem:[#allocation13 + $0x1b0] sm:$0xff]
    %v521 = vld [vmem:[#allocation13 + $0x1b8] sm:$0xff]
    %v522 = vld [vmem:[#allocation13 + $0x1c0] sm:$0xff]
    %v523 = vld [vmem:[#allocation13 + $0x1c8] sm:$0xff]
    %v524 = vld [vmem:[#allocation13 + $0x1d0] sm:$0xff]
    %v525 = vld [vmem:[#allocation13 + $0x1d8] sm:$0xff]
    %v526 = vld [vmem:[#allocation13 + $0x1e0] sm:$0xff]
    %v527 = vld [vmem:[#allocation13 + $0x1e8] sm:$0xff]
    %v528 = vld [vmem:[#allocation13 + $0x1f0] sm:$0xff]
    %v529 = vld [vmem:[#allocation13 + $0x1f8] sm:$0xff]
    %v530 = vld [vmem:[%s8] sm:$0xf]
    %v532 = vlaneseq
    %v533 = vshrl.u32 %v532, 7
    %v534 = vsub.s32 0, %v533
    %v535 = vrot.slane %v530, %v534
    %v536 = vlaneseq
    %v537 = vshrl.u32 %v536, 7
    %v538 = vsub.s32 1, %v537
    %v539 = vrot.slane %v530, %v538
    %v540 = vlaneseq
    %v541 = vshrl.u32 %v540, 7
    %v542 = vsub.s32 2, %v541
    %v543 = vrot.slane %v530, %v542
    %v544 = vlaneseq
    %v545 = vshrl.u32 %v544, 7
    %v546 = vsub.s32 3, %v545
    %v547 = vrot.slane %v530, %v546
    %v616 = vunpack.c.l.b16 %v466
    %v617 = vunpack.c.h.b16 %v466
    %v618 = vunpack.c.l.b16 %v467
    %v619 = vunpack.c.h.b16 %v467
    %v620 = vunpack.c.l.b16 %v468
    %v621 = vunpack.c.h.b16 %v468
    %v622 = vunpack.c.l.b16 %v469
    %v623 = vunpack.c.h.b16 %v469
    %v624 = vunpack.c.l.b16 %v470
    %v625 = vunpack.c.h.b16 %v470
    %v626 = vunpack.c.l.b16 %v471
    %v627 = vunpack.c.h.b16 %v471
    %v628 = vunpack.c.l.b16 %v472
    %v629 = vunpack.c.h.b16 %v472
    %v630 = vunpack.c.l.b16 %v473
    %v631 = vunpack.c.h.b16 %v473
    %v632 = vunpack.c.l.b16 %v474
    %v633 = vunpack.c.h.b16 %v474
    %v634 = vunpack.c.l.b16 %v475
    %v635 = vunpack.c.h.b16 %v475
    %v636 = vunpack.c.l.b16 %v476
    %v637 = vunpack.c.h.b16 %v476
    %v638 = vunpack.c.l.b16 %v477
    %v639 = vunpack.c.h.b16 %v477
    %v640 = vunpack.c.l.b16 %v478
    %v641 = vunpack.c.h.b16 %v478
    %v642 = vunpack.c.l.b16 %v479
    %v643 = vunpack.c.h.b16 %v479
    %v644 = vunpack.c.l.b16 %v480
    %v645 = vunpack.c.h.b16 %v480
    %v646 = vunpack.c.l.b16 %v481
    %v647 = vunpack.c.h.b16 %v481
    %v648 = vunpack.c.l.b16 %v482
    %v649 = vunpack.c.h.b16 %v482
    %v650 = vunpack.c.l.b16 %v483
    %v651 = vunpack.c.h.b16 %v483
    %v652 = vunpack.c.l.b16 %v484
    %v653 = vunpack.c.h.b16 %v484
    %v654 = vunpack.c.l.b16 %v485
    %v655 = vunpack.c.h.b16 %v485
    %v656 = vunpack.c.l.b16 %v486
    %v657 = vunpack.c.h.b16 %v486
    %v658 = vunpack.c.l.b16 %v487
    %v659 = vunpack.c.h.b16 %v487
    %v660 = vunpack.c.l.b16 %v488
    %v661 = vunpack.c.h.b16 %v488
    %v662 = vunpack.c.l.b16 %v489
    %v663 = vunpack.c.h.b16 %v489
    %v664 = vunpack.c.l.b16 %v490
    %v665 = vunpack.c.h.b16 %v490
    %v666 = vunpack.c.l.b16 %v491
    %v667 = vunpack.c.h.b16 %v491
    %v668 = vunpack.c.l.b16 %v492
    %v669 = vunpack.c.h.b16 %v492
    %v670 = vunpack.c.l.b16 %v493
    %v671 = vunpack.c.h.b16 %v493
    %v672 = vunpack.c.l.b16 %v494
    %v673 = vunpack.c.h.b16 %v494
    %v674 = vunpack.c.l.b16 %v495
    %v675 = vunpack.c.h.b16 %v495
    %v676 = vunpack.c.l.b16 %v496
    %v677 = vunpack.c.h.b16 %v496
    %v678 = vunpack.c.l.b16 %v497
    %v679 = vunpack.c.h.b16 %v497
    %v680 = vunpack.c.l.b16 %v498
    %v681 = vunpack.c.h.b16 %v498
    %v682 = vunpack.c.l.b16 %v499
    %v683 = vunpack.c.h.b16 %v499
    %v684 = vunpack.c.l.b16 %v500
    %v685 = vunpack.c.h.b16 %v500
    %v686 = vunpack.c.l.b16 %v501
    %v687 = vunpack.c.h.b16 %v501
    %v688 = vunpack.c.l.b16 %v502
    %v689 = vunpack.c.h.b16 %v502
    %v690 = vunpack.c.l.b16 %v503
    %v691 = vunpack.c.h.b16 %v503
    %v692 = vunpack.c.l.b16 %v504
    %v693 = vunpack.c.h.b16 %v504
    %v694 = vunpack.c.l.b16 %v505
    %v695 = vunpack.c.h.b16 %v505
    %v696 = vunpack.c.l.b16 %v506
    %v697 = vunpack.c.h.b16 %v506
    %v698 = vunpack.c.l.b16 %v507
    %v699 = vunpack.c.h.b16 %v507
    %v700 = vunpack.c.l.b16 %v508
    %v701 = vunpack.c.h.b16 %v508
    %v702 = vunpack.c.l.b16 %v509
    %v703 = vunpack.c.h.b16 %v509
    %v704 = vunpack.c.l.b16 %v510
    %v705 = vunpack.c.h.b16 %v510
    %v706 = vunpack.c.l.b16 %v511
    %v707 = vunpack.c.h.b16 %v511
    %v708 = vunpack.c.l.b16 %v512
    %v709 = vunpack.c.h.b16 %v512
    %v710 = vunpack.c.l.b16 %v513
    %v711 = vunpack.c.h.b16 %v513
    %v712 = vunpack.c.l.b16 %v514
    %v713 = vunpack.c.h.b16 %v514
    %v714 = vunpack.c.l.b16 %v515
    %v715 = vunpack.c.h.b16 %v515
    %v716 = vunpack.c.l.b16 %v516
    %v717 = vunpack.c.h.b16 %v516
    %v718 = vunpack.c.l.b16 %v517
    %v719 = vunpack.c.h.b16 %v517
    %v720 = vunpack.c.l.b16 %v518
    %v721 = vunpack.c.h.b16 %v518
    %v722 = vunpack.c.l.b16 %v519
    %v723 = vunpack.c.h.b16 %v519
    %v724 = vunpack.c.l.b16 %v520
    %v725 = vunpack.c.h.b16 %v520
    %v726 = vunpack.c.l.b16 %v521
    %v727 = vunpack.c.h.b16 %v521
    %v728 = vunpack.c.l.b16 %v522
    %v729 = vunpack.c.h.b16 %v522
    %v730 = vunpack.c.l.b16 %v523
    %v731 = vunpack.c.h.b16 %v523
    %v732 = vunpack.c.l.b16 %v524
    %v733 = vunpack.c.h.b16 %v524
    %v734 = vunpack.c.l.b16 %v525
    %v735 = vunpack.c.h.b16 %v525
    %v736 = vunpack.c.l.b16 %v526
    %v737 = vunpack.c.h.b16 %v526
    %v738 = vunpack.c.l.b16 %v527
    %v739 = vunpack.c.h.b16 %v527
    %v740 = vunpack.c.l.b16 %v528
    %v741 = vunpack.c.h.b16 %v528
    %v742 = vunpack.c.l.b16 %v529
    %v743 = vunpack.c.h.b16 %v529
    %v744 = vpack.c.b16 %v620, %v616
    %v745 = vpack.c.b16 %v621, %v617
    %v746 = vpack.c.b16 %v622, %v618
    %v747 = vpack.c.b16 %v623, %v619
    %v748 = vpack.c.b16 %v628, %v624
    %v749 = vpack.c.b16 %v629, %v625
    %v750 = vpack.c.b16 %v630, %v626
    %v751 = vpack.c.b16 %v631, %v627
    %v752 = vpack.c.b16 %v636, %v632
    %v753 = vpack.c.b16 %v637, %v633
    %v754 = vpack.c.b16 %v638, %v634
    %v755 = vpack.c.b16 %v639, %v635
    %v756 = vpack.c.b16 %v644, %v640
    %v757 = vpack.c.b16 %v645, %v641
    %v758 = vpack.c.b16 %v646, %v642
    %v759 = vpack.c.b16 %v647, %v643
    %v760 = vpack.c.b16 %v652, %v648
    %v761 = vpack.c.b16 %v653, %v649
    %v762 = vpack.c.b16 %v654, %v650
    %v763 = vpack.c.b16 %v655, %v651
    %v764 = vpack.c.b16 %v660, %v656
    %v765 = vpack.c.b16 %v661, %v657
    %v766 = vpack.c.b16 %v662, %v658
    %v767 = vpack.c.b16 %v663, %v659
    %v768 = vpack.c.b16 %v668, %v664
    %v769 = vpack.c.b16 %v669, %v665
    %v770 = vpack.c.b16 %v670, %v666
    %v771 = vpack.c.b16 %v671, %v667
    %v772 = vpack.c.b16 %v676, %v672
    %v773 = vpack.c.b16 %v677, %v673
    %v774 = vpack.c.b16 %v678, %v674
    %v775 = vpack.c.b16 %v679, %v675
    %v776 = vpack.c.b16 %v684, %v680
    %v777 = vpack.c.b16 %v685, %v681
    %v778 = vpack.c.b16 %v686, %v682
    %v779 = vpack.c.b16 %v687, %v683
    %v780 = vpack.c.b16 %v692, %v688
    %v781 = vpack.c.b16 %v693, %v689
    %v782 = vpack.c.b16 %v694, %v690
    %v783 = vpack.c.b16 %v695, %v691
    %v784 = vpack.c.b16 %v700, %v696
    %v785 = vpack.c.b16 %v701, %v697
    %v786 = vpack.c.b16 %v702, %v698
    %v787 = vpack.c.b16 %v703, %v699
    %v788 = vpack.c.b16 %v708, %v704
    %v789 = vpack.c.b16 %v709, %v705
    %v790 = vpack.c.b16 %v710, %v706
    %v791 = vpack.c.b16 %v711, %v707
    %v792 = vpack.c.b16 %v716, %v712
    %v793 = vpack.c.b16 %v717, %v713
    %v794 = vpack.c.b16 %v718, %v714
    %v795 = vpack.c.b16 %v719, %v715
    %v796 = vpack.c.b16 %v724, %v720
    %v797 = vpack.c.b16 %v725, %v721
    %v798 = vpack.c.b16 %v726, %v722
    %v799 = vpack.c.b16 %v727, %v723
    %v800 = vpack.c.b16 %v732, %v728
    %v801 = vpack.c.b16 %v733, %v729
    %v802 = vpack.c.b16 %v734, %v730
    %v803 = vpack.c.b16 %v735, %v731
    %v804 = vpack.c.b16 %v740, %v736
    %v805 = vpack.c.b16 %v741, %v737
    %v806 = vpack.c.b16 %v742, %v738
    %v807 = vpack.c.b16 %v743, %v739
    %872 = vmatprep.subr.bf16.mxu0 %v745
    %873 = vmatpush1.bf16.msra.mxu0 %v744
    %874 = vmatprep.subr.bf16.mxu0 %v749
    %875 = vmatpush1.bf16.msra.mxu0 %v748
    %876 = vmatprep.subr.bf16.mxu0 %v753
    %877 = vmatpush1.bf16.msra.mxu0 %v752
    %878 = vmatprep.subr.bf16.mxu0 %v757
    %879 = vmatpush1.bf16.msra.mxu0 %v756
    %880 = vmatprep.subr.bf16.mxu0 %v761
    %881 = vmatpush1.bf16.msra.mxu0 %v760
    %882 = vmatprep.subr.bf16.mxu0 %v765
    %883 = vmatpush1.bf16.msra.mxu0 %v764
    %884 = vmatprep.subr.bf16.mxu0 %v769
    %885 = vmatpush1.bf16.msra.mxu0 %v768
    %886 = vmatprep.subr.bf16.mxu0 %v773
    %887 = vmatpush1.bf16.msra.mxu0 %v772
    %888 = vmatprep.subr.bf16.mxu0 %v777
    %889 = vmatpush1.bf16.msra.mxu0 %v776
    %890 = vmatprep.subr.bf16.mxu0 %v781
    %891 = vmatpush1.bf16.msra.mxu0 %v780
    %892 = vmatprep.subr.bf16.mxu0 %v785
    %893 = vmatpush1.bf16.msra.mxu0 %v784
    %894 = vmatprep.subr.bf16.mxu0 %v789
    %895 = vmatpush1.bf16.msra.mxu0 %v788
    %896 = vmatprep.subr.bf16.mxu0 %v793
    %897 = vmatpush1.bf16.msra.mxu0 %v792
    %898 = vmatprep.subr.bf16.mxu0 %v797
    %899 = vmatpush1.bf16.msra.mxu0 %v796
    %900 = vmatprep.subr.bf16.mxu0 %v801
    %901 = vmatpush1.bf16.msra.mxu0 %v800
    %902 = vmatprep.subr.bf16.mxu0 %v805
    %903 = vmatpush1.bf16.msra.mxu0 %v804
    %904 = vmatprep.mubr.bf16.mxu0 %v465
    %905 = vmatmul.mubr.bf16.gmra.mrb[0].mxu0 %v464
    %v906 = vpop.f32.mrb[0].mxu0
    %v907 = vadd.f32 %v535, %v906
    %v908 = vpop.f32.mrb[0].mxu0
    %v909 = vadd.f32 %v539, %v908
    %v910 = vpop.f32.mrb[0].mxu0
    %v911 = vpop.f32.mrb[0].mxu0
    %912 = vdwg.mxu0
    %913 = vmatprep.subr.bf16.mxu0 %v747
    %914 = vmatpush1.bf16.msra.mxu0 %v746
    %915 = vmatprep.subr.bf16.mxu0 %v751
    %916 = vmatpush1.bf16.msra.mxu0 %v750
    %917 = vmatprep.subr.bf16.mxu0 %v755
    %918 = vmatpush1.bf16.msra.mxu0 %v754
    %919 = vmatprep.subr.bf16.mxu0 %v759
    %920 = vmatpush1.bf16.msra.mxu0 %v758
    %921 = vmatprep.subr.bf16.mxu0 %v763
    %922 = vmatpush1.bf16.msra.mxu0 %v762
    %923 = vmatprep.subr.bf16.mxu0 %v767
    %924 = vmatpush1.bf16.msra.mxu0 %v766
    %925 = vmatprep.subr.bf16.mxu0 %v771
    %926 = vmatpush1.bf16.msra.mxu0 %v770
    %927 = vmatprep.subr.bf16.mxu0 %v775
    %928 = vmatpush1.bf16.msra.mxu0 %v774
    %929 = vmatprep.subr.bf16.mxu0 %v779
    %930 = vmatpush1.bf16.msra.mxu0 %v778
    %931 = vmatprep.subr.bf16.mxu0 %v783
    %932 = vmatpush1.bf16.msra.mxu0 %v782
    %933 = vmatprep.subr.bf16.mxu0 %v787
    %934 = vmatpush1.bf16.msra.mxu0 %v786
    %935 = vmatprep.subr.bf16.mxu0 %v791
    %936 = vmatpush1.bf16.msra.mxu0 %v790
    %937 = vmatprep.subr.bf16.mxu0 %v795
    %938 = vmatpush1.bf16.msra.mxu0 %v794
    %939 = vmatprep.subr.bf16.mxu0 %v799
    %940 = vmatpush1.bf16.msra.mxu0 %v798
    %941 = vmatprep.subr.bf16.mxu0 %v803
    %942 = vmatpush1.bf16.msra.mxu0 %v802
    %943 = vmatprep.subr.bf16.mxu0 %v807
    %944 = vmatpush1.bf16.msra.mxu0 %v806
    %945 = vmatprep.mubr.bf16.mxu0 %v465
    %946 = vmatmul.mubr.bf16.gmra.mrb[0].mxu0 %v464
    %v947 = vpop.f32.mrb[0].mxu0
    %v948 = vadd.f32 %v543, %v947
    %v949 = vpop.f32.mrb[0].mxu0
    %v950 = vadd.f32 %v547, %v949
    %v951 = vpop.f32.mrb[0].mxu0
    %v952 = vpop.f32.mrb[0].mxu0
    %953 = vdwg.mxu0
    %v954 = vrot.slane %v907, 4
    %v955 = vadd.f32 %v907, %v954
    %v956 = vrot.slane %v955, 2
    %v957 = vadd.f32 %v955, %v956
    %v958 = vrot.slane %v957, 1
    %v959 = vadd.f32 %v957, %v958
    %v960 = vrot.slane %v909, 4
    %v961 = vadd.f32 %v909, %v960
    %v962 = vrot.slane %v961, 2
    %v963 = vadd.f32 %v961, %v962
    %v964 = vrot.slane %v963, 1
    %v965 = vadd.f32 %v963, %v964
    %v966 = vrot.slane %v948, 4
    %v967 = vadd.f32 %v948, %v966
    %v968 = vrot.slane %v967, 2
    %v969 = vadd.f32 %v967, %v968
    %v970 = vrot.slane %v969, 1
    %v971 = vadd.f32 %v969, %v970
    %v972 = vrot.slane %v950, 4
    %v973 = vadd.f32 %v950, %v972
    %v974 = vrot.slane %v973, 2
    %v975 = vadd.f32 %v973, %v974
    %v976 = vrot.slane %v975, 1
    %v977 = vadd.f32 %v975, %v976
    %v978 = vmul.f32 %v959, %v405
    %v979 = vmul.f32 %v965, %v405
    %v980 = vmul.f32 %v971, %v405
    %v981 = vmul.f32 %v977, %v405
    %v982 = vsub.f32 %v907, %v978
    %v983 = vsub.f32 %v909, %v979
    %v984 = vsub.f32 %v948, %v980
    %v985 = vsub.f32 %v950, %v981
    %v986 = vmul.f32 %v982, %v982
    %v987 = vmul.f32 %v983, %v983
    %v988 = vmul.f32 %v984, %v984
    %v989 = vmul.f32 %v985, %v985
    %v990 = vrot.slane %v986, 4
    %v991 = vadd.f32 %v986, %v990
    %v992 = vrot.slane %v991, 2
    %v993 = vadd.f32 %v991, %v992
    %v994 = vrot.slane %v993, 1
    %v995 = vadd.f32 %v993, %v994
    %v996 = vrot.slane %v987, 4
    %v997 = vadd.f32 %v987, %v996
    %v998 = vrot.slane %v997, 2
    %v999 = vadd.f32 %v997, %v998
    %v1000 = vrot.slane %v999, 1
    %v1001 = vadd.f32 %v999, %v1000
    %v1002 = vrot.slane %v988, 4
    %v1003 = vadd.f32 %v988, %v1002
    %v1004 = vrot.slane %v1003, 2
    %v1005 = vadd.f32 %v1003, %v1004
    %v1006 = vrot.slane %v1005, 1
    %v1007 = vadd.f32 %v1005, %v1006
    %v1008 = vrot.slane %v989, 4
    %v1009 = vadd.f32 %v989, %v1008
    %v1010 = vrot.slane %v1009, 2
    %v1011 = vadd.f32 %v1009, %v1010
    %v1012 = vrot.slane %v1011, 1
    %v1013 = vadd.f32 %v1011, %v1012
    %v1014 = vmul.f32 %v995, %v405
    %v1015 = vmul.f32 %v1001, %v405
    %v1016 = vmul.f32 %v1007, %v405
    %v1017 = vmul.f32 %v1013, %v405
    %v1018 = vadd.f32 %v1014, 0.8
    %v1019 = vadd.f32 %v1015, 0.8
    %v1020 = vadd.f32 %v1016, 0.8
    %v1021 = vadd.f32 %v1017, 0.8
    %v1022 = vrsqrt.pop %v1018
    %v1023 = vrsqrt.pop %v1019
    %v1024 = vrsqrt.pop %v1020
    %v1025 = vrsqrt.pop %v1021
    %v1026 = vmul.f32 %v982, %v1022
    %v1027 = vmul.f32 %v983, %v1023
    %v1028 = vmul.f32 %v984, %v1024
    %v1029 = vmul.f32 %v985, %v1025
    %v1030 = vld [vmem:[%s9] sm:$0xf]
    %v1032 = vlaneseq
    %v1033 = vshrl.u32 %v1032, 7
    %v1034 = vsub.s32 0, %v1033
    %v1035 = vrot.slane %v1030, %v1034
    %v1036 = vlaneseq
    %v1037 = vshrl.u32 %v1036, 7
    %v1038 = vsub.s32 1, %v1037
    %v1039 = vrot.slane %v1030, %v1038
    %v1040 = vlaneseq
    %v1041 = vshrl.u32 %v1040, 7
    %v1042 = vsub.s32 2, %v1041
    %v1043 = vrot.slane %v1030, %v1042
    %v1044 = vlaneseq
    %v1045 = vshrl.u32 %v1044, 7
    %v1046 = vsub.s32 3, %v1045
    %v1047 = vrot.slane %v1030, %v1046
    %v1052 = vmul.f32 %v1026, %v1035
    %v1053 = vmul.f32 %v1027, %v1039
    %v1054 = vmul.f32 %v1028, %v1043
    %v1055 = vmul.f32 %v1029, %v1047
    %v1056 = vld [vmem:[%s10] sm:$0xf]
    %v1058 = vlaneseq
    %v1059 = vshrl.u32 %v1058, 7
    %v1060 = vsub.s32 0, %v1059
    %v1061 = vrot.slane %v1056, %v1060
    %v1062 = vlaneseq
    %v1063 = vshrl.u32 %v1062, 7
    %v1064 = vsub.s32 1, %v1063
    %v1065 = vrot.slane %v1056, %v1064
    %v1066 = vlaneseq
    %v1067 = vshrl.u32 %v1066, 7
    %v1068 = vsub.s32 2, %v1067
    %v1069 = vrot.slane %v1056, %v1068
    %v1070 = vlaneseq
    %v1071 = vshrl.u32 %v1070, 7
    %v1072 = vsub.s32 3, %v1071
    %v1073 = vrot.slane %v1056, %v1072
    %v1078 = vadd.f32 %v1052, %v1061
    %v1079 = vadd.f32 %v1053, %v1065
    %v1080 = vadd.f32 %v1054, %v1069
    %v1081 = vadd.f32 %v1055, %v1073
    %v1082 = vmul.f32 %v1078, 0.2
    %v1083 = vmul.f32 %v1079, 0.2
    %v1084 = vmul.f32 %v1080, 0.2
    %v1085 = vmul.f32 %v1081, 0.2
    %v1086 = vmax.f32 %v1078, %v1082
    %v1087 = vmax.f32 %v1079, %v1083
    %v1088 = vmax.f32 %v1080, %v1084
    %v1089 = vmax.f32 %v1081, %v1085
    %v1090 = vpack.c.bf16 %v1086, %v1086
    %v1091 = vpack.c.bf16 %v1087, %v1087
    %v1092 = vpack.c.bf16 %v1088, %v1088
    %v1093 = vpack.c.bf16 %v1089, %v1089
    %v1094 = vld [vmem:[#allocation14] sm:$0xff]
    %v1095 = vld [vmem:[#allocation14 + $0x8] sm:$0xff]
    %v1096 = vld [vmem:[#allocation14 + $0x10] sm:$0xff]
    %v1097 = vld [vmem:[#allocation14 + $0x18] sm:$0xff]
    %v1098 = vld [vmem:[#allocation14 + $0x20] sm:$0xff]
    %v1099 = vld [vmem:[#allocation14 + $0x28] sm:$0xff]
    %v1100 = vld [vmem:[#allocation14 + $0x30] sm:$0xff]
    %v1101 = vld [vmem:[#allocation14 + $0x38] sm:$0xff]
    %v1102 = vld [vmem:[#allocation14 + $0x40] sm:$0xff]
    %v1103 = vld [vmem:[#allocation14 + $0x48] sm:$0xff]
    %v1104 = vld [vmem:[#allocation14 + $0x50] sm:$0xff]
    %v1105 = vld [vmem:[#allocation14 + $0x58] sm:$0xff]
    %v1106 = vld [vmem:[#allocation14 + $0x60] sm:$0xff]
    %v1107 = vld [vmem:[#allocation14 + $0x68] sm:$0xff]
    %v1108 = vld [vmem:[#allocation14 + $0x70] sm:$0xff]
    %v1109 = vld [vmem:[#allocation14 + $0x78] sm:$0xff]
    %v1110 = vld [vmem:[#allocation14 + $0x80] sm:$0xff]
    %v1111 = vld [vmem:[#allocation14 + $0x88] sm:$0xff]
    %v1112 = vld [vmem:[#allocation14 + $0x90] sm:$0xff]
    %v1113 = vld [vmem:[#allocation14 + $0x98] sm:$0xff]
    %v1114 = vld [vmem:[#allocation14 + $0xa0] sm:$0xff]
    %v1115 = vld [vmem:[#allocation14 + $0xa8] sm:$0xff]
    %v1116 = vld [vmem:[#allocation14 + $0xb0] sm:$0xff]
    %v1117 = vld [vmem:[#allocation14 + $0xb8] sm:$0xff]
    %v1118 = vld [vmem:[#allocation14 + $0xc0] sm:$0xff]
    %v1119 = vld [vmem:[#allocation14 + $0xc8] sm:$0xff]
    %v1120 = vld [vmem:[#allocation14 + $0xd0] sm:$0xff]
    %v1121 = vld [vmem:[#allocation14 + $0xd8] sm:$0xff]
    %v1122 = vld [vmem:[#allocation14 + $0xe0] sm:$0xff]
    %v1123 = vld [vmem:[#allocation14 + $0xe8] sm:$0xff]
    %v1124 = vld [vmem:[#allocation14 + $0xf0] sm:$0xff]
    %v1125 = vld [vmem:[#allocation14 + $0xf8] sm:$0xff]
    %v1126 = vld [vmem:[#allocation14 + $0x100] sm:$0xff]
    %v1127 = vld [vmem:[#allocation14 + $0x108] sm:$0xff]
    %v1128 = vld [vmem:[#allocation14 + $0x110] sm:$0xff]
    %v1129 = vld [vmem:[#allocation14 + $0x118] sm:$0xff]
    %v1130 = vld [vmem:[#allocation14 + $0x120] sm:$0xff]
    %v1131 = vld [vmem:[#allocation14 + $0x128] sm:$0xff]
    %v1132 = vld [vmem:[#allocation14 + $0x130] sm:$0xff]
    %v1133 = vld [vmem:[#allocation14 + $0x138] sm:$0xff]
    %v1134 = vld [vmem:[#allocation14 + $0x140] sm:$0xff]
    %v1135 = vld [vmem:[#allocation14 + $0x148] sm:$0xff]
    %v1136 = vld [vmem:[#allocation14 + $0x150] sm:$0xff]
    %v1137 = vld [vmem:[#allocation14 + $0x158] sm:$0xff]
    %v1138 = vld [vmem:[#allocation14 + $0x160] sm:$0xff]
    %v1139 = vld [vmem:[#allocation14 + $0x168] sm:$0xff]
    %v1140 = vld [vmem:[#allocation14 + $0x170] sm:$0xff]
    %v1141 = vld [vmem:[#allocation14 + $0x178] sm:$0xff]
    %v1142 = vld [vmem:[#allocation14 + $0x180] sm:$0xff]
    %v1143 = vld [vmem:[#allocation14 + $0x188] sm:$0xff]
    %v1144 = vld [vmem:[#allocation14 + $0x190] sm:$0xff]
    %v1145 = vld [vmem:[#allocation14 + $0x198] sm:$0xff]
    %v1146 = vld [vmem:[#allocation14 + $0x1a0] sm:$0xff]
    %v1147 = vld [vmem:[#allocation14 + $0x1a8] sm:$0xff]
    %v1148 = vld [vmem:[#allocation14 + $0x1b0] sm:$0xff]
    %v1149 = vld [vmem:[#allocation14 + $0x1b8] sm:$0xff]
    %v1150 = vld [vmem:[#allocation14 + $0x1c0] sm:$0xff]
    %v1151 = vld [vmem:[#allocation14 + $0x1c8] sm:$0xff]
    %v1152 = vld [vmem:[#allocation14 + $0x1d0] sm:$0xff]
    %v1153 = vld [vmem:[#allocation14 + $0x1d8] sm:$0xff]
    %v1154 = vld [vmem:[#allocation14 + $0x1e0] sm:$0xff]
    %v1155 = vld [vmem:[#allocation14 + $0x1e8] sm:$0xff]
    %v1156 = vld [vmem:[#allocation14 + $0x1f0] sm:$0xff]
    %v1157 = vld [vmem:[#allocation14 + $0x1f8] sm:$0xff]
    %v1158 = vld [vmem:[#allocation14 + $0x200] sm:$0xff]
    %v1159 = vld [vmem:[#allocation14 + $0x208] sm:$0xff]
    %v1160 = vld [vmem:[#allocation14 + $0x210] sm:$0xff]
    %v1161 = vld [vmem:[#allocation14 + $0x218] sm:$0xff]
    %v1162 = vld [vmem:[#allocation14 + $0x220] sm:$0xff]
    %v1163 = vld [vmem:[#allocation14 + $0x228] sm:$0xff]
    %v1164 = vld [vmem:[#allocation14 + $0x230] sm:$0xff]
    %v1165 = vld [vmem:[#allocation14 + $0x238] sm:$0xff]
    %v1166 = vld [vmem:[#allocation14 + $0x240] sm:$0xff]
    %v1167 = vld [vmem:[#allocation14 + $0x248] sm:$0xff]
    %v1168 = vld [vmem:[#allocation14 + $0x250] sm:$0xff]
    %v1169 = vld [vmem:[#allocation14 + $0x258] sm:$0xff]
    %v1170 = vld [vmem:[#allocation14 + $0x260] sm:$0xff]
    %v1171 = vld [vmem:[#allocation14 + $0x268] sm:$0xff]
    %v1172 = vld [vmem:[#allocation14 + $0x270] sm:$0xff]
    %v1173 = vld [vmem:[#allocation14 + $0x278] sm:$0xff]
    %v1174 = vld [vmem:[#allocation14 + $0x280] sm:$0xff]
    %v1175 = vld [vmem:[#allocation14 + $0x288] sm:$0xff]
    %v1176 = vld [vmem:[#allocation14 + $0x290] sm:$0xff]
    %v1177 = vld [vmem:[#allocation14 + $0x298] sm:$0xff]
    %v1178 = vld [vmem:[#allocation14 + $0x2a0] sm:$0xff]
    %v1179 = vld [vmem:[#allocation14 + $0x2a8] sm:$0xff]
    %v1180 = vld [vmem:[#allocation14 + $0x2b0] sm:$0xff]
    %v1181 = vld [vmem:[#allocation14 + $0x2b8] sm:$0xff]
    %v1182 = vld [vmem:[#allocation14 + $0x2c0] sm:$0xff]
    %v1183 = vld [vmem:[#allocation14 + $0x2c8] sm:$0xff]
    %v1184 = vld [vmem:[#allocation14 + $0x2d0] sm:$0xff]
    %v1185 = vld [vmem:[#allocation14 + $0x2d8] sm:$0xff]
    %v1186 = vld [vmem:[#allocation14 + $0x2e0] sm:$0xff]
    %v1187 = vld [vmem:[#allocation14 + $0x2e8] sm:$0xff]
    %v1188 = vld [vmem:[#allocation14 + $0x2f0] sm:$0xff]
    %v1189 = vld [vmem:[#allocation14 + $0x2f8] sm:$0xff]
    %v1190 = vld [vmem:[#allocation14 + $0x300] sm:$0xff]
    %v1191 = vld [vmem:[#allocation14 + $0x308] sm:$0xff]
    %v1192 = vld [vmem:[#allocation14 + $0x310] sm:$0xff]
    %v1193 = vld [vmem:[#allocation14 + $0x318] sm:$0xff]
    %v1194 = vld [vmem:[#allocation14 + $0x320] sm:$0xff]
    %v1195 = vld [vmem:[#allocation14 + $0x328] sm:$0xff]
    %v1196 = vld [vmem:[#allocation14 + $0x330] sm:$0xff]
    %v1197 = vld [vmem:[#allocation14 + $0x338] sm:$0xff]
    %v1198 = vld [vmem:[#allocation14 + $0x340] sm:$0xff]
    %v1199 = vld [vmem:[#allocation14 + $0x348] sm:$0xff]
    %v1200 = vld [vmem:[#allocation14 + $0x350] sm:$0xff]
    %v1201 = vld [vmem:[#allocation14 + $0x358] sm:$0xff]
    %v1202 = vld [vmem:[#allocation14 + $0x360] sm:$0xff]
    %v1203 = vld [vmem:[#allocation14 + $0x368] sm:$0xff]
    %v1204 = vld [vmem:[#allocation14 + $0x370] sm:$0xff]
    %v1205 = vld [vmem:[#allocation14 + $0x378] sm:$0xff]
    %v1206 = vld [vmem:[#allocation14 + $0x380] sm:$0xff]
    %v1207 = vld [vmem:[#allocation14 + $0x388] sm:$0xff]
    %v1208 = vld [vmem:[#allocation14 + $0x390] sm:$0xff]
    %v1209 = vld [vmem:[#allocation14 + $0x398] sm:$0xff]
    %v1210 = vld [vmem:[#allocation14 + $0x3a0] sm:$0xff]
    %v1211 = vld [vmem:[#allocation14 + $0x3a8] sm:$0xff]
    %v1212 = vld [vmem:[#allocation14 + $0x3b0] sm:$0xff]
    %v1213 = vld [vmem:[#allocation14 + $0x3b8] sm:$0xff]
    %v1214 = vld [vmem:[#allocation14 + $0x3c0] sm:$0xff]
    %v1215 = vld [vmem:[#allocation14 + $0x3c8] sm:$0xff]
    %v1216 = vld [vmem:[#allocation14 + $0x3d0] sm:$0xff]
    %v1217 = vld [vmem:[#allocation14 + $0x3d8] sm:$0xff]
    %v1218 = vld [vmem:[#allocation14 + $0x3e0] sm:$0xff]
    %v1219 = vld [vmem:[#allocation14 + $0x3e8] sm:$0xff]
    %v1220 = vld [vmem:[#allocation14 + $0x3f0] sm:$0xff]
    %v1221 = vld [vmem:[#allocation14 + $0x3f8] sm:$0xff]
    %v1222 = vld [vmem:[#allocation14 + $0x400] sm:$0xff]
    %v1223 = vld [vmem:[#allocation14 + $0x408] sm:$0xff]
    %v1224 = vld [vmem:[#allocation14 + $0x410] sm:$0xff]
    %v1225 = vld [vmem:[#allocation14 + $0x418] sm:$0xff]
    %v1226 = vld [vmem:[#allocation14 + $0x420] sm:$0xff]
    %v1227 = vld [vmem:[#allocation14 + $0x428] sm:$0xff]
    %v1228 = vld [vmem:[#allocation14 + $0x430] sm:$0xff]
    %v1229 = vld [vmem:[#allocation14 + $0x438] sm:$0xff]
    %v1230 = vld [vmem:[#allocation14 + $0x440] sm:$0xff]
    %v1231 = vld [vmem:[#allocation14 + $0x448] sm:$0xff]
    %v1232 = vld [vmem:[#allocation14 + $0x450] sm:$0xff]
    %v1233 = vld [vmem:[#allocation14 + $0x458] sm:$0xff]
    %v1234 = vld [vmem:[#allocation14 + $0x460] sm:$0xff]
    %v1235 = vld [vmem:[#allocation14 + $0x468] sm:$0xff]
    %v1236 = vld [vmem:[#allocation14 + $0x470] sm:$0xff]
    %v1237 = vld [vmem:[#allocation14 + $0x478] sm:$0xff]
    %v1238 = vld [vmem:[#allocation14 + $0x480] sm:$0xff]
    %v1239 = vld [vmem:[#allocation14 + $0x488] sm:$0xff]
    %v1240 = vld [vmem:[#allocation14 + $0x490] sm:$0xff]
    %v1241 = vld [vmem:[#allocation14 + $0x498] sm:$0xff]
    %v1242 = vld [vmem:[#allocation14 + $0x4a0] sm:$0xff]
    %v1243 = vld [vmem:[#allocation14 + $0x4a8] sm:$0xff]
    %v1244 = vld [vmem:[#allocation14 + $0x4b0] sm:$0xff]
    %v1245 = vld [vmem:[#allocation14 + $0x4b8] sm:$0xff]
    %v1246 = vld [vmem:[#allocation14 + $0x4c0] sm:$0xff]
    %v1247 = vld [vmem:[#allocation14 + $0x4c8] sm:$0xff]
    %v1248 = vld [vmem:[#allocation14 + $0x4d0] sm:$0xff]
    %v1249 = vld [vmem:[#allocation14 + $0x4d8] sm:$0xff]
    %v1250 = vld [vmem:[#allocation14 + $0x4e0] sm:$0xff]
    %v1251 = vld [vmem:[#allocation14 + $0x4e8] sm:$0xff]
    %v1252 = vld [vmem:[#allocation14 + $0x4f0] sm:$0xff]
    %v1253 = vld [vmem:[#allocation14 + $0x4f8] sm:$0xff]
    %v1254 = vld [vmem:[#allocation14 + $0x500] sm:$0xff]
    %v1255 = vld [vmem:[#allocation14 + $0x508] sm:$0xff]
    %v1256 = vld [vmem:[#allocation14 + $0x510] sm:$0xff]
    %v1257 = vld [vmem:[#allocation14 + $0x518] sm:$0xff]
    %v1258 = vld [vmem:[#allocation14 + $0x520] sm:$0xff]
    %v1259 = vld [vmem:[#allocation14 + $0x528] sm:$0xff]
    %v1260 = vld [vmem:[#allocation14 + $0x530] sm:$0xff]
    %v1261 = vld [vmem:[#allocation14 + $0x538] sm:$0xff]
    %v1262 = vld [vmem:[#allocation14 + $0x540] sm:$0xff]
    %v1263 = vld [vmem:[#allocation14 + $0x548] sm:$0xff]
    %v1264 = vld [vmem:[#allocation14 + $0x550] sm:$0xff]
    %v1265 = vld [vmem:[#allocation14 + $0x558] sm:$0xff]
    %v1266 = vld [vmem:[#allocation14 + $0x560] sm:$0xff]
    %v1267 = vld [vmem:[#allocation14 + $0x568] sm:$0xff]
    %v1268 = vld [vmem:[#allocation14 + $0x570] sm:$0xff]
    %v1269 = vld [vmem:[#allocation14 + $0x578] sm:$0xff]
    %v1270 = vld [vmem:[#allocation14 + $0x580] sm:$0xff]
    %v1271 = vld [vmem:[#allocation14 + $0x588] sm:$0xff]
    %v1272 = vld [vmem:[#allocation14 + $0x590] sm:$0xff]
    %v1273 = vld [vmem:[#allocation14 + $0x598] sm:$0xff]
    %v1274 = vld [vmem:[#allocation14 + $0x5a0] sm:$0xff]
    %v1275 = vld [vmem:[#allocation14 + $0x5a8] sm:$0xff]
    %v1276 = vld [vmem:[#allocation14 + $0x5b0] sm:$0xff]
    %v1277 = vld [vmem:[#allocation14 + $0x5b8] sm:$0xff]
    %v1278 = vld [vmem:[#allocation14 + $0x5c0] sm:$0xff]
    %v1279 = vld [vmem:[#allocation14 + $0x5c8] sm:$0xff]
    %v1280 = vld [vmem:[#allocation14 + $0x5d0] sm:$0xff]
    %v1281 = vld [vmem:[#allocation14 + $0x5d8] sm:$0xff]
    %v1282 = vld [vmem:[#allocation14 + $0x5e0] sm:$0xff]
    %v1283 = vld [vmem:[#allocation14 + $0x5e8] sm:$0xff]
    %v1284 = vld [vmem:[#allocation14 + $0x5f0] sm:$0xff]
    %v1285 = vld [vmem:[#allocation14 + $0x5f8] sm:$0xff]
    %v1286 = vld [vmem:[#allocation14 + $0x600] sm:$0xff]
    %v1287 = vld [vmem:[#allocation14 + $0x608] sm:$0xff]
    %v1288 = vld [vmem:[#allocation14 + $0x610] sm:$0xff]
    %v1289 = vld [vmem:[#allocation14 + $0x618] sm:$0xff]
    %v1290 = vld [vmem:[#allocation14 + $0x620] sm:$0xff]
    %v1291 = vld [vmem:[#allocation14 + $0x628] sm:$0xff]
    %v1292 = vld [vmem:[#allocation14 + $0x630] sm:$0xff]
    %v1293 = vld [vmem:[#allocation14 + $0x638] sm:$0xff]
    %v1294 = vld [vmem:[#allocation14 + $0x640] sm:$0xff]
    %v1295 = vld [vmem:[#allocation14 + $0x648] sm:$0xff]
    %v1296 = vld [vmem:[#allocation14 + $0x650] sm:$0xff]
    %v1297 = vld [vmem:[#allocation14 + $0x658] sm:$0xff]
    %v1298 = vld [vmem:[#allocation14 + $0x660] sm:$0xff]
    %v1299 = vld [vmem:[#allocation14 + $0x668] sm:$0xff]
    %v1300 = vld [vmem:[#allocation14 + $0x670] sm:$0xff]
    %v1301 = vld [vmem:[#allocation14 + $0x678] sm:$0xff]
    %v1302 = vld [vmem:[#allocation14 + $0x680] sm:$0xff]
    %v1303 = vld [vmem:[#allocation14 + $0x688] sm:$0xff]
    %v1304 = vld [vmem:[#allocation14 + $0x690] sm:$0xff]
    %v1305 = vld [vmem:[#allocation14 + $0x698] sm:$0xff]
    %v1306 = vld [vmem:[#allocation14 + $0x6a0] sm:$0xff]
    %v1307 = vld [vmem:[#allocation14 + $0x6a8] sm:$0xff]
    %v1308 = vld [vmem:[#allocation14 + $0x6b0] sm:$0xff]
    %v1309 = vld [vmem:[#allocation14 + $0x6b8] sm:$0xff]
    %v1310 = vld [vmem:[#allocation14 + $0x6c0] sm:$0xff]
    %v1311 = vld [vmem:[#allocation14 + $0x6c8] sm:$0xff]
    %v1312 = vld [vmem:[#allocation14 + $0x6d0] sm:$0xff]
    %v1313 = vld [vmem:[#allocation14 + $0x6d8] sm:$0xff]
    %v1314 = vld [vmem:[#allocation14 + $0x6e0] sm:$0xff]
    %v1315 = vld [vmem:[#allocation14 + $0x6e8] sm:$0xff]
    %v1316 = vld [vmem:[#allocation14 + $0x6f0] sm:$0xff]
    %v1317 = vld [vmem:[#allocation14 + $0x6f8] sm:$0xff]
    %v1318 = vld [vmem:[#allocation14 + $0x700] sm:$0xff]
    %v1319 = vld [vmem:[#allocation14 + $0x708] sm:$0xff]
    %v1320 = vld [vmem:[#allocation14 + $0x710] sm:$0xff]
    %v1321 = vld [vmem:[#allocation14 + $0x718] sm:$0xff]
    %v1322 = vld [vmem:[#allocation14 + $0x720] sm:$0xff]
    %v1323 = vld [vmem:[#allocation14 + $0x728] sm:$0xff]
    %v1324 = vld [vmem:[#allocation14 + $0x730] sm:$0xff]
    %v1325 = vld [vmem:[#allocation14 + $0x738] sm:$0xff]
    %v1326 = vld [vmem:[#allocation14 + $0x740] sm:$0xff]
    %v1327 = vld [vmem:[#allocation14 + $0x748] sm:$0xff]
    %v1328 = vld [vmem:[#allocation14 + $0x750] sm:$0xff]
    %v1329 = vld [vmem:[#allocation14 + $0x758] sm:$0xff]
    %v1330 = vld [vmem:[#allocation14 + $0x760] sm:$0xff]
    %v1331 = vld [vmem:[#allocation14 + $0x768] sm:$0xff]
    %v1332 = vld [vmem:[#allocation14 + $0x770] sm:$0xff]
    %v1333 = vld [vmem:[#allocation14 + $0x778] sm:$0xff]
    %v1334 = vld [vmem:[#allocation14 + $0x780] sm:$0xff]
    %v1335 = vld [vmem:[#allocation14 + $0x788] sm:$0xff]
    %v1336 = vld [vmem:[#allocation14 + $0x790] sm:$0xff]
    %v1337 = vld [vmem:[#allocation14 + $0x798] sm:$0xff]
    %v1338 = vld [vmem:[#allocation14 + $0x7a0] sm:$0xff]
    %v1339 = vld [vmem:[#allocation14 + $0x7a8] sm:$0xff]
    %v1340 = vld [vmem:[#allocation14 + $0x7b0] sm:$0xff]
    %v1341 = vld [vmem:[#allocation14 + $0x7b8] sm:$0xff]
    %v1342 = vld [vmem:[#allocation14 + $0x7c0] sm:$0xff]
    %v1343 = vld [vmem:[#allocation14 + $0x7c8] sm:$0xff]
    %v1344 = vld [vmem:[#allocation14 + $0x7d0] sm:$0xff]
    %v1345 = vld [vmem:[#allocation14 + $0x7d8] sm:$0xff]
    %v1346 = vld [vmem:[#allocation14 + $0x7e0] sm:$0xff]
    %v1347 = vld [vmem:[#allocation14 + $0x7e8] sm:$0xff]
    %v1348 = vld [vmem:[#allocation14 + $0x7f0] sm:$0xff]
    %v1349 = vld [vmem:[#allocation14 + $0x7f8] sm:$0xff]
    %v1350 = vld [vmem:[%s12] sm:$0xff]
    %v1352 = vlaneseq
    %v1353 = vshrl.u32 %v1352, 7
    %v1354 = vsub.s32 0, %v1353
    %v1355 = vrot.slane %v1350, %v1354
    %v1356 = vlaneseq
    %v1357 = vshrl.u32 %v1356, 7
    %v1358 = vsub.s32 1, %v1357
    %v1359 = vrot.slane %v1350, %v1358
    %v1360 = vlaneseq
    %v1361 = vshrl.u32 %v1360, 7
    %v1362 = vsub.s32 2, %v1361
    %v1363 = vrot.slane %v1350, %v1362
    %v1364 = vlaneseq
    %v1365 = vshrl.u32 %v1364, 7
    %v1366 = vsub.s32 3, %v1365
    %v1367 = vrot.slane %v1350, %v1366
    %v1368 = vlaneseq
    %v1369 = vshrl.u32 %v1368, 7
    %v1370 = vsub.s32 4, %v1369
    %v1371 = vrot.slane %v1350, %v1370
    %v1372 = vlaneseq
    %v1373 = vshrl.u32 %v1372, 7
    %v1374 = vsub.s32 5, %v1373
    %v1375 = vrot.slane %v1350, %v1374
    %v1376 = vlaneseq
    %v1377 = vshrl.u32 %v1376, 7
    %v1378 = vsub.s32 6, %v1377
    %v1379 = vrot.slane %v1350, %v1378
    %v1380 = vlaneseq
    %v1381 = vshrl.u32 %v1380, 7
    %v1382 = vsub.s32 7, %v1381
    %v1383 = vrot.slane %v1350, %v1382
    %v1648 = vunpack.c.l.b16 %v1094
    %v1649 = vunpack.c.h.b16 %v1094
    %v1650 = vunpack.c.l.b16 %v1095
    %v1651 = vunpack.c.h.b16 %v1095
    %v1652 = vunpack.c.l.b16 %v1096
    %v1653 = vunpack.c.h.b16 %v1096
    %v1654 = vunpack.c.l.b16 %v1097
    %v1655 = vunpack.c.h.b16 %v1097
    %v1656 = vunpack.c.l.b16 %v1098
    %v1657 = vunpack.c.h.b16 %v1098
    %v1658 = vunpack.c.l.b16 %v1099
    %v1659 = vunpack.c.h.b16 %v1099
    %v1660 = vunpack.c.l.b16 %v1100
    %v1661 = vunpack.c.h.b16 %v1100
    %v1662 = vunpack.c.l.b16 %v1101
    %v1663 = vunpack.c.h.b16 %v1101
    %v1664 = vunpack.c.l.b16 %v1102
    %v1665 = vunpack.c.h.b16 %v1102
    %v1666 = vunpack.c.l.b16 %v1103
    %v1667 = vunpack.c.h.b16 %v1103
    %v1668 = vunpack.c.l.b16 %v1104
    %v1669 = vunpack.c.h.b16 %v1104
    %v1670 = vunpack.c.l.b16 %v1105
    %v1671 = vunpack.c.h.b16 %v1105
    %v1672 = vunpack.c.l.b16 %v1106
    %v1673 = vunpack.c.h.b16 %v1106
    %v1674 = vunpack.c.l.b16 %v1107
    %v1675 = vunpack.c.h.b16 %v1107
    %v1676 = vunpack.c.l.b16 %v1108
    %v1677 = vunpack.c.h.b16 %v1108
    %v1678 = vunpack.c.l.b16 %v1109
    %v1679 = vunpack.c.h.b16 %v1109
    %v1680 = vunpack.c.l.b16 %v1110
    %v1681 = vunpack.c.h.b16 %v1110
    %v1682 = vunpack.c.l.b16 %v1111
    %v1683 = vunpack.c.h.b16 %v1111
    %v1684 = vunpack.c.l.b16 %v1112
    %v1685 = vunpack.c.h.b16 %v1112
    %v1686 = vunpack.c.l.b16 %v1113
    %v1687 = vunpack.c.h.b16 %v1113
    %v1688 = vunpack.c.l.b16 %v1114
    %v1689 = vunpack.c.h.b16 %v1114
    %v1690 = vunpack.c.l.b16 %v1115
    %v1691 = vunpack.c.h.b16 %v1115
    %v1692 = vunpack.c.l.b16 %v1116
    %v1693 = vunpack.c.h.b16 %v1116
    %v1694 = vunpack.c.l.b16 %v1117
    %v1695 = vunpack.c.h.b16 %v1117
    %v1696 = vunpack.c.l.b16 %v1118
    %v1697 = vunpack.c.h.b16 %v1118
    %v1698 = vunpack.c.l.b16 %v1119
    %v1699 = vunpack.c.h.b16 %v1119
    %v1700 = vunpack.c.l.b16 %v1120
    %v1701 = vunpack.c.h.b16 %v1120
    %v1702 = vunpack.c.l.b16 %v1121
    %v1703 = vunpack.c.h.b16 %v1121
    %v1704 = vunpack.c.l.b16 %v1122
    %v1705 = vunpack.c.h.b16 %v1122
    %v1706 = vunpack.c.l.b16 %v1123
    %v1707 = vunpack.c.h.b16 %v1123
    %v1708 = vunpack.c.l.b16 %v1124
    %v1709 = vunpack.c.h.b16 %v1124
    %v1710 = vunpack.c.l.b16 %v1125
    %v1711 = vunpack.c.h.b16 %v1125
    %v1712 = vunpack.c.l.b16 %v1126
    %v1713 = vunpack.c.h.b16 %v1126
    %v1714 = vunpack.c.l.b16 %v1127
    %v1715 = vunpack.c.h.b16 %v1127
    %v1716 = vunpack.c.l.b16 %v1128
    %v1717 = vunpack.c.h.b16 %v1128
    %v1718 = vunpack.c.l.b16 %v1129
    %v1719 = vunpack.c.h.b16 %v1129
    %v1720 = vunpack.c.l.b16 %v1130
    %v1721 = vunpack.c.h.b16 %v1130
    %v1722 = vunpack.c.l.b16 %v1131
    %v1723 = vunpack.c.h.b16 %v1131
    %v1724 = vunpack.c.l.b16 %v1132
    %v1725 = vunpack.c.h.b16 %v1132
    %v1726 = vunpack.c.l.b16 %v1133
    %v1727 = vunpack.c.h.b16 %v1133
    %v1728 = vunpack.c.l.b16 %v1134
    %v1729 = vunpack.c.h.b16 %v1134
    %v1730 = vunpack.c.l.b16 %v1135
    %v1731 = vunpack.c.h.b16 %v1135
    %v1732 = vunpack.c.l.b16 %v1136
    %v1733 = vunpack.c.h.b16 %v1136
    %v1734 = vunpack.c.l.b16 %v1137
    %v1735 = vunpack.c.h.b16 %v1137
    %v1736 = vunpack.c.l.b16 %v1138
    %v1737 = vunpack.c.h.b16 %v1138
    %v1738 = vunpack.c.l.b16 %v1139
    %v1739 = vunpack.c.h.b16 %v1139
    %v1740 = vunpack.c.l.b16 %v1140
    %v1741 = vunpack.c.h.b16 %v1140
    %v1742 = vunpack.c.l.b16 %v1141
    %v1743 = vunpack.c.h.b16 %v1141
    %v1744 = vunpack.c.l.b16 %v1142
    %v1745 = vunpack.c.h.b16 %v1142
    %v1746 = vunpack.c.l.b16 %v1143
    %v1747 = vunpack.c.h.b16 %v1143
    %v1748 = vunpack.c.l.b16 %v1144
    %v1749 = vunpack.c.h.b16 %v1144
    %v1750 = vunpack.c.l.b16 %v1145
    %v1751 = vunpack.c.h.b16 %v1145
    %v1752 = vunpack.c.l.b16 %v1146
    %v1753 = vunpack.c.h.b16 %v1146
    %v1754 = vunpack.c.l.b16 %v1147
    %v1755 = vunpack.c.h.b16 %v1147
    %v1756 = vunpack.c.l.b16 %v1148
    %v1757 = vunpack.c.h.b16 %v1148
    %v1758 = vunpack.c.l.b16 %v1149
    %v1759 = vunpack.c.h.b16 %v1149
    %v1760 = vunpack.c.l.b16 %v1150
    %v1761 = vunpack.c.h.b16 %v1150
    %v1762 = vunpack.c.l.b16 %v1151
    %v1763 = vunpack.c.h.b16 %v1151
    %v1764 = vunpack.c.l.b16 %v1152
    %v1765 = vunpack.c.h.b16 %v1152
    %v1766 = vunpack.c.l.b16 %v1153
    %v1767 = vunpack.c.h.b16 %v1153
    %v1768 = vunpack.c.l.b16 %v1154
    %v1769 = vunpack.c.h.b16 %v1154
    %v1770 = vunpack.c.l.b16 %v1155
    %v1771 = vunpack.c.h.b16 %v1155
    %v1772 = vunpack.c.l.b16 %v1156
    %v1773 = vunpack.c.h.b16 %v1156
    %v1774 = vunpack.c.l.b16 %v1157
    %v1775 = vunpack.c.h.b16 %v1157
    %v1776 = vunpack.c.l.b16 %v1158
    %v1777 = vunpack.c.h.b16 %v1158
    %v1778 = vunpack.c.l.b16 %v1159
    %v1779 = vunpack.c.h.b16 %v1159
    %v1780 = vunpack.c.l.b16 %v1160
    %v1781 = vunpack.c.h.b16 %v1160
    %v1782 = vunpack.c.l.b16 %v1161
    %v1783 = vunpack.c.h.b16 %v1161
    %v1784 = vunpack.c.l.b16 %v1162
    %v1785 = vunpack.c.h.b16 %v1162
    %v1786 = vunpack.c.l.b16 %v1163
    %v1787 = vunpack.c.h.b16 %v1163
    %v1788 = vunpack.c.l.b16 %v1164
    %v1789 = vunpack.c.h.b16 %v1164
    %v1790 = vunpack.c.l.b16 %v1165
    %v1791 = vunpack.c.h.b16 %v1165
    %v1792 = vunpack.c.l.b16 %v1166
    %v1793 = vunpack.c.h.b16 %v1166
    %v1794 = vunpack.c.l.b16 %v1167
    %v1795 = vunpack.c.h.b16 %v1167
    %v1796 = vunpack.c.l.b16 %v1168
    %v1797 = vunpack.c.h.b16 %v1168
    %v1798 = vunpack.c.l.b16 %v1169
    %v1799 = vunpack.c.h.b16 %v1169
    %v1800 = vunpack.c.l.b16 %v1170
    %v1801 = vunpack.c.h.b16 %v1170
    %v1802 = vunpack.c.l.b16 %v1171
    %v1803 = vunpack.c.h.b16 %v1171
    %v1804 = vunpack.c.l.b16 %v1172
    %v1805 = vunpack.c.h.b16 %v1172
    %v1806 = vunpack.c.l.b16 %v1173
    %v1807 = vunpack.c.h.b16 %v1173
    %v1808 = vunpack.c.l.b16 %v1174
    %v1809 = vunpack.c.h.b16 %v1174
    %v1810 = vunpack.c.l.b16 %v1175
    %v1811 = vunpack.c.h.b16 %v1175
    %v1812 = vunpack.c.l.b16 %v1176
    %v1813 = vunpack.c.h.b16 %v1176
    %v1814 = vunpack.c.l.b16 %v1177
    %v1815 = vunpack.c.h.b16 %v1177
    %v1816 = vunpack.c.l.b16 %v1178
    %v1817 = vunpack.c.h.b16 %v1178
    %v1818 = vunpack.c.l.b16 %v1179
    %v1819 = vunpack.c.h.b16 %v1179
    %v1820 = vunpack.c.l.b16 %v1180
    %v1821 = vunpack.c.h.b16 %v1180
    %v1822 = vunpack.c.l.b16 %v1181
    %v1823 = vunpack.c.h.b16 %v1181
    %v1824 = vunpack.c.l.b16 %v1182
    %v1825 = vunpack.c.h.b16 %v1182
    %v1826 = vunpack.c.l.b16 %v1183
    %v1827 = vunpack.c.h.b16 %v1183
    %v1828 = vunpack.c.l.b16 %v1184
    %v1829 = vunpack.c.h.b16 %v1184
    %v1830 = vunpack.c.l.b16 %v1185
    %v1831 = vunpack.c.h.b16 %v1185
    %v1832 = vunpack.c.l.b16 %v1186
    %v1833 = vunpack.c.h.b16 %v1186
    %v1834 = vunpack.c.l.b16 %v1187
    %v1835 = vunpack.c.h.b16 %v1187
    %v1836 = vunpack.c.l.b16 %v1188
    %v1837 = vunpack.c.h.b16 %v1188
    %v1838 = vunpack.c.l.b16 %v1189
    %v1839 = vunpack.c.h.b16 %v1189
    %v1840 = vunpack.c.l.b16 %v1190
    %v1841 = vunpack.c.h.b16 %v1190
    %v1842 = vunpack.c.l.b16 %v1191
    %v1843 = vunpack.c.h.b16 %v1191
    %v1844 = vunpack.c.l.b16 %v1192
    %v1845 = vunpack.c.h.b16 %v1192
    %v1846 = vunpack.c.l.b16 %v1193
    %v1847 = vunpack.c.h.b16 %v1193
    %v1848 = vunpack.c.l.b16 %v1194
    %v1849 = vunpack.c.h.b16 %v1194
    %v1850 = vunpack.c.l.b16 %v1195
    %v1851 = vunpack.c.h.b16 %v1195
    %v1852 = vunpack.c.l.b16 %v1196
    %v1853 = vunpack.c.h.b16 %v1196
    %v1854 = vunpack.c.l.b16 %v1197
    %v1855 = vunpack.c.h.b16 %v1197
    %v1856 = vunpack.c.l.b16 %v1198
    %v1857 = vunpack.c.h.b16 %v1198
    %v1858 = vunpack.c.l.b16 %v1199
    %v1859 = vunpack.c.h.b16 %v1199
    %v1860 = vunpack.c.l.b16 %v1200
    %v1861 = vunpack.c.h.b16 %v1200
    %v1862 = vunpack.c.l.b16 %v1201
    %v1863 = vunpack.c.h.b16 %v1201
    %v1864 = vunpack.c.l.b16 %v1202
    %v1865 = vunpack.c.h.b16 %v1202
    %v1866 = vunpack.c.l.b16 %v1203
    %v1867 = vunpack.c.h.b16 %v1203
    %v1868 = vunpack.c.l.b16 %v1204
    %v1869 = vunpack.c.h.b16 %v1204
    %v1870 = vunpack.c.l.b16 %v1205
    %v1871 = vunpack.c.h.b16 %v1205
    %v1872 = vunpack.c.l.b16 %v1206
    %v1873 = vunpack.c.h.b16 %v1206
    %v1874 = vunpack.c.l.b16 %v1207
    %v1875 = vunpack.c.h.b16 %v1207
    %v1876 = vunpack.c.l.b16 %v1208
    %v1877 = vunpack.c.h.b16 %v1208
    %v1878 = vunpack.c.l.b16 %v1209
    %v1879 = vunpack.c.h.b16 %v1209
    %v1880 = vunpack.c.l.b16 %v1210
    %v1881 = vunpack.c.h.b16 %v1210
    %v1882 = vunpack.c.l.b16 %v1211
    %v1883 = vunpack.c.h.b16 %v1211
    %v1884 = vunpack.c.l.b16 %v1212
    %v1885 = vunpack.c.h.b16 %v1212
    %v1886 = vunpack.c.l.b16 %v1213
    %v1887 = vunpack.c.h.b16 %v1213
    %v1888 = vunpack.c.l.b16 %v1214
    %v1889 = vunpack.c.h.b16 %v1214
    %v1890 = vunpack.c.l.b16 %v1215
    %v1891 = vunpack.c.h.b16 %v1215
    %v1892 = vunpack.c.l.b16 %v1216
    %v1893 = vunpack.c.h.b16 %v1216
    %v1894 = vunpack.c.l.b16 %v1217
    %v1895 = vunpack.c.h.b16 %v1217
    %v1896 = vunpack.c.l.b16 %v1218
    %v1897 = vunpack.c.h.b16 %v1218
    %v1898 = vunpack.c.l.b16 %v1219
    %v1899 = vunpack.c.h.b16 %v1219
    %v1900 = vunpack.c.l.b16 %v1220
    %v1901 = vunpack.c.h.b16 %v1220
    %v1902 = vunpack.c.l.b16 %v1221
    %v1903 = vunpack.c.h.b16 %v1221
    %v1904 = vunpack.c.l.b16 %v1222
    %v1905 = vunpack.c.h.b16 %v1222
    %v1906 = vunpack.c.l.b16 %v1223
    %v1907 = vunpack.c.h.b16 %v1223
    %v1908 = vunpack.c.l.b16 %v1224
    %v1909 = vunpack.c.h.b16 %v1224
    %v1910 = vunpack.c.l.b16 %v1225
    %v1911 = vunpack.c.h.b16 %v1225
    %v1912 = vunpack.c.l.b16 %v1226
    %v1913 = vunpack.c.h.b16 %v1226
    %v1914 = vunpack.c.l.b16 %v1227
    %v1915 = vunpack.c.h.b16 %v1227
    %v1916 = vunpack.c.l.b16 %v1228
    %v1917 = vunpack.c.h.b16 %v1228
    %v1918 = vunpack.c.l.b16 %v1229
    %v1919 = vunpack.c.h.b16 %v1229
    %v1920 = vunpack.c.l.b16 %v1230
    %v1921 = vunpack.c.h.b16 %v1230
    %v1922 = vunpack.c.l.b16 %v1231
    %v1923 = vunpack.c.h.b16 %v1231
    %v1924 = vunpack.c.l.b16 %v1232
    %v1925 = vunpack.c.h.b16 %v1232
    %v1926 = vunpack.c.l.b16 %v1233
    %v1927 = vunpack.c.h.b16 %v1233
    %v1928 = vunpack.c.l.b16 %v1234
    %v1929 = vunpack.c.h.b16 %v1234
    %v1930 = vunpack.c.l.b16 %v1235
    %v1931 = vunpack.c.h.b16 %v1235
    %v1932 = vunpack.c.l.b16 %v1236
    %v1933 = vunpack.c.h.b16 %v1236
    %v1934 = vunpack.c.l.b16 %v1237
    %v1935 = vunpack.c.h.b16 %v1237
    %v1936 = vunpack.c.l.b16 %v1238
    %v1937 = vunpack.c.h.b16 %v1238
    %v1938 = vunpack.c.l.b16 %v1239
    %v1939 = vunpack.c.h.b16 %v1239
    %v1940 = vunpack.c.l.b16 %v1240
    %v1941 = vunpack.c.h.b16 %v1240
    %v1942 = vunpack.c.l.b16 %v1241
    %v1943 = vunpack.c.h.b16 %v1241
    %v1944 = vunpack.c.l.b16 %v1242
    %v1945 = vunpack.c.h.b16 %v1242
    %v1946 = vunpack.c.l.b16 %v1243
    %v1947 = vunpack.c.h.b16 %v1243
    %v1948 = vunpack.c.l.b16 %v1244
    %v1949 = vunpack.c.h.b16 %v1244
    %v1950 = vunpack.c.l.b16 %v1245
    %v1951 = vunpack.c.h.b16 %v1245
    %v1952 = vunpack.c.l.b16 %v1246
    %v1953 = vunpack.c.h.b16 %v1246
    %v1954 = vunpack.c.l.b16 %v1247
    %v1955 = vunpack.c.h.b16 %v1247
    %v1956 = vunpack.c.l.b16 %v1248
    %v1957 = vunpack.c.h.b16 %v1248
    %v1958 = vunpack.c.l.b16 %v1249
    %v1959 = vunpack.c.h.b16 %v1249
    %v1960 = vunpack.c.l.b16 %v1250
    %v1961 = vunpack.c.h.b16 %v1250
    %v1962 = vunpack.c.l.b16 %v1251
    %v1963 = vunpack.c.h.b16 %v1251
    %v1964 = vunpack.c.l.b16 %v1252
    %v1965 = vunpack.c.h.b16 %v1252
    %v1966 = vunpack.c.l.b16 %v1253
    %v1967 = vunpack.c.h.b16 %v1253
    %v1968 = vunpack.c.l.b16 %v1254
    %v1969 = vunpack.c.h.b16 %v1254
    %v1970 = vunpack.c.l.b16 %v1255
    %v1971 = vunpack.c.h.b16 %v1255
    %v1972 = vunpack.c.l.b16 %v1256
    %v1973 = vunpack.c.h.b16 %v1256
    %v1974 = vunpack.c.l.b16 %v1257
    %v1975 = vunpack.c.h.b16 %v1257
    %v1976 = vunpack.c.l.b16 %v1258
    %v1977 = vunpack.c.h.b16 %v1258
    %v1978 = vunpack.c.l.b16 %v1259
    %v1979 = vunpack.c.h.b16 %v1259
    %v1980 = vunpack.c.l.b16 %v1260
    %v1981 = vunpack.c.h.b16 %v1260
    %v1982 = vunpack.c.l.b16 %v1261
    %v1983 = vunpack.c.h.b16 %v1261
    %v1984 = vunpack.c.l.b16 %v1262
    %v1985 = vunpack.c.h.b16 %v1262
    %v1986 = vunpack.c.l.b16 %v1263
    %v1987 = vunpack.c.h.b16 %v1263
    %v1988 = vunpack.c.l.b16 %v1264
    %v1989 = vunpack.c.h.b16 %v1264
    %v1990 = vunpack.c.l.b16 %v1265
    %v1991 = vunpack.c.h.b16 %v1265
    %v1992 = vunpack.c.l.b16 %v1266
    %v1993 = vunpack.c.h.b16 %v1266
    %v1994 = vunpack.c.l.b16 %v1267
    %v1995 = vunpack.c.h.b16 %v1267
    %v1996 = vunpack.c.l.b16 %v1268
    %v1997 = vunpack.c.h.b16 %v1268
    %v1998 = vunpack.c.l.b16 %v1269
    %v1999 = vunpack.c.h.b16 %v1269
    %v2000 = vunpack.c.l.b16 %v1270
    %v2001 = vunpack.c.h.b16 %v1270
    %v2002 = vunpack.c.l.b16 %v1271
    %v2003 = vunpack.c.h.b16 %v1271
    %v2004 = vunpack.c.l.b16 %v1272
    %v2005 = vunpack.c.h.b16 %v1272
    %v2006 = vunpack.c.l.b16 %v1273
    %v2007 = vunpack.c.h.b16 %v1273
    %v2008 = vunpack.c.l.b16 %v1274
    %v2009 = vunpack.c.h.b16 %v1274
    %v2010 = vunpack.c.l.b16 %v1275
    %v2011 = vunpack.c.h.b16 %v1275
    %v2012 = vunpack.c.l.b16 %v1276
    %v2013 = vunpack.c.h.b16 %v1276
    %v2014 = vunpack.c.l.b16 %v1277
    %v2015 = vunpack.c.h.b16 %v1277
    %v2016 = vunpack.c.l.b16 %v1278
    %v2017 = vunpack.c.h.b16 %v1278
    %v2018 = vunpack.c.l.b16 %v1279
    %v2019 = vunpack.c.h.b16 %v1279
    %v2020 = vunpack.c.l.b16 %v1280
    %v2021 = vunpack.c.h.b16 %v1280
    %v2022 = vunpack.c.l.b16 %v1281
    %v2023 = vunpack.c.h.b16 %v1281
    %v2024 = vunpack.c.l.b16 %v1282
    %v2025 = vunpack.c.h.b16 %v1282
    %v2026 = vunpack.c.l.b16 %v1283
    %v2027 = vunpack.c.h.b16 %v1283
    %v2028 = vunpack.c.l.b16 %v1284
    %v2029 = vunpack.c.h.b16 %v1284
    %v2030 = vunpack.c.l.b16 %v1285
    %v2031 = vunpack.c.h.b16 %v1285
    %v2032 = vunpack.c.l.b16 %v1286
    %v2033 = vunpack.c.h.b16 %v1286
    %v2034 = vunpack.c.l.b16 %v1287
    %v2035 = vunpack.c.h.b16 %v1287
    %v2036 = vunpack.c.l.b16 %v1288
    %v2037 = vunpack.c.h.b16 %v1288
    %v2038 = vunpack.c.l.b16 %v1289
    %v2039 = vunpack.c.h.b16 %v1289
    %v2040 = vunpack.c.l.b16 %v1290
    %v2041 = vunpack.c.h.b16 %v1290
    %v2042 = vunpack.c.l.b16 %v1291
    %v2043 = vunpack.c.h.b16 %v1291
    %v2044 = vunpack.c.l.b16 %v1292
    %v2045 = vunpack.c.h.b16 %v1292
    %v2046 = vunpack.c.l.b16 %v1293
    %v2047 = vunpack.c.h.b16 %v1293
    %v2048 = vunpack.c.l.b16 %v1294
    %v2049 = vunpack.c.h.b16 %v1294
    %v2050 = vunpack.c.l.b16 %v1295
    %v2051 = vunpack.c.h.b16 %v1295
    %v2052 = vunpack.c.l.b16 %v1296
    %v2053 = vunpack.c.h.b16 %v1296
    %v2054 = vunpack.c.l.b16 %v1297
    %v2055 = vunpack.c.h.b16 %v1297
    %v2056 = vunpack.c.l.b16 %v1298
    %v2057 = vunpack.c.h.b16 %v1298
    %v2058 = vunpack.c.l.b16 %v1299
    %v2059 = vunpack.c.h.b16 %v1299
    %v2060 = vunpack.c.l.b16 %v1300
    %v2061 = vunpack.c.h.b16 %v1300
    %v2062 = vunpack.c.l.b16 %v1301
    %v2063 = vunpack.c.h.b16 %v1301
    %v2064 = vunpack.c.l.b16 %v1302
    %v2065 = vunpack.c.h.b16 %v1302
    %v2066 = vunpack.c.l.b16 %v1303
    %v2067 = vunpack.c.h.b16 %v1303
    %v2068 = vunpack.c.l.b16 %v1304
    %v2069 = vunpack.c.h.b16 %v1304
    %v2070 = vunpack.c.l.b16 %v1305
    %v2071 = vunpack.c.h.b16 %v1305
    %v2072 = vunpack.c.l.b16 %v1306
    %v2073 = vunpack.c.h.b16 %v1306
    %v2074 = vunpack.c.l.b16 %v1307
    %v2075 = vunpack.c.h.b16 %v1307
    %v2076 = vunpack.c.l.b16 %v1308
    %v2077 = vunpack.c.h.b16 %v1308
    %v2078 = vunpack.c.l.b16 %v1309
    %v2079 = vunpack.c.h.b16 %v1309
    %v2080 = vunpack.c.l.b16 %v1310
    %v2081 = vunpack.c.h.b16 %v1310
    %v2082 = vunpack.c.l.b16 %v1311
    %v2083 = vunpack.c.h.b16 %v1311
    %v2084 = vunpack.c.l.b16 %v1312
    %v2085 = vunpack.c.h.b16 %v1312
    %v2086 = vunpack.c.l.b16 %v1313
    %v2087 = vunpack.c.h.b16 %v1313
    %v2088 = vunpack.c.l.b16 %v1314
    %v2089 = vunpack.c.h.b16 %v1314
    %v2090 = vunpack.c.l.b16 %v1315
    %v2091 = vunpack.c.h.b16 %v1315
    %v2092 = vunpack.c.l.b16 %v1316
    %v2093 = vunpack.c.h.b16 %v1316
    %v2094 = vunpack.c.l.b16 %v1317
    %v2095 = vunpack.c.h.b16 %v1317
    %v2096 = vunpack.c.l.b16 %v1318
    %v2097 = vunpack.c.h.b16 %v1318
    %v2098 = vunpack.c.l.b16 %v1319
    %v2099 = vunpack.c.h.b16 %v1319
    %v2100 = vunpack.c.l.b16 %v1320
    %v2101 = vunpack.c.h.b16 %v1320
    %v2102 = vunpack.c.l.b16 %v1321
    %v2103 = vunpack.c.h.b16 %v1321
    %v2104 = vunpack.c.l.b16 %v1322
    %v2105 = vunpack.c.h.b16 %v1322
    %v2106 = vunpack.c.l.b16 %v1323
    %v2107 = vunpack.c.h.b16 %v1323
    %v2108 = vunpack.c.l.b16 %v1324
    %v2109 = vunpack.c.h.b16 %v1324
    %v2110 = vunpack.c.l.b16 %v1325
    %v2111 = vunpack.c.h.b16 %v1325
    %v2112 = vunpack.c.l.b16 %v1326
    %v2113 = vunpack.c.h.b16 %v1326
    %v2114 = vunpack.c.l.b16 %v1327
    %v2115 = vunpack.c.h.b16 %v1327
    %v2116 = vunpack.c.l.b16 %v1328
    %v2117 = vunpack.c.h.b16 %v1328
    %v2118 = vunpack.c.l.b16 %v1329
    %v2119 = vunpack.c.h.b16 %v1329
    %v2120 = vunpack.c.l.b16 %v1330
    %v2121 = vunpack.c.h.b16 %v1330
    %v2122 = vunpack.c.l.b16 %v1331
    %v2123 = vunpack.c.h.b16 %v1331
    %v2124 = vunpack.c.l.b16 %v1332
    %v2125 = vunpack.c.h.b16 %v1332
    %v2126 = vunpack.c.l.b16 %v1333
    %v2127 = vunpack.c.h.b16 %v1333
    %v2128 = vunpack.c.l.b16 %v1334
    %v2129 = vunpack.c.h.b16 %v1334
    %v2130 = vunpack.c.l.b16 %v1335
    %v2131 = vunpack.c.h.b16 %v1335
    %v2132 = vunpack.c.l.b16 %v1336
    %v2133 = vunpack.c.h.b16 %v1336
    %v2134 = vunpack.c.l.b16 %v1337
    %v2135 = vunpack.c.h.b16 %v1337
    %v2136 = vunpack.c.l.b16 %v1338
    %v2137 = vunpack.c.h.b16 %v1338
    %v2138 = vunpack.c.l.b16 %v1339
    %v2139 = vunpack.c.h.b16 %v1339
    %v2140 = vunpack.c.l.b16 %v1340
    %v2141 = vunpack.c.h.b16 %v1340
    %v2142 = vunpack.c.l.b16 %v1341
    %v2143 = vunpack.c.h.b16 %v1341
    %v2144 = vunpack.c.l.b16 %v1342
    %v2145 = vunpack.c.h.b16 %v1342
    %v2146 = vunpack.c.l.b16 %v1343
    %v2147 = vunpack.c.h.b16 %v1343
    %v2148 = vunpack.c.l.b16 %v1344
    %v2149 = vunpack.c.h.b16 %v1344
    %v2150 = vunpack.c.l.b16 %v1345
    %v2151 = vunpack.c.h.b16 %v1345
    %v2152 = vunpack.c.l.b16 %v1346
    %v2153 = vunpack.c.h.b16 %v1346
    %v2154 = vunpack.c.l.b16 %v1347
    %v2155 = vunpack.c.h.b16 %v1347
    %v2156 = vunpack.c.l.b16 %v1348
    %v2157 = vunpack.c.h.b16 %v1348
    %v2158 = vunpack.c.l.b16 %v1349
    %v2159 = vunpack.c.h.b16 %v1349
    %v2160 = vpack.c.b16 %v1656, %v1648
    %v2161 = vpack.c.b16 %v1657, %v1649
    %v2162 = vpack.c.b16 %v1658, %v1650
    %v2163 = vpack.c.b16 %v1659, %v1651
    %v2164 = vpack.c.b16 %v1660, %v1652
    %v2165 = vpack.c.b16 %v1661, %v1653
    %v2166 = vpack.c.b16 %v1662, %v1654
    %v2167 = vpack.c.b16 %v1663, %v1655
    %v2168 = vpack.c.b16 %v1672, %v1664
    %v2169 = vpack.c.b16 %v1673, %v1665
    %v2170 = vpack.c.b16 %v1674, %v1666
    %v2171 = vpack.c.b16 %v1675, %v1667
    %v2172 = vpack.c.b16 %v1676, %v1668
    %v2173 = vpack.c.b16 %v1677, %v1669
    %v2174 = vpack.c.b16 %v1678, %v1670
    %v2175 = vpack.c.b16 %v1679, %v1671
    %v2176 = vpack.c.b16 %v1688, %v1680
    %v2177 = vpack.c.b16 %v1689, %v1681
    %v2178 = vpack.c.b16 %v1690, %v1682
    %v2179 = vpack.c.b16 %v1691, %v1683
    %v2180 = vpack.c.b16 %v1692, %v1684
    %v2181 = vpack.c.b16 %v1693, %v1685
    %v2182 = vpack.c.b16 %v1694, %v1686
    %v2183 = vpack.c.b16 %v1695, %v1687
    %v2184 = vpack.c.b16 %v1704, %v1696
    %v2185 = vpack.c.b16 %v1705, %v1697
    %v2186 = vpack.c.b16 %v1706, %v1698
    %v2187 = vpack.c.b16 %v1707, %v1699
    %v2188 = vpack.c.b16 %v1708, %v1700
    %v2189 = vpack.c.b16 %v1709, %v1701
    %v2190 = vpack.c.b16 %v1710, %v1702
    %v2191 = vpack.c.b16 %v1711, %v1703
    %v2192 = vpack.c.b16 %v1720, %v1712
    %v2193 = vpack.c.b16 %v1721, %v1713
    %v2194 = vpack.c.b16 %v1722, %v1714
    %v2195 = vpack.c.b16 %v1723, %v1715
    %v2196 = vpack.c.b16 %v1724, %v1716
    %v2197 = vpack.c.b16 %v1725, %v1717
    %v2198 = vpack.c.b16 %v1726, %v1718
    %v2199 = vpack.c.b16 %v1727, %v1719
    %v2200 = vpack.c.b16 %v1736, %v1728
    %v2201 = vpack.c.b16 %v1737, %v1729
    %v2202 = vpack.c.b16 %v1738, %v1730
    %v2203 = vpack.c.b16 %v1739, %v1731
    %v2204 = vpack.c.b16 %v1740, %v1732
    %v2205 = vpack.c.b16 %v1741, %v1733
    %v2206 = vpack.c.b16 %v1742, %v1734
    %v2207 = vpack.c.b16 %v1743, %v1735
    %v2208 = vpack.c.b16 %v1752, %v1744
    %v2209 = vpack.c.b16 %v1753, %v1745
    %v2210 = vpack.c.b16 %v1754, %v1746
    %v2211 = vpack.c.b16 %v1755, %v1747
    %v2212 = vpack.c.b16 %v1756, %v1748
    %v2213 = vpack.c.b16 %v1757, %v1749
    %v2214 = vpack.c.b16 %v1758, %v1750
    %v2215 = vpack.c.b16 %v1759, %v1751
    %v2216 = vpack.c.b16 %v1768, %v1760
    %v2217 = vpack.c.b16 %v1769, %v1761
    %v2218 = vpack.c.b16 %v1770, %v1762
    %v2219 = vpack.c.b16 %v1771, %v1763
    %v2220 = vpack.c.b16 %v1772, %v1764
    %v2221 = vpack.c.b16 %v1773, %v1765
    %v2222 = vpack.c.b16 %v1774, %v1766
    %v2223 = vpack.c.b16 %v1775, %v1767
    %v2224 = vpack.c.b16 %v1784, %v1776
    %v2225 = vpack.c.b16 %v1785, %v1777
    %v2226 = vpack.c.b16 %v1786, %v1778
    %v2227 = vpack.c.b16 %v1787, %v1779
    %v2228 = vpack.c.b16 %v1788, %v1780
    %v2229 = vpack.c.b16 %v1789, %v1781
    %v2230 = vpack.c.b16 %v1790, %v1782
    %v2231 = vpack.c.b16 %v1791, %v1783
    %v2232 = vpack.c.b16 %v1800, %v1792
    %v2233 = vpack.c.b16 %v1801, %v1793
    %v2234 = vpack.c.b16 %v1802, %v1794
    %v2235 = vpack.c.b16 %v1803, %v1795
    %v2236 = vpack.c.b16 %v1804, %v1796
    %v2237 = vpack.c.b16 %v1805, %v1797
    %v2238 = vpack.c.b16 %v1806, %v1798
    %v2239 = vpack.c.b16 %v1807, %v1799
    %v2240 = vpack.c.b16 %v1816, %v1808
    %v2241 = vpack.c.b16 %v1817, %v1809
    %v2242 = vpack.c.b16 %v1818, %v1810
    %v2243 = vpack.c.b16 %v1819, %v1811
    %v2244 = vpack.c.b16 %v1820, %v1812
    %v2245 = vpack.c.b16 %v1821, %v1813
    %v2246 = vpack.c.b16 %v1822, %v1814
    %v2247 = vpack.c.b16 %v1823, %v1815
    %v2248 = vpack.c.b16 %v1832, %v1824
    %v2249 = vpack.c.b16 %v1833, %v1825
    %v2250 = vpack.c.b16 %v1834, %v1826
    %v2251 = vpack.c.b16 %v1835, %v1827
    %v2252 = vpack.c.b16 %v1836, %v1828
    %v2253 = vpack.c.b16 %v1837, %v1829
    %v2254 = vpack.c.b16 %v1838, %v1830
    %v2255 = vpack.c.b16 %v1839, %v1831
    %v2256 = vpack.c.b16 %v1848, %v1840
    %v2257 = vpack.c.b16 %v1849, %v1841
    %v2258 = vpack.c.b16 %v1850, %v1842
    %v2259 = vpack.c.b16 %v1851, %v1843
    %v2260 = vpack.c.b16 %v1852, %v1844
    %v2261 = vpack.c.b16 %v1853, %v1845
    %v2262 = vpack.c.b16 %v1854, %v1846
    %v2263 = vpack.c.b16 %v1855, %v1847
    %v2264 = vpack.c.b16 %v1864, %v1856
    %v2265 = vpack.c.b16 %v1865, %v1857
    %v2266 = vpack.c.b16 %v1866, %v1858
    %v2267 = vpack.c.b16 %v1867, %v1859
    %v2268 = vpack.c.b16 %v1868, %v1860
    %v2269 = vpack.c.b16 %v1869, %v1861
    %v2270 = vpack.c.b16 %v1870, %v1862
    %v2271 = vpack.c.b16 %v1871, %v1863
    %v2272 = vpack.c.b16 %v1880, %v1872
    %v2273 = vpack.c.b16 %v1881, %v1873
    %v2274 = vpack.c.b16 %v1882, %v1874
    %v2275 = vpack.c.b16 %v1883, %v1875
    %v2276 = vpack.c.b16 %v1884, %v1876
    %v2277 = vpack.c.b16 %v1885, %v1877
    %v2278 = vpack.c.b16 %v1886, %v1878
    %v2279 = vpack.c.b16 %v1887, %v1879
    %v2280 = vpack.c.b16 %v1896, %v1888
    %v2281 = vpack.c.b16 %v1897, %v1889
    %v2282 = vpack.c.b16 %v1898, %v1890
    %v2283 = vpack.c.b16 %v1899, %v1891
    %v2284 = vpack.c.b16 %v1900, %v1892
    %v2285 = vpack.c.b16 %v1901, %v1893
    %v2286 = vpack.c.b16 %v1902, %v1894
    %v2287 = vpack.c.b16 %v1903, %v1895
    %v2288 = vpack.c.b16 %v1912, %v1904
    %v2289 = vpack.c.b16 %v1913, %v1905
    %v2290 = vpack.c.b16 %v1914, %v1906
    %v2291 = vpack.c.b16 %v1915, %v1907
    %v2292 = vpack.c.b16 %v1916, %v1908
    %v2293 = vpack.c.b16 %v1917, %v1909
    %v2294 = vpack.c.b16 %v1918, %v1910
    %v2295 = vpack.c.b16 %v1919, %v1911
    %v2296 = vpack.c.b16 %v1928, %v1920
    %v2297 = vpack.c.b16 %v1929, %v1921
    %v2298 = vpack.c.b16 %v1930, %v1922
    %v2299 = vpack.c.b16 %v1931, %v1923
    %v2300 = vpack.c.b16 %v1932, %v1924
    %v2301 = vpack.c.b16 %v1933, %v1925
    %v2302 = vpack.c.b16 %v1934, %v1926
    %v2303 = vpack.c.b16 %v1935, %v1927
    %v2304 = vpack.c.b16 %v1944, %v1936
    %v2305 = vpack.c.b16 %v1945, %v1937
    %v2306 = vpack.c.b16 %v1946, %v1938
    %v2307 = vpack.c.b16 %v1947, %v1939
    %v2308 = vpack.c.b16 %v1948, %v1940
    %v2309 = vpack.c.b16 %v1949, %v1941
    %v2310 = vpack.c.b16 %v1950, %v1942
    %v2311 = vpack.c.b16 %v1951, %v1943
    %v2312 = vpack.c.b16 %v1960, %v1952
    %v2313 = vpack.c.b16 %v1961, %v1953
    %v2314 = vpack.c.b16 %v1962, %v1954
    %v2315 = vpack.c.b16 %v1963, %v1955
    %v2316 = vpack.c.b16 %v1964, %v1956
    %v2317 = vpack.c.b16 %v1965, %v1957
    %v2318 = vpack.c.b16 %v1966, %v1958
    %v2319 = vpack.c.b16 %v1967, %v1959
    %v2320 = vpack.c.b16 %v1976, %v1968
    %v2321 = vpack.c.b16 %v1977, %v1969
    %v2322 = vpack.c.b16 %v1978, %v1970
    %v2323 = vpack.c.b16 %v1979, %v1971
    %v2324 = vpack.c.b16 %v1980, %v1972
    %v2325 = vpack.c.b16 %v1981, %v1973
    %v2326 = vpack.c.b16 %v1982, %v1974
    %v2327 = vpack.c.b16 %v1983, %v1975
    %v2328 = vpack.c.b16 %v1992, %v1984
    %v2329 = vpack.c.b16 %v1993, %v1985
    %v2330 = vpack.c.b16 %v1994, %v1986
    %v2331 = vpack.c.b16 %v1995, %v1987
    %v2332 = vpack.c.b16 %v1996, %v1988
    %v2333 = vpack.c.b16 %v1997, %v1989
    %v2334 = vpack.c.b16 %v1998, %v1990
    %v2335 = vpack.c.b16 %v1999, %v1991
    %v2336 = vpack.c.b16 %v2008, %v2000
    %v2337 = vpack.c.b16 %v2009, %v2001
    %v2338 = vpack.c.b16 %v2010, %v2002
    %v2339 = vpack.c.b16 %v2011, %v2003
    %v2340 = vpack.c.b16 %v2012, %v2004
    %v2341 = vpack.c.b16 %v2013, %v2005
    %v2342 = vpack.c.b16 %v2014, %v2006
    %v2343 = vpack.c.b16 %v2015, %v2007
    %v2344 = vpack.c.b16 %v2024, %v2016
    %v2345 = vpack.c.b16 %v2025, %v2017
    %v2346 = vpack.c.b16 %v2026, %v2018
    %v2347 = vpack.c.b16 %v2027, %v2019
    %v2348 = vpack.c.b16 %v2028, %v2020
    %v2349 = vpack.c.b16 %v2029, %v2021
    %v2350 = vpack.c.b16 %v2030, %v2022
    %v2351 = vpack.c.b16 %v2031, %v2023
    %v2352 = vpack.c.b16 %v2040, %v2032
    %v2353 = vpack.c.b16 %v2041, %v2033
    %v2354 = vpack.c.b16 %v2042, %v2034
    %v2355 = vpack.c.b16 %v2043, %v2035
    %v2356 = vpack.c.b16 %v2044, %v2036
    %v2357 = vpack.c.b16 %v2045, %v2037
    %v2358 = vpack.c.b16 %v2046, %v2038
    %v2359 = vpack.c.b16 %v2047, %v2039
    %v2360 = vpack.c.b16 %v2056, %v2048
    %v2361 = vpack.c.b16 %v2057, %v2049
    %v2362 = vpack.c.b16 %v2058, %v2050
    %v2363 = vpack.c.b16 %v2059, %v2051
    %v2364 = vpack.c.b16 %v2060, %v2052
    %v2365 = vpack.c.b16 %v2061, %v2053
    %v2366 = vpack.c.b16 %v2062, %v2054
    %v2367 = vpack.c.b16 %v2063, %v2055
    %v2368 = vpack.c.b16 %v2072, %v2064
    %v2369 = vpack.c.b16 %v2073, %v2065
    %v2370 = vpack.c.b16 %v2074, %v2066
    %v2371 = vpack.c.b16 %v2075, %v2067
    %v2372 = vpack.c.b16 %v2076, %v2068
    %v2373 = vpack.c.b16 %v2077, %v2069
    %v2374 = vpack.c.b16 %v2078, %v2070
    %v2375 = vpack.c.b16 %v2079, %v2071
    %v2376 = vpack.c.b16 %v2088, %v2080
    %v2377 = vpack.c.b16 %v2089, %v2081
    %v2378 = vpack.c.b16 %v2090, %v2082
    %v2379 = vpack.c.b16 %v2091, %v2083
    %v2380 = vpack.c.b16 %v2092, %v2084
    %v2381 = vpack.c.b16 %v2093, %v2085
    %v2382 = vpack.c.b16 %v2094, %v2086
    %v2383 = vpack.c.b16 %v2095, %v2087
    %v2384 = vpack.c.b16 %v2104, %v2096
    %v2385 = vpack.c.b16 %v2105, %v2097
    %v2386 = vpack.c.b16 %v2106, %v2098
    %v2387 = vpack.c.b16 %v2107, %v2099
    %v2388 = vpack.c.b16 %v2108, %v2100
    %v2389 = vpack.c.b16 %v2109, %v2101
    %v2390 = vpack.c.b16 %v2110, %v2102
    %v2391 = vpack.c.b16 %v2111, %v2103
    %v2392 = vpack.c.b16 %v2120, %v2112
    %v2393 = vpack.c.b16 %v2121, %v2113
    %v2394 = vpack.c.b16 %v2122, %v2114
    %v2395 = vpack.c.b16 %v2123, %v2115
    %v2396 = vpack.c.b16 %v2124, %v2116
    %v2397 = vpack.c.b16 %v2125, %v2117
    %v2398 = vpack.c.b16 %v2126, %v2118
    %v2399 = vpack.c.b16 %v2127, %v2119
    %v2400 = vpack.c.b16 %v2136, %v2128
    %v2401 = vpack.c.b16 %v2137, %v2129
    %v2402 = vpack.c.b16 %v2138, %v2130
    %v2403 = vpack.c.b16 %v2139, %v2131
    %v2404 = vpack.c.b16 %v2140, %v2132
    %v2405 = vpack.c.b16 %v2141, %v2133
    %v2406 = vpack.c.b16 %v2142, %v2134
    %v2407 = vpack.c.b16 %v2143, %v2135
    %v2408 = vpack.c.b16 %v2152, %v2144
    %v2409 = vpack.c.b16 %v2153, %v2145
    %v2410 = vpack.c.b16 %v2154, %v2146
    %v2411 = vpack.c.b16 %v2155, %v2147
    %v2412 = vpack.c.b16 %v2156, %v2148
    %v2413 = vpack.c.b16 %v2157, %v2149
    %v2414 = vpack.c.b16 %v2158, %v2150
    %v2415 = vpack.c.b16 %v2159, %v2151
    %2672 = vmatprep.subr.bf16.mxu0 %v2161
    %2673 = vmatpush1.bf16.msra.mxu0 %v2160
    %2674 = vmatprep.subr.bf16.mxu0 %v2169
    %2675 = vmatpush1.bf16.msra.mxu0 %v2168
    %2676 = vmatprep.subr.bf16.mxu0 %v2177
    %2677 = vmatpush1.bf16.msra.mxu0 %v2176
    %2678 = vmatprep.subr.bf16.mxu0 %v2185
    %2679 = vmatpush1.bf16.msra.mxu0 %v2184
    %2680 = vmatprep.subr.bf16.mxu0 %v2193
    %2681 = vmatpush1.bf16.msra.mxu0 %v2192
    %2682 = vmatprep.subr.bf16.mxu0 %v2201
    %2683 = vmatpush1.bf16.msra.mxu0 %v2200
    %2684 = vmatprep.subr.bf16.mxu0 %v2209
    %2685 = vmatpush1.bf16.msra.mxu0 %v2208
    %2686 = vmatprep.subr.bf16.mxu0 %v2217
    %2687 = vmatpush1.bf16.msra.mxu0 %v2216
    %2688 = vmatprep.subr.bf16.mxu0 %v2225
    %2689 = vmatpush1.bf16.msra.mxu0 %v2224
    %2690 = vmatprep.subr.bf16.mxu0 %v2233
    %2691 = vmatpush1.bf16.msra.mxu0 %v2232
    %2692 = vmatprep.subr.bf16.mxu0 %v2241
    %2693 = vmatpush1.bf16.msra.mxu0 %v2240
    %2694 = vmatprep.subr.bf16.mxu0 %v2249
    %2695 = vmatpush1.bf16.msra.mxu0 %v2248
    %2696 = vmatprep.subr.bf16.mxu0 %v2257
    %2697 = vmatpush1.bf16.msra.mxu0 %v2256
    %2698 = vmatprep.subr.bf16.mxu0 %v2265
    %2699 = vmatpush1.bf16.msra.mxu0 %v2264
    %2700 = vmatprep.subr.bf16.mxu0 %v2273
    %2701 = vmatpush1.bf16.msra.mxu0 %v2272
    %2702 = vmatprep.subr.bf16.mxu0 %v2281
    %2703 = vmatpush1.bf16.msra.mxu0 %v2280
    %2704 = vmatprep.mubr.bf16.mxu0 %v1091
    %2705 = vmatmul.mubr.bf16.gmra.mrb[0].mxu0 %v1090
    %v2706 = vpop.f32.mrb[0].mxu0
    %v2707 = vadd.f32 %v1355, %v2706
    %v2708 = vpop.f32.mrb[0].mxu0
    %v2709 = vadd.f32 %v1359, %v2708
    %v2710 = vpop.f32.mrb[0].mxu0
    %v2711 = vpop.f32.mrb[0].mxu0
    %2712 = vdwg.mxu0
    %2713 = vmatprep.subr.bf16.mxu0 %v2289
    %2714 = vmatpush1.bf16.msra.mxu0 %v2288
    %2715 = vmatprep.subr.bf16.mxu0 %v2297
    %2716 = vmatpush1.bf16.msra.mxu0 %v2296
    %2717 = vmatprep.subr.bf16.mxu0 %v2305
    %2718 = vmatpush1.bf16.msra.mxu0 %v2304
    %2719 = vmatprep.subr.bf16.mxu0 %v2313
    %2720 = vmatpush1.bf16.msra.mxu0 %v2312
    %2721 = vmatprep.subr.bf16.mxu0 %v2321
    %2722 = vmatpush1.bf16.msra.mxu0 %v2320
    %2723 = vmatprep.subr.bf16.mxu0 %v2329
    %2724 = vmatpush1.bf16.msra.mxu0 %v2328
    %2725 = vmatprep.subr.bf16.mxu0 %v2337
    %2726 = vmatpush1.bf16.msra.mxu0 %v2336
    %2727 = vmatprep.subr.bf16.mxu0 %v2345
    %2728 = vmatpush1.bf16.msra.mxu0 %v2344
    %2729 = vmatprep.subr.bf16.mxu0 %v2353
    %2730 = vmatpush1.bf16.msra.mxu0 %v2352
    %2731 = vmatprep.subr.bf16.mxu0 %v2361
    %2732 = vmatpush1.bf16.msra.mxu0 %v2360
    %2733 = vmatprep.subr.bf16.mxu0 %v2369
    %2734 = vmatpush1.bf16.msra.mxu0 %v2368
    %2735 = vmatprep.subr.bf16.mxu0 %v2377
    %2736 = vmatpush1.bf16.msra.mxu0 %v2376
    %2737 = vmatprep.subr.bf16.mxu0 %v2385
    %2738 = vmatpush1.bf16.msra.mxu0 %v2384
    %2739 = vmatprep.subr.bf16.mxu0 %v2393
    %2740 = vmatpush1.bf16.msra.mxu0 %v2392
    %2741 = vmatprep.subr.bf16.mxu0 %v2401
    %2742 = vmatpush1.bf16.msra.mxu0 %v2400
    %2743 = vmatprep.subr.bf16.mxu0 %v2409
    %2744 = vmatpush1.bf16.msra.mxu0 %v2408
    %2745 = vmatprep.mubr.bf16.mxu0 %v1093
    %2746 = vmatmul.mubr.bf16.gmra.mrb[0].mxu0 %v1092
    %v2747 = vpop.f32.mrb[0].mxu0
    %v2748 = vadd.f32 %v2707, %v2747
    %v2749 = vpop.f32.mrb[0].mxu0
    %v2750 = vadd.f32 %v2709, %v2749
    %v2751 = vpop.f32.mrb[0].mxu0
    %v2752 = vpop.f32.mrb[0].mxu0
    %2753 = vdwg.mxu0
    %2754 = vmatprep.subr.bf16.mxu0 %v2163
    %2755 = vmatpush1.bf16.msra.mxu0 %v2162
    %2756 = vmatprep.subr.bf16.mxu0 %v2171
    %2757 = vmatpush1.bf16.msra.mxu0 %v2170
    %2758 = vmatprep.subr.bf16.mxu0 %v2179
    %2759 = vmatpush1.bf16.msra.mxu0 %v2178
    %2760 = vmatprep.subr.bf16.mxu0 %v2187
    %2761 = vmatpush1.bf16.msra.mxu0 %v2186
    %2762 = vmatprep.subr.bf16.mxu0 %v2195
    %2763 = vmatpush1.bf16.msra.mxu0 %v2194
    %2764 = vmatprep.subr.bf16.mxu0 %v2203
    %2765 = vmatpush1.bf16.msra.mxu0 %v2202
    %2766 = vmatprep.subr.bf16.mxu0 %v2211
    %2767 = vmatpush1.bf16.msra.mxu0 %v2210
    %2768 = vmatprep.subr.bf16.mxu0 %v2219
    %2769 = vmatpush1.bf16.msra.mxu0 %v2218
    %2770 = vmatprep.subr.bf16.mxu0 %v2227
    %2771 = vmatpush1.bf16.msra.mxu0 %v2226
    %2772 = vmatprep.subr.bf16.mxu0 %v2235
    %2773 = vmatpush1.bf16.msra.mxu0 %v2234
    %2774 = vmatprep.subr.bf16.mxu0 %v2243
    %2775 = vmatpush1.bf16.msra.mxu0 %v2242
    %2776 = vmatprep.subr.bf16.mxu0 %v2251
    %2777 = vmatpush1.bf16.msra.mxu0 %v2250
    %2778 = vmatprep.subr.bf16.mxu0 %v2259
    %2779 = vmatpush1.bf16.msra.mxu0 %v2258
    %2780 = vmatprep.subr.bf16.mxu0 %v2267
    %2781 = vmatpush1.bf16.msra.mxu0 %v2266
    %2782 = vmatprep.subr.bf16.mxu0 %v2275
    %2783 = vmatpush1.bf16.msra.mxu0 %v2274
    %2784 = vmatprep.subr.bf16.mxu0 %v2283
    %2785 = vmatpush1.bf16.msra.mxu0 %v2282
    %2786 = vmatprep.mubr.bf16.mxu0 %v1091
    %2787 = vmatmul.mubr.bf16.gmra.mrb[0].mxu0 %v1090
    %v2788 = vpop.f32.mrb[0].mxu0
    %v2789 = vadd.f32 %v1363, %v2788
    %v2790 = vpop.f32.mrb[0].mxu0
    %v2791 = vadd.f32 %v1367, %v2790
    %v2792 = vpop.f32.mrb[0].mxu0
    %v2793 = vpop.f32.mrb[0].mxu0
    %2794 = vdwg.mxu0
    %2795 = vmatprep.subr.bf16.mxu0 %v2291
    %2796 = vmatpush1.bf16.msra.mxu0 %v2290
    %2797 = vmatprep.subr.bf16.mxu0 %v2299
    %2798 = vmatpush1.bf16.msra.mxu0 %v2298
    %2799 = vmatprep.subr.bf16.mxu0 %v2307
    %2800 = vmatpush1.bf16.msra.mxu0 %v2306
    %2801 = vmatprep.subr.bf16.mxu0 %v2315
    %2802 = vmatpush1.bf16.msra.mxu0 %v2314
    %2803 = vmatprep.subr.bf16.mxu0 %v2323
    %2804 = vmatpush1.bf16.msra.mxu0 %v2322
    %2805 = vmatprep.subr.bf16.mxu0 %v2331
    %2806 = vmatpush1.bf16.msra.mxu0 %v2330
    %2807 = vmatprep.subr.bf16.mxu0 %v2339
    %2808 = vmatpush1.bf16.msra.mxu0 %v2338
    %2809 = vmatprep.subr.bf16.mxu0 %v2347
    %2810 = vmatpush1.bf16.msra.mxu0 %v2346
    %2811 = vmatprep.subr.bf16.mxu0 %v2355
    %2812 = vmatpush1.bf16.msra.mxu0 %v2354
    %2813 = vmatprep.subr.bf16.mxu0 %v2363
    %2814 = vmatpush1.bf16.msra.mxu0 %v2362
    %2815 = vmatprep.subr.bf16.mxu0 %v2371
    %2816 = vmatpush1.bf16.msra.mxu0 %v2370
    %2817 = vmatprep.subr.bf16.mxu0 %v2379
    %2818 = vmatpush1.bf16.msra.mxu0 %v2378
    %2819 = vmatprep.subr.bf16.mxu0 %v2387
    %2820 = vmatpush1.bf16.msra.mxu0 %v2386
    %2821 = vmatprep.subr.bf16.mxu0 %v2395
    %2822 = vmatpush1.bf16.msra.mxu0 %v2394
    %2823 = vmatprep.subr.bf16.mxu0 %v2403
    %2824 = vmatpush1.bf16.msra.mxu0 %v2402
    %2825 = vmatprep.subr.bf16.mxu0 %v2411
    %2826 = vmatpush1.bf16.msra.mxu0 %v2410
    %2827 = vmatprep.mubr.bf16.mxu0 %v1093
    %2828 = vmatmul.mubr.bf16.gmra.mrb[0].mxu0 %v1092
    %v2829 = vpop.f32.mrb[0].mxu0
    %v2830 = vadd.f32 %v2789, %v2829
    %v2831 = vpop.f32.mrb[0].mxu0
    %v2832 = vadd.f32 %v2791, %v2831
    %v2833 = vpop.f32.mrb[0].mxu0
    %v2834 = vpop.f32.mrb[0].mxu0
    %2835 = vdwg.mxu0
    %2836 = vmatprep.subr.bf16.mxu0 %v2165
    %2837 = vmatpush1.bf16.msra.mxu0 %v2164
    %2838 = vmatprep.subr.bf16.mxu0 %v2173
    %2839 = vmatpush1.bf16.msra.mxu0 %v2172
    %2840 = vmatprep.subr.bf16.mxu0 %v2181
    %2841 = vmatpush1.bf16.msra.mxu0 %v2180
    %2842 = vmatprep.subr.bf16.mxu0 %v2189
    %2843 = vmatpush1.bf16.msra.mxu0 %v2188
    %2844 = vmatprep.subr.bf16.mxu0 %v2197
    %2845 = vmatpush1.bf16.msra.mxu0 %v2196
    %2846 = vmatprep.subr.bf16.mxu0 %v2205
    %2847 = vmatpush1.bf16.msra.mxu0 %v2204
    %2848 = vmatprep.subr.bf16.mxu0 %v2213
    %2849 = vmatpush1.bf16.msra.mxu0 %v2212
    %2850 = vmatprep.subr.bf16.mxu0 %v2221
    %2851 = vmatpush1.bf16.msra.mxu0 %v2220
    %2852 = vmatprep.subr.bf16.mxu0 %v2229
    %2853 = vmatpush1.bf16.msra.mxu0 %v2228
    %2854 = vmatprep.subr.bf16.mxu0 %v2237
    %2855 = vmatpush1.bf16.msra.mxu0 %v2236
    %2856 = vmatprep.subr.bf16.mxu0 %v2245
    %2857 = vmatpush1.bf16.msra.mxu0 %v2244
    %2858 = vmatprep.subr.bf16.mxu0 %v2253
    %2859 = vmatpush1.bf16.msra.mxu0 %v2252
    %2860 = vmatprep.subr.bf16.mxu0 %v2261
    %2861 = vmatpush1.bf16.msra.mxu0 %v2260
    %2862 = vmatprep.subr.bf16.mxu0 %v2269
    %2863 = vmatpush1.bf16.msra.mxu0 %v2268
    %2864 = vmatprep.subr.bf16.mxu0 %v2277
    %2865 = vmatpush1.bf16.msra.mxu0 %v2276
    %2866 = vmatprep.subr.bf16.mxu0 %v2285
    %2867 = vmatpush1.bf16.msra.mxu0 %v2284
    %2868 = vmatprep.mubr.bf16.mxu0 %v1091
    %2869 = vmatmul.mubr.bf16.gmra.mrb[0].mxu0 %v1090
    %v2870 = vpop.f32.mrb[0].mxu0
    %v2871 = vadd.f32 %v1371, %v2870
    %v2872 = vpop.f32.mrb[0].mxu0
    %v2873 = vadd.f32 %v1375, %v2872
    %v2874 = vpop.f32.mrb[0].mxu0
    %v2875 = vpop.f32.mrb[0].mxu0
    %2876 = vdwg.mxu0
    %2877 = vmatprep.subr.bf16.mxu0 %v2293
    %2878 = vmatpush1.bf16.msra.mxu0 %v2292
    %2879 = vmatprep.subr.bf16.mxu0 %v2301
    %2880 = vmatpush1.bf16.msra.mxu0 %v2300
    %2881 = vmatprep.subr.bf16.mxu0 %v2309
    %2882 = vmatpush1.bf16.msra.mxu0 %v2308
    %2883 = vmatprep.subr.bf16.mxu0 %v2317
    %2884 = vmatpush1.bf16.msra.mxu0 %v2316
    %2885 = vmatprep.subr.bf16.mxu0 %v2325
    %2886 = vmatpush1.bf16.msra.mxu0 %v2324
    %2887 = vmatprep.subr.bf16.mxu0 %v2333
    %2888 = vmatpush1.bf16.msra.mxu0 %v2332
    %2889 = vmatprep.subr.bf16.mxu0 %v2341
    %2890 = vmatpush1.bf16.msra.mxu0 %v2340
    %2891 = vmatprep.subr.bf16.mxu0 %v2349
    %2892 = vmatpush1.bf16.msra.mxu0 %v2348
    %2893 = vmatprep.subr.bf16.mxu0 %v2357
    %2894 = vmatpush1.bf16.msra.mxu0 %v2356
    %2895 = vmatprep.subr.bf16.mxu0 %v2365
    %2896 = vmatpush1.bf16.msra.mxu0 %v2364
    %2897 = vmatprep.subr.bf16.mxu0 %v2373
    %2898 = vmatpush1.bf16.msra.mxu0 %v2372
    %2899 = vmatprep.subr.bf16.mxu0 %v2381
    %2900 = vmatpush1.bf16.msra.mxu0 %v2380
    %2901 = vmatprep.subr.bf16.mxu0 %v2389
    %2902 = vmatpush1.bf16.msra.mxu0 %v2388
    %2903 = vmatprep.subr.bf16.mxu0 %v2397
    %2904 = vmatpush1.bf16.msra.mxu0 %v2396
    %2905 = vmatprep.subr.bf16.mxu0 %v2405
    %2906 = vmatpush1.bf16.msra.mxu0 %v2404
    %2907 = vmatprep.subr.bf16.mxu0 %v2413
    %2908 = vmatpush1.bf16.msra.mxu0 %v2412
    %2909 = vmatprep.mubr.bf16.mxu0 %v1093
    %2910 = vmatmul.mubr.bf16.gmra.mrb[0].mxu0 %v1092
    %v2911 = vpop.f32.mrb[0].mxu0
    %v2912 = vadd.f32 %v2871, %v2911
    %v2913 = vpop.f32.mrb[0].mxu0
    %v2914 = vadd.f32 %v2873, %v2913
    %v2915 = vpop.f32.mrb[0].mxu0
    %v2916 = vpop.f32.mrb[0].mxu0
    %2917 = vdwg.mxu0
    %2918 = vmatprep.subr.bf16.mxu0 %v2167
    %2919 = vmatpush1.bf16.msra.mxu0 %v2166
    %2920 = vmatprep.subr.bf16.mxu0 %v2175
    %2921 = vmatpush1.bf16.msra.mxu0 %v2174
    %2922 = vmatprep.subr.bf16.mxu0 %v2183
    %2923 = vmatpush1.bf16.msra.mxu0 %v2182
    %2924 = vmatprep.subr.bf16.mxu0 %v2191
    %2925 = vmatpush1.bf16.msra.mxu0 %v2190
    %2926 = vmatprep.subr.bf16.mxu0 %v2199
    %2927 = vmatpush1.bf16.msra.mxu0 %v2198
    %2928 = vmatprep.subr.bf16.mxu0 %v2207
    %2929 = vmatpush1.bf16.msra.mxu0 %v2206
    %2930 = vmatprep.subr.bf16.mxu0 %v2215
    %2931 = vmatpush1.bf16.msra.mxu0 %v2214
    %2932 = vmatprep.subr.bf16.mxu0 %v2223
    %2933 = vmatpush1.bf16.msra.mxu0 %v2222
    %2934 = vmatprep.subr.bf16.mxu0 %v2231
    %2935 = vmatpush1.bf16.msra.mxu0 %v2230
    %2936 = vmatprep.subr.bf16.mxu0 %v2239
    %2937 = vmatpush1.bf16.msra.mxu0 %v2238
    %2938 = vmatprep.subr.bf16.mxu0 %v2247
    %2939 = vmatpush1.bf16.msra.mxu0 %v2246
    %2940 = vmatprep.subr.bf16.mxu0 %v2255
    %2941 = vmatpush1.bf16.msra.mxu0 %v2254
    %2942 = vmatprep.subr.bf16.mxu0 %v2263
    %2943 = vmatpush1.bf16.msra.mxu0 %v2262
    %2944 = vmatprep.subr.bf16.mxu0 %v2271
    %2945 = vmatpush1.bf16.msra.mxu0 %v2270
    %2946 = vmatprep.subr.bf16.mxu0 %v2279
    %2947 = vmatpush1.bf16.msra.mxu0 %v2278
    %2948 = vmatprep.subr.bf16.mxu0 %v2287
    %2949 = vmatpush1.bf16.msra.mxu0 %v2286
    %2950 = vmatprep.mubr.bf16.mxu0 %v1091
    %2951 = vmatmul.mubr.bf16.gmra.mrb[0].mxu0 %v1090
    %v2952 = vpop.f32.mrb[0].mxu0
    %v2953 = vadd.f32 %v1379, %v2952
    %v2954 = vpop.f32.mrb[0].mxu0
    %v2955 = vadd.f32 %v1383, %v2954
    %v2956 = vpop.f32.mrb[0].mxu0
    %v2957 = vpop.f32.mrb[0].mxu0
    %2958 = vdwg.mxu0
    %2959 = vmatprep.subr.bf16.mxu0 %v2295
    %2960 = vmatpush1.bf16.msra.mxu0 %v2294
    %2961 = vmatprep.subr.bf16.mxu0 %v2303
    %2962 = vmatpush1.bf16.msra.mxu0 %v2302
    %2963 = vmatprep.subr.bf16.mxu0 %v2311
    %2964 = vmatpush1.bf16.msra.mxu0 %v2310
    %2965 = vmatprep.subr.bf16.mxu0 %v2319
    %2966 = vmatpush1.bf16.msra.mxu0 %v2318
    %2967 = vmatprep.subr.bf16.mxu0 %v2327
    %2968 = vmatpush1.bf16.msra.mxu0 %v2326
    %2969 = vmatprep.subr.bf16.mxu0 %v2335
    %2970 = vmatpush1.bf16.msra.mxu0 %v2334
    %2971 = vmatprep.subr.bf16.mxu0 %v2343
    %2972 = vmatpush1.bf16.msra.mxu0 %v2342
    %2973 = vmatprep.subr.bf16.mxu0 %v2351
    %2974 = vmatpush1.bf16.msra.mxu0 %v2350
    %2975 = vmatprep.subr.bf16.mxu0 %v2359
    %2976 = vmatpush1.bf16.msra.mxu0 %v2358
    %2977 = vmatprep.subr.bf16.mxu0 %v2367
    %2978 = vmatpush1.bf16.msra.mxu0 %v2366
    %2979 = vmatprep.subr.bf16.mxu0 %v2375
    %2980 = vmatpush1.bf16.msra.mxu0 %v2374
    %2981 = vmatprep.subr.bf16.mxu0 %v2383
    %2982 = vmatpush1.bf16.msra.mxu0 %v2382
    %2983 = vmatprep.subr.bf16.mxu0 %v2391
    %2984 = vmatpush1.bf16.msra.mxu0 %v2390
    %2985 = vmatprep.subr.bf16.mxu0 %v2399
    %2986 = vmatpush1.bf16.msra.mxu0 %v2398
    %2987 = vmatprep.subr.bf16.mxu0 %v2407
    %2988 = vmatpush1.bf16.msra.mxu0 %v2406
    %2989 = vmatprep.subr.bf16.mxu0 %v2415
    %2990 = vmatpush1.bf16.msra.mxu0 %v2414
    %2991 = vmatprep.mubr.bf16.mxu0 %v1093
    %2992 = vmatmul.mubr.bf16.gmra.mrb[0].mxu0 %v1092
    %v2993 = vpop.f32.mrb[0].mxu0
    %v2994 = vadd.f32 %v2953, %v2993
    %v2995 = vpop.f32.mrb[0].mxu0
    %v2996 = vadd.f32 %v2955, %v2995
    %v2997 = vpop.f32.mrb[0].mxu0
    %v2998 = vpop.f32.mrb[0].mxu0
    %2999 = vdwg.mxu0
    %v3000 = vrot.slane %v2748, 4
    %v3001 = vadd.f32 %v2748, %v3000
    %v3002 = vrot.slane %v3001, 2
    %v3003 = vadd.f32 %v3001, %v3002
    %v3004 = vrot.slane %v3003, 1
    %v3005 = vadd.f32 %v3003, %v3004
    %v3006 = vrot.slane %v2750, 4
    %v3007 = vadd.f32 %v2750, %v3006
    %v3008 = vrot.slane %v3007, 2
    %v3009 = vadd.f32 %v3007, %v3008
    %v3010 = vrot.slane %v3009, 1
    %v3011 = vadd.f32 %v3009, %v3010
    %v3012 = vrot.slane %v2830, 4
    %v3013 = vadd.f32 %v2830, %v3012
    %v3014 = vrot.slane %v3013, 2
    %v3015 = vadd.f32 %v3013, %v3014
    %v3016 = vrot.slane %v3015, 1
    %v3017 = vadd.f32 %v3015, %v3016
    %v3018 = vrot.slane %v2832, 4
    %v3019 = vadd.f32 %v2832, %v3018
    %v3020 = vrot.slane %v3019, 2
    %v3021 = vadd.f32 %v3019, %v3020
    %v3022 = vrot.slane %v3021, 1
    %v3023 = vadd.f32 %v3021, %v3022
    %v3024 = vrot.slane %v2912, 4
    %v3025 = vadd.f32 %v2912, %v3024
    %v3026 = vrot.slane %v3025, 2
    %v3027 = vadd.f32 %v3025, %v3026
    %v3028 = vrot.slane %v3027, 1
    %v3029 = vadd.f32 %v3027, %v3028
    %v3030 = vrot.slane %v2914, 4
    %v3031 = vadd.f32 %v2914, %v3030
    %v3032 = vrot.slane %v3031, 2
    %v3033 = vadd.f32 %v3031, %v3032
    %v3034 = vrot.slane %v3033, 1
    %v3035 = vadd.f32 %v3033, %v3034
    %v3036 = vrot.slane %v2994, 4
    %v3037 = vadd.f32 %v2994, %v3036
    %v3038 = vrot.slane %v3037, 2
    %v3039 = vadd.f32 %v3037, %v3038
    %v3040 = vrot.slane %v3039, 1
    %v3041 = vadd.f32 %v3039, %v3040
    %v3042 = vrot.slane %v2996, 4
    %v3043 = vadd.f32 %v2996, %v3042
    %v3044 = vrot.slane %v3043, 2
    %v3045 = vadd.f32 %v3043, %v3044
    %v3046 = vrot.slane %v3045, 1
    %v3047 = vadd.f32 %v3045, %v3046
    %v3048 = vmul.f32 %v3005, %v405
    %v3049 = vmul.f32 %v3011, %v405
    %v3050 = vmul.f32 %v3017, %v405
    %v3051 = vmul.f32 %v3023, %v405
    %v3052 = vmul.f32 %v3029, %v405
    %v3053 = vmul.f32 %v3035, %v405
    %v3054 = vmul.f32 %v3041, %v405
    %v3055 = vmul.f32 %v3047, %v405
    %v3056 = vsub.f32 %v2748, %v3048
    %v3057 = vsub.f32 %v2750, %v3049
    %v3058 = vsub.f32 %v2830, %v3050
    %v3059 = vsub.f32 %v2832, %v3051
    %v3060 = vsub.f32 %v2912, %v3052
    %v3061 = vsub.f32 %v2914, %v3053
    %v3062 = vsub.f32 %v2994, %v3054
    %v3063 = vsub.f32 %v2996, %v3055
    %v3064 = vmul.f32 %v3056, %v3056
    %v3065 = vmul.f32 %v3057, %v3057
    %v3066 = vmul.f32 %v3058, %v3058
    %v3067 = vmul.f32 %v3059, %v3059
    %v3068 = vmul.f32 %v3060, %v3060
    %v3069 = vmul.f32 %v3061, %v3061
    %v3070 = vmul.f32 %v3062, %v3062
    %v3071 = vmul.f32 %v3063, %v3063
    %v3072 = vrot.slane %v3064, 4
    %v3073 = vadd.f32 %v3064, %v3072
    %v3074 = vrot.slane %v3073, 2
    %v3075 = vadd.f32 %v3073, %v3074
    %v3076 = vrot.slane %v3075, 1
    %v3077 = vadd.f32 %v3075, %v3076
    %v3078 = vrot.slane %v3065, 4
    %v3079 = vadd.f32 %v3065, %v3078
    %v3080 = vrot.slane %v3079, 2
    %v3081 = vadd.f32 %v3079, %v3080
    %v3082 = vrot.slane %v3081, 1
    %v3083 = vadd.f32 %v3081, %v3082
    %v3084 = vrot.slane %v3066, 4
    %v3085 = vadd.f32 %v3066, %v3084
    %v3086 = vrot.slane %v3085, 2
    %v3087 = vadd.f32 %v3085, %v3086
    %v3088 = vrot.slane %v3087, 1
    %v3089 = vadd.f32 %v3087, %v3088
    %v3090 = vrot.slane %v3067, 4
    %v3091 = vadd.f32 %v3067, %v3090
    %v3092 = vrot.slane %v3091, 2
    %v3093 = vadd.f32 %v3091, %v3092
    %v3094 = vrot.slane %v3093, 1
    %v3095 = vadd.f32 %v3093, %v3094
    %v3096 = vrot.slane %v3068, 4
    %v3097 = vadd.f32 %v3068, %v3096
    %v3098 = vrot.slane %v3097, 2
    %v3099 = vadd.f32 %v3097, %v3098
    %v3100 = vrot.slane %v3099, 1
    %v3101 = vadd.f32 %v3099, %v3100
    %v3102 = vrot.slane %v3069, 4
    %v3103 = vadd.f32 %v3069, %v3102
    %v3104 = vrot.slane %v3103, 2
    %v3105 = vadd.f32 %v3103, %v3104
    %v3106 = vrot.slane %v3105, 1
    %v3107 = vadd.f32 %v3105, %v3106
    %v3108 = vrot.slane %v3070, 4
    %v3109 = vadd.f32 %v3070, %v3108
    %v3110 = vrot.slane %v3109, 2
    %v3111 = vadd.f32 %v3109, %v3110
    %v3112 = vrot.slane %v3111, 1
    %v3113 = vadd.f32 %v3111, %v3112
    %v3114 = vrot.slane %v3071, 4
    %v3115 = vadd.f32 %v3071, %v3114
    %v3116 = vrot.slane %v3115, 2
    %v3117 = vadd.f32 %v3115, %v3116
    %v3118 = vrot.slane %v3117, 1
    %v3119 = vadd.f32 %v3117, %v3118
    %v3120 = vmul.f32 %v3077, %v405
    %v3121 = vmul.f32 %v3083, %v405
    %v3122 = vmul.f32 %v3089, %v405
    %v3123 = vmul.f32 %v3095, %v405
    %v3124 = vmul.f32 %v3101, %v405
    %v3125 = vmul.f32 %v3107, %v405
    %v3126 = vmul.f32 %v3113, %v405
    %v3127 = vmul.f32 %v3119, %v405
    %v3128 = vadd.f32 %v3120, 0.8
    %v3129 = vadd.f32 %v3121, 0.8
    %v3130 = vadd.f32 %v3122, 0.8
    %v3131 = vadd.f32 %v3123, 0.8
    %v3132 = vadd.f32 %v3124, 0.8
    %v3133 = vadd.f32 %v3125, 0.8
    %v3134 = vadd.f32 %v3126, 0.8
    %v3135 = vadd.f32 %v3127, 0.8
    %v3136 = vrsqrt.pop %v3128
    %v3137 = vrsqrt.pop %v3129
    %v3138 = vrsqrt.pop %v3130
    %v3139 = vrsqrt.pop %v3131
    %v3140 = vrsqrt.pop %v3132
    %v3141 = vrsqrt.pop %v3133
    %v3142 = vrsqrt.pop %v3134
    %v3143 = vrsqrt.pop %v3135
    %v3144 = vmul.f32 %v3056, %v3136
    %v3145 = vmul.f32 %v3057, %v3137
    %v3146 = vmul.f32 %v3058, %v3138
    %v3147 = vmul.f32 %v3059, %v3139
    %v3148 = vmul.f32 %v3060, %v3140
    %v3149 = vmul.f32 %v3061, %v3141
    %v3150 = vmul.f32 %v3062, %v3142
    %v3151 = vmul.f32 %v3063, %v3143
    %v3152 = vld [vmem:[%s13] sm:$0xff]
    %v3154 = vlaneseq
    %v3155 = vshrl.u32 %v3154, 7
    %v3156 = vsub.s32 0, %v3155
    %v3157 = vrot.slane %v3152, %v3156
    %v3158 = vlaneseq
    %v3159 = vshrl.u32 %v3158, 7
    %v3160 = vsub.s32 1, %v3159
    %v3161 = vrot.slane %v3152, %v3160
    %v3162 = vlaneseq
    %v3163 = vshrl.u32 %v3162, 7
    %v3164 = vsub.s32 2, %v3163
    %v3165 = vrot.slane %v3152, %v3164
    %v3166 = vlaneseq
    %v3167 = vshrl.u32 %v3166, 7
    %v3168 = vsub.s32 3, %v3167
    %v3169 = vrot.slane %v3152, %v3168
    %v3170 = vlaneseq
    %v3171 = vshrl.u32 %v3170, 7
    %v3172 = vsub.s32 4, %v3171
    %v3173 = vrot.slane %v3152, %v3172
    %v3174 = vlaneseq
    %v3175 = vshrl.u32 %v3174, 7
    %v3176 = vsub.s32 5, %v3175
    %v3177 = vrot.slane %v3152, %v3176
    %v3178 = vlaneseq
    %v3179 = vshrl.u32 %v3178, 7
    %v3180 = vsub.s32 6, %v3179
    %v3181 = vrot.slane %v3152, %v3180
    %v3182 = vlaneseq
    %v3183 = vshrl.u32 %v3182, 7
    %v3184 = vsub.s32 7, %v3183
    %v3185 = vrot.slane %v3152, %v3184
    %v3194 = vmul.f32 %v3144, %v3157
    %v3195 = vmul.f32 %v3145, %v3161
    %v3196 = vmul.f32 %v3146, %v3165
    %v3197 = vmul.f32 %v3147, %v3169
    %v3198 = vmul.f32 %v3148, %v3173
    %v3199 = vmul.f32 %v3149, %v3177
    %v3200 = vmul.f32 %v3150, %v3181
    %v3201 = vmul.f32 %v3151, %v3185
    %v3202 = vld [vmem:[%s14] sm:$0xff]
    %v3204 = vlaneseq
    %v3205 = vshrl.u32 %v3204, 7
    %v3206 = vsub.s32 0, %v3205
    %v3207 = vrot.slane %v3202, %v3206
    %v3208 = vlaneseq
    %v3209 = vshrl.u32 %v3208, 7
    %v3210 = vsub.s32 1, %v3209
    %v3211 = vrot.slane %v3202, %v3210
    %v3212 = vlaneseq
    %v3213 = vshrl.u32 %v3212, 7
    %v3214 = vsub.s32 2, %v3213
    %v3215 = vrot.slane %v3202, %v3214
    %v3216 = vlaneseq
    %v3217 = vshrl.u32 %v3216, 7
    %v3218 = vsub.s32 3, %v3217
    %v3219 = vrot.slane %v3202, %v3218
    %v3220 = vlaneseq
    %v3221 = vshrl.u32 %v3220, 7
    %v3222 = vsub.s32 4, %v3221
    %v3223 = vrot.slane %v3202, %v3222
    %v3224 = vlaneseq
    %v3225 = vshrl.u32 %v3224, 7
    %v3226 = vsub.s32 5, %v3225
    %v3227 = vrot.slane %v3202, %v3226
    %v3228 = vlaneseq
    %v3229 = vshrl.u32 %v3228, 7
    %v3230 = vsub.s32 6, %v3229
    %v3231 = vrot.slane %v3202, %v3230
    %v3232 = vlaneseq
    %v3233 = vshrl.u32 %v3232, 7
    %v3234 = vsub.s32 7, %v3233
    %v3235 = vrot.slane %v3202, %v3234
    %v3244 = vadd.f32 %v3194, %v3207
    %v3245 = vadd.f32 %v3195, %v3211
    %v3246 = vadd.f32 %v3196, %v3215
    %v3247 = vadd.f32 %v3197, %v3219
    %v3248 = vadd.f32 %v3198, %v3223
    %v3249 = vadd.f32 %v3199, %v3227
    %v3250 = vadd.f32 %v3200, %v3231
    %v3251 = vadd.f32 %v3201, %v3235
    %v3252 = vmul.f32 %v3244, 0.2
    %v3253 = vmul.f32 %v3245, 0.2
    %v3254 = vmul.f32 %v3246, 0.2
    %v3255 = vmul.f32 %v3247, 0.2
    %v3256 = vmul.f32 %v3248, 0.2
    %v3257 = vmul.f32 %v3249, 0.2
    %v3258 = vmul.f32 %v3250, 0.2
    %v3259 = vmul.f32 %v3251, 0.2
    %v3260 = vmax.f32 %v3244, %v3252
    %v3261 = vmax.f32 %v3245, %v3253
    %v3262 = vmax.f32 %v3246, %v3254
    %v3263 = vmax.f32 %v3247, %v3255
    %v3264 = vmax.f32 %v3248, %v3256
    %v3265 = vmax.f32 %v3249, %v3257
    %v3266 = vmax.f32 %v3250, %v3258
    %v3267 = vmax.f32 %v3251, %v3259
    %v3268 = vpack.c.bf16 %v3260, %v3260
    %v3269 = vpack.c.bf16 %v3261, %v3261
    %v3270 = vpack.c.bf16 %v3262, %v3262
    %v3271 = vpack.c.bf16 %v3263, %v3263
    %v3272 = vpack.c.bf16 %v3264, %v3264
    %v3273 = vpack.c.bf16 %v3265, %v3265
    %v3274 = vpack.c.bf16 %v3266, %v3266
    %v3275 = vpack.c.bf16 %v3267, %v3267
    %v3276 = vld [vmem:[#allocation16] sm:$0xf]
    %v3277 = vld [vmem:[#allocation16 + $0x4] sm:$0xf]
    %v3278 = vld [vmem:[#allocation16 + $0x8] sm:$0xf]
    %v3279 = vld [vmem:[#allocation16 + $0xc] sm:$0xf]
    %v3280 = vld [vmem:[#allocation16 + $0x10] sm:$0xf]
    %v3281 = vld [vmem:[#allocation16 + $0x14] sm:$0xf]
    %v3282 = vld [vmem:[#allocation16 + $0x18] sm:$0xf]
    %v3283 = vld [vmem:[#allocation16 + $0x1c] sm:$0xf]
    %v3284 = vld [vmem:[#allocation16 + $0x20] sm:$0xf]
    %v3285 = vld [vmem:[#allocation16 + $0x24] sm:$0xf]
    %v3286 = vld [vmem:[#allocation16 + $0x28] sm:$0xf]
    %v3287 = vld [vmem:[#allocation16 + $0x2c] sm:$0xf]
    %v3288 = vld [vmem:[#allocation16 + $0x30] sm:$0xf]
    %v3289 = vld [vmem:[#allocation16 + $0x34] sm:$0xf]
    %v3290 = vld [vmem:[#allocation16 + $0x38] sm:$0xf]
    %v3291 = vld [vmem:[#allocation16 + $0x3c] sm:$0xf]
    %v3292 = vld [vmem:[#allocation16 + $0x40] sm:$0xf]
    %v3293 = vld [vmem:[#allocation16 + $0x44] sm:$0xf]
    %v3294 = vld [vmem:[#allocation16 + $0x48] sm:$0xf]
    %v3295 = vld [vmem:[#allocation16 + $0x4c] sm:$0xf]
    %v3296 = vld [vmem:[#allocation16 + $0x50] sm:$0xf]
    %v3297 = vld [vmem:[#allocation16 + $0x54] sm:$0xf]
    %v3298 = vld [vmem:[#allocation16 + $0x58] sm:$0xf]
    %v3299 = vld [vmem:[#allocation16 + $0x5c] sm:$0xf]
    %v3300 = vld [vmem:[#allocation16 + $0x60] sm:$0xf]
    %v3301 = vld [vmem:[#allocation16 + $0x64] sm:$0xf]
    %v3302 = vld [vmem:[#allocation16 + $0x68] sm:$0xf]
    %v3303 = vld [vmem:[#allocation16 + $0x6c] sm:$0xf]
    %v3304 = vld [vmem:[#allocation16 + $0x70] sm:$0xf]
    %v3305 = vld [vmem:[#allocation16 + $0x74] sm:$0xf]
    %v3306 = vld [vmem:[#allocation16 + $0x78] sm:$0xf]
    %v3307 = vld [vmem:[#allocation16 + $0x7c] sm:$0xf]
    %v3308 = vld [vmem:[#allocation16 + $0x80] sm:$0xf]
    %v3309 = vld [vmem:[#allocation16 + $0x84] sm:$0xf]
    %v3310 = vld [vmem:[#allocation16 + $0x88] sm:$0xf]
    %v3311 = vld [vmem:[#allocation16 + $0x8c] sm:$0xf]
    %v3312 = vld [vmem:[#allocation16 + $0x90] sm:$0xf]
    %v3313 = vld [vmem:[#allocation16 + $0x94] sm:$0xf]
    %v3314 = vld [vmem:[#allocation16 + $0x98] sm:$0xf]
    %v3315 = vld [vmem:[#allocation16 + $0x9c] sm:$0xf]
    %v3316 = vld [vmem:[#allocation16 + $0xa0] sm:$0xf]
    %v3317 = vld [vmem:[#allocation16 + $0xa4] sm:$0xf]
    %v3318 = vld [vmem:[#allocation16 + $0xa8] sm:$0xf]
    %v3319 = vld [vmem:[#allocation16 + $0xac] sm:$0xf]
    %v3320 = vld [vmem:[#allocation16 + $0xb0] sm:$0xf]
    %v3321 = vld [vmem:[#allocation16 + $0xb4] sm:$0xf]
    %v3322 = vld [vmem:[#allocation16 + $0xb8] sm:$0xf]
    %v3323 = vld [vmem:[#allocation16 + $0xbc] sm:$0xf]
    %v3324 = vld [vmem:[#allocation16 + $0xc0] sm:$0xf]
    %v3325 = vld [vmem:[#allocation16 + $0xc4] sm:$0xf]
    %v3326 = vld [vmem:[#allocation16 + $0xc8] sm:$0xf]
    %v3327 = vld [vmem:[#allocation16 + $0xcc] sm:$0xf]
    %v3328 = vld [vmem:[#allocation16 + $0xd0] sm:$0xf]
    %v3329 = vld [vmem:[#allocation16 + $0xd4] sm:$0xf]
    %v3330 = vld [vmem:[#allocation16 + $0xd8] sm:$0xf]
    %v3331 = vld [vmem:[#allocation16 + $0xdc] sm:$0xf]
    %v3332 = vld [vmem:[#allocation16 + $0xe0] sm:$0xf]
    %v3333 = vld [vmem:[#allocation16 + $0xe4] sm:$0xf]
    %v3334 = vld [vmem:[#allocation16 + $0xe8] sm:$0xf]
    %v3335 = vld [vmem:[#allocation16 + $0xec] sm:$0xf]
    %v3336 = vld [vmem:[#allocation16 + $0xf0] sm:$0xf]
    %v3337 = vld [vmem:[#allocation16 + $0xf4] sm:$0xf]
    %v3338 = vld [vmem:[#allocation16 + $0xf8] sm:$0xf]
    %v3339 = vld [vmem:[#allocation16 + $0xfc] sm:$0xf]
    %v3340 = vld [vmem:[#allocation16 + $0x100] sm:$0xf]
    %v3341 = vld [vmem:[#allocation16 + $0x104] sm:$0xf]
    %v3342 = vld [vmem:[#allocation16 + $0x108] sm:$0xf]
    %v3343 = vld [vmem:[#allocation16 + $0x10c] sm:$0xf]
    %v3344 = vld [vmem:[#allocation16 + $0x110] sm:$0xf]
    %v3345 = vld [vmem:[#allocation16 + $0x114] sm:$0xf]
    %v3346 = vld [vmem:[#allocation16 + $0x118] sm:$0xf]
    %v3347 = vld [vmem:[#allocation16 + $0x11c] sm:$0xf]
    %v3348 = vld [vmem:[#allocation16 + $0x120] sm:$0xf]
    %v3349 = vld [vmem:[#allocation16 + $0x124] sm:$0xf]
    %v3350 = vld [vmem:[#allocation16 + $0x128] sm:$0xf]
    %v3351 = vld [vmem:[#allocation16 + $0x12c] sm:$0xf]
    %v3352 = vld [vmem:[#allocation16 + $0x130] sm:$0xf]
    %v3353 = vld [vmem:[#allocation16 + $0x134] sm:$0xf]
    %v3354 = vld [vmem:[#allocation16 + $0x138] sm:$0xf]
    %v3355 = vld [vmem:[#allocation16 + $0x13c] sm:$0xf]
    %v3356 = vld [vmem:[#allocation16 + $0x140] sm:$0xf]
    %v3357 = vld [vmem:[#allocation16 + $0x144] sm:$0xf]
    %v3358 = vld [vmem:[#allocation16 + $0x148] sm:$0xf]
    %v3359 = vld [vmem:[#allocation16 + $0x14c] sm:$0xf]
    %v3360 = vld [vmem:[#allocation16 + $0x150] sm:$0xf]
    %v3361 = vld [vmem:[#allocation16 + $0x154] sm:$0xf]
    %v3362 = vld [vmem:[#allocation16 + $0x158] sm:$0xf]
    %v3363 = vld [vmem:[#allocation16 + $0x15c] sm:$0xf]
    %v3364 = vld [vmem:[#allocation16 + $0x160] sm:$0xf]
    %v3365 = vld [vmem:[#allocation16 + $0x164] sm:$0xf]
    %v3366 = vld [vmem:[#allocation16 + $0x168] sm:$0xf]
    %v3367 = vld [vmem:[#allocation16 + $0x16c] sm:$0xf]
    %v3368 = vld [vmem:[#allocation16 + $0x170] sm:$0xf]
    %v3369 = vld [vmem:[#allocation16 + $0x174] sm:$0xf]
    %v3370 = vld [vmem:[#allocation16 + $0x178] sm:$0xf]
    %v3371 = vld [vmem:[#allocation16 + $0x17c] sm:$0xf]
    %v3372 = vld [vmem:[#allocation16 + $0x180] sm:$0xf]
    %v3373 = vld [vmem:[#allocation16 + $0x184] sm:$0xf]
    %v3374 = vld [vmem:[#allocation16 + $0x188] sm:$0xf]
    %v3375 = vld [vmem:[#allocation16 + $0x18c] sm:$0xf]
    %v3376 = vld [vmem:[#allocation16 + $0x190] sm:$0xf]
    %v3377 = vld [vmem:[#allocation16 + $0x194] sm:$0xf]
    %v3378 = vld [vmem:[#allocation16 + $0x198] sm:$0xf]
    %v3379 = vld [vmem:[#allocation16 + $0x19c] sm:$0xf]
    %v3380 = vld [vmem:[#allocation16 + $0x1a0] sm:$0xf]
    %v3381 = vld [vmem:[#allocation16 + $0x1a4] sm:$0xf]
    %v3382 = vld [vmem:[#allocation16 + $0x1a8] sm:$0xf]
    %v3383 = vld [vmem:[#allocation16 + $0x1ac] sm:$0xf]
    %v3384 = vld [vmem:[#allocation16 + $0x1b0] sm:$0xf]
    %v3385 = vld [vmem:[#allocation16 + $0x1b4] sm:$0xf]
    %v3386 = vld [vmem:[#allocation16 + $0x1b8] sm:$0xf]
    %v3387 = vld [vmem:[#allocation16 + $0x1bc] sm:$0xf]
    %v3388 = vld [vmem:[#allocation16 + $0x1c0] sm:$0xf]
    %v3389 = vld [vmem:[#allocation16 + $0x1c4] sm:$0xf]
    %v3390 = vld [vmem:[#allocation16 + $0x1c8] sm:$0xf]
    %v3391 = vld [vmem:[#allocation16 + $0x1cc] sm:$0xf]
    %v3392 = vld [vmem:[#allocation16 + $0x1d0] sm:$0xf]
    %v3393 = vld [vmem:[#allocation16 + $0x1d4] sm:$0xf]
    %v3394 = vld [vmem:[#allocation16 + $0x1d8] sm:$0xf]
    %v3395 = vld [vmem:[#allocation16 + $0x1dc] sm:$0xf]
    %v3396 = vld [vmem:[#allocation16 + $0x1e0] sm:$0xf]
    %v3397 = vld [vmem:[#allocation16 + $0x1e4] sm:$0xf]
    %v3398 = vld [vmem:[#allocation16 + $0x1e8] sm:$0xf]
    %v3399 = vld [vmem:[#allocation16 + $0x1ec] sm:$0xf]
    %v3400 = vld [vmem:[#allocation16 + $0x1f0] sm:$0xf]
    %v3401 = vld [vmem:[#allocation16 + $0x1f4] sm:$0xf]
    %v3402 = vld [vmem:[#allocation16 + $0x1f8] sm:$0xf]
    %v3403 = vld [vmem:[#allocation16 + $0x1fc] sm:$0xf]
    %v3404 = vld [vmem:[%s16] sm:$0x1]
    %v3406 = vlaneseq
    %v3407 = vshrl.u32 %v3406, 7
    %v3408 = vsub.s32 0, %v3407
    %v3409 = vrot.slane %v3404, %v3408
    %v3539 = vunpack.c.l.b16 %v3276
    %v3540 = vunpack.c.l.b16 %v3277
    %v3541 = vunpack.c.l.b16 %v3278
    %v3542 = vunpack.c.l.b16 %v3279
    %v3543 = vunpack.c.l.b16 %v3280
    %v3544 = vunpack.c.l.b16 %v3281
    %v3545 = vunpack.c.l.b16 %v3282
    %v3546 = vunpack.c.l.b16 %v3283
    %v3547 = vunpack.c.l.b16 %v3284
    %v3548 = vunpack.c.l.b16 %v3285
    %v3549 = vunpack.c.l.b16 %v3286
    %v3550 = vunpack.c.l.b16 %v3287
    %v3551 = vunpack.c.l.b16 %v3288
    %v3552 = vunpack.c.l.b16 %v3289
    %v3553 = vunpack.c.l.b16 %v3290
    %v3554 = vunpack.c.l.b16 %v3291
    %v3555 = vunpack.c.l.b16 %v3292
    %v3556 = vunpack.c.l.b16 %v3293
    %v3557 = vunpack.c.l.b16 %v3294
    %v3558 = vunpack.c.l.b16 %v3295
    %v3559 = vunpack.c.l.b16 %v3296
    %v3560 = vunpack.c.l.b16 %v3297
    %v3561 = vunpack.c.l.b16 %v3298
    %v3562 = vunpack.c.l.b16 %v3299
    %v3563 = vunpack.c.l.b16 %v3300
    %v3564 = vunpack.c.l.b16 %v3301
    %v3565 = vunpack.c.l.b16 %v3302
    %v3566 = vunpack.c.l.b16 %v3303
    %v3567 = vunpack.c.l.b16 %v3304
    %v3568 = vunpack.c.l.b16 %v3305
    %v3569 = vunpack.c.l.b16 %v3306
    %v3570 = vunpack.c.l.b16 %v3307
    %v3571 = vunpack.c.l.b16 %v3308
    %v3572 = vunpack.c.l.b16 %v3309
    %v3573 = vunpack.c.l.b16 %v3310
    %v3574 = vunpack.c.l.b16 %v3311
    %v3575 = vunpack.c.l.b16 %v3312
    %v3576 = vunpack.c.l.b16 %v3313
    %v3577 = vunpack.c.l.b16 %v3314
    %v3578 = vunpack.c.l.b16 %v3315
    %v3579 = vunpack.c.l.b16 %v3316
    %v3580 = vunpack.c.l.b16 %v3317
    %v3581 = vunpack.c.l.b16 %v3318
    %v3582 = vunpack.c.l.b16 %v3319
    %v3583 = vunpack.c.l.b16 %v3320
    %v3584 = vunpack.c.l.b16 %v3321
    %v3585 = vunpack.c.l.b16 %v3322
    %v3586 = vunpack.c.l.b16 %v3323
    %v3587 = vunpack.c.l.b16 %v3324
    %v3588 = vunpack.c.l.b16 %v3325
    %v3589 = vunpack.c.l.b16 %v3326
    %v3590 = vunpack.c.l.b16 %v3327
    %v3591 = vunpack.c.l.b16 %v3328
    %v3592 = vunpack.c.l.b16 %v3329
    %v3593 = vunpack.c.l.b16 %v3330
    %v3594 = vunpack.c.l.b16 %v3331
    %v3595 = vunpack.c.l.b16 %v3332
    %v3596 = vunpack.c.l.b16 %v3333
    %v3597 = vunpack.c.l.b16 %v3334
    %v3598 = vunpack.c.l.b16 %v3335
    %v3599 = vunpack.c.l.b16 %v3336
    %v3600 = vunpack.c.l.b16 %v3337
    %v3601 = vunpack.c.l.b16 %v3338
    %v3602 = vunpack.c.l.b16 %v3339
    %v3603 = vunpack.c.l.b16 %v3340
    %v3604 = vunpack.c.l.b16 %v3341
    %v3605 = vunpack.c.l.b16 %v3342
    %v3606 = vunpack.c.l.b16 %v3343
    %v3607 = vunpack.c.l.b16 %v3344
    %v3608 = vunpack.c.l.b16 %v3345
    %v3609 = vunpack.c.l.b16 %v3346
    %v3610 = vunpack.c.l.b16 %v3347
    %v3611 = vunpack.c.l.b16 %v3348
    %v3612 = vunpack.c.l.b16 %v3349
    %v3613 = vunpack.c.l.b16 %v3350
    %v3614 = vunpack.c.l.b16 %v3351
    %v3615 = vunpack.c.l.b16 %v3352
    %v3616 = vunpack.c.l.b16 %v3353
    %v3617 = vunpack.c.l.b16 %v3354
    %v3618 = vunpack.c.l.b16 %v3355
    %v3619 = vunpack.c.l.b16 %v3356
    %v3620 = vunpack.c.l.b16 %v3357
    %v3621 = vunpack.c.l.b16 %v3358
    %v3622 = vunpack.c.l.b16 %v3359
    %v3623 = vunpack.c.l.b16 %v3360
    %v3624 = vunpack.c.l.b16 %v3361
    %v3625 = vunpack.c.l.b16 %v3362
    %v3626 = vunpack.c.l.b16 %v3363
    %v3627 = vunpack.c.l.b16 %v3364
    %v3628 = vunpack.c.l.b16 %v3365
    %v3629 = vunpack.c.l.b16 %v3366
    %v3630 = vunpack.c.l.b16 %v3367
    %v3631 = vunpack.c.l.b16 %v3368
    %v3632 = vunpack.c.l.b16 %v3369
    %v3633 = vunpack.c.l.b16 %v3370
    %v3634 = vunpack.c.l.b16 %v3371
    %v3635 = vunpack.c.l.b16 %v3372
    %v3636 = vunpack.c.l.b16 %v3373
    %v3637 = vunpack.c.l.b16 %v3374
    %v3638 = vunpack.c.l.b16 %v3375
    %v3639 = vunpack.c.l.b16 %v3376
    %v3640 = vunpack.c.l.b16 %v3377
    %v3641 = vunpack.c.l.b16 %v3378
    %v3642 = vunpack.c.l.b16 %v3379
    %v3643 = vunpack.c.l.b16 %v3380
    %v3644 = vunpack.c.l.b16 %v3381
    %v3645 = vunpack.c.l.b16 %v3382
    %v3646 = vunpack.c.l.b16 %v3383
    %v3647 = vunpack.c.l.b16 %v3384
    %v3648 = vunpack.c.l.b16 %v3385
    %v3649 = vunpack.c.l.b16 %v3386
    %v3650 = vunpack.c.l.b16 %v3387
    %v3651 = vunpack.c.l.b16 %v3388
    %v3652 = vunpack.c.l.b16 %v3389
    %v3653 = vunpack.c.l.b16 %v3390
    %v3654 = vunpack.c.l.b16 %v3391
    %v3655 = vunpack.c.l.b16 %v3392
    %v3656 = vunpack.c.l.b16 %v3393
    %v3657 = vunpack.c.l.b16 %v3394
    %v3658 = vunpack.c.l.b16 %v3395
    %v3659 = vunpack.c.l.b16 %v3396
    %v3660 = vunpack.c.l.b16 %v3397
    %v3661 = vunpack.c.l.b16 %v3398
    %v3662 = vunpack.c.l.b16 %v3399
    %v3663 = vunpack.c.l.b16 %v3400
    %v3664 = vunpack.c.l.b16 %v3401
    %v3665 = vunpack.c.l.b16 %v3402
    %v3666 = vunpack.c.l.b16 %v3403
    %v3667 = vpack.c.b16 %v3540, %v3539
    %v3668 = vpack.c.b16 %v3542, %v3541
    %v3669 = vpack.c.b16 %v3544, %v3543
    %v3670 = vpack.c.b16 %v3546, %v3545
    %v3671 = vpack.c.b16 %v3548, %v3547
    %v3672 = vpack.c.b16 %v3550, %v3549
    %v3673 = vpack.c.b16 %v3552, %v3551
    %v3674 = vpack.c.b16 %v3554, %v3553
    %v3675 = vpack.c.b16 %v3556, %v3555
    %v3676 = vpack.c.b16 %v3558, %v3557
    %v3677 = vpack.c.b16 %v3560, %v3559
    %v3678 = vpack.c.b16 %v3562, %v3561
    %v3679 = vpack.c.b16 %v3564, %v3563
    %v3680 = vpack.c.b16 %v3566, %v3565
    %v3681 = vpack.c.b16 %v3568, %v3567
    %v3682 = vpack.c.b16 %v3570, %v3569
    %v3683 = vpack.c.b16 %v3572, %v3571
    %v3684 = vpack.c.b16 %v3574, %v3573
    %v3685 = vpack.c.b16 %v3576, %v3575
    %v3686 = vpack.c.b16 %v3578, %v3577
    %v3687 = vpack.c.b16 %v3580, %v3579
    %v3688 = vpack.c.b16 %v3582, %v3581
    %v3689 = vpack.c.b16 %v3584, %v3583
    %v3690 = vpack.c.b16 %v3586, %v3585
    %v3691 = vpack.c.b16 %v3588, %v3587
    %v3692 = vpack.c.b16 %v3590, %v3589
    %v3693 = vpack.c.b16 %v3592, %v3591
    %v3694 = vpack.c.b16 %v3594, %v3593
    %v3695 = vpack.c.b16 %v3596, %v3595
    %v3696 = vpack.c.b16 %v3598, %v3597
    %v3697 = vpack.c.b16 %v3600, %v3599
    %v3698 = vpack.c.b16 %v3602, %v3601
    %v3699 = vpack.c.b16 %v3604, %v3603
    %v3700 = vpack.c.b16 %v3606, %v3605
    %v3701 = vpack.c.b16 %v3608, %v3607
    %v3702 = vpack.c.b16 %v3610, %v3609
    %v3703 = vpack.c.b16 %v3612, %v3611
    %v3704 = vpack.c.b16 %v3614, %v3613
    %v3705 = vpack.c.b16 %v3616, %v3615
    %v3706 = vpack.c.b16 %v3618, %v3617
    %v3707 = vpack.c.b16 %v3620, %v3619
    %v3708 = vpack.c.b16 %v3622, %v3621
    %v3709 = vpack.c.b16 %v3624, %v3623
    %v3710 = vpack.c.b16 %v3626, %v3625
    %v3711 = vpack.c.b16 %v3628, %v3627
    %v3712 = vpack.c.b16 %v3630, %v3629
    %v3713 = vpack.c.b16 %v3632, %v3631
    %v3714 = vpack.c.b16 %v3634, %v3633
    %v3715 = vpack.c.b16 %v3636, %v3635
    %v3716 = vpack.c.b16 %v3638, %v3637
    %v3717 = vpack.c.b16 %v3640, %v3639
    %v3718 = vpack.c.b16 %v3642, %v3641
    %v3719 = vpack.c.b16 %v3644, %v3643
    %v3720 = vpack.c.b16 %v3646, %v3645
    %v3721 = vpack.c.b16 %v3648, %v3647
    %v3722 = vpack.c.b16 %v3650, %v3649
    %v3723 = vpack.c.b16 %v3652, %v3651
    %v3724 = vpack.c.b16 %v3654, %v3653
    %v3725 = vpack.c.b16 %v3656, %v3655
    %v3726 = vpack.c.b16 %v3658, %v3657
    %v3727 = vpack.c.b16 %v3660, %v3659
    %v3728 = vpack.c.b16 %v3662, %v3661
    %v3729 = vpack.c.b16 %v3664, %v3663
    %v3730 = vpack.c.b16 %v3666, %v3665
    %3795 = vmatprep.subr.bf16.mxu0 0
    %3796 = vmatpush1.bf16.msra.mxu0 %v3667
    %3797 = vmatprep.subr.bf16.mxu0 0
    %3798 = vmatpush1.bf16.msra.mxu0 %v3668
    %3799 = vmatprep.subr.bf16.mxu0 0
    %3800 = vmatpush1.bf16.msra.mxu0 %v3669
    %3801 = vmatprep.subr.bf16.mxu0 0
    %3802 = vmatpush1.bf16.msra.mxu0 %v3670
    %3803 = vmatprep.subr.bf16.mxu0 0
    %3804 = vmatpush1.bf16.msra.mxu0 %v3671
    %3805 = vmatprep.subr.bf16.mxu0 0
    %3806 = vmatpush1.bf16.msra.mxu0 %v3672
    %3807 = vmatprep.subr.bf16.mxu0 0
    %3808 = vmatpush1.bf16.msra.mxu0 %v3673
    %3809 = vmatprep.subr.bf16.mxu0 0
    %3810 = vmatpush1.bf16.msra.mxu0 %v3674
    %3811 = vmatprep.subr.bf16.mxu0 0
    %3812 = vmatpush1.bf16.msra.mxu0 %v3675
    %3813 = vmatprep.subr.bf16.mxu0 0
    %3814 = vmatpush1.bf16.msra.mxu0 %v3676
    %3815 = vmatprep.subr.bf16.mxu0 0
    %3816 = vmatpush1.bf16.msra.mxu0 %v3677
    %3817 = vmatprep.subr.bf16.mxu0 0
    %3818 = vmatpush1.bf16.msra.mxu0 %v3678
    %3819 = vmatprep.subr.bf16.mxu0 0
    %3820 = vmatpush1.bf16.msra.mxu0 %v3679
    %3821 = vmatprep.subr.bf16.mxu0 0
    %3822 = vmatpush1.bf16.msra.mxu0 %v3680
    %3823 = vmatprep.subr.bf16.mxu0 0
    %3824 = vmatpush1.bf16.msra.mxu0 %v3681
    %3825 = vmatprep.subr.bf16.mxu0 0
    %3826 = vmatpush1.bf16.msra.mxu0 %v3682
    %3827 = vmatprep.mubr.bf16.mxu0 %v3269
    %3828 = vmatmul.mubr.bf16.gmra.mrb[0].mxu0 %v3268
    %v3829 = vpop.f32.mrb[0].mxu0
    %v3830 = vadd.f32 %v3409, %v3829
    %v3831 = vpop.f32.mrb[0].mxu0
    %v3832 = vpop.f32.mrb[0].mxu0
    %v3833 = vpop.f32.mrb[0].mxu0
    %3834 = vdwg.mxu0
    %3835 = vmatprep.subr.bf16.mxu0 0
    %3836 = vmatpush1.bf16.msra.mxu0 %v3683
    %3837 = vmatprep.subr.bf16.mxu0 0
    %3838 = vmatpush1.bf16.msra.mxu0 %v3684
    %3839 = vmatprep.subr.bf16.mxu0 0
    %3840 = vmatpush1.bf16.msra.mxu0 %v3685
    %3841 = vmatprep.subr.bf16.mxu0 0
    %3842 = vmatpush1.bf16.msra.mxu0 %v3686
    %3843 = vmatprep.subr.bf16.mxu0 0
    %3844 = vmatpush1.bf16.msra.mxu0 %v3687
    %3845 = vmatprep.subr.bf16.mxu0 0
    %3846 = vmatpush1.bf16.msra.mxu0 %v3688
    %3847 = vmatprep.subr.bf16.mxu0 0
    %3848 = vmatpush1.bf16.msra.mxu0 %v3689
    %3849 = vmatprep.subr.bf16.mxu0 0
    %3850 = vmatpush1.bf16.msra.mxu0 %v3690
    %3851 = vmatprep.subr.bf16.mxu0 0
    %3852 = vmatpush1.bf16.msra.mxu0 %v3691
    %3853 = vmatprep.subr.bf16.mxu0 0
    %3854 = vmatpush1.bf16.msra.mxu0 %v3692
    %3855 = vmatprep.subr.bf16.mxu0 0
    %3856 = vmatpush1.bf16.msra.mxu0 %v3693
    %3857 = vmatprep.subr.bf16.mxu0 0
    %3858 = vmatpush1.bf16.msra.mxu0 %v3694
    %3859 = vmatprep.subr.bf16.mxu0 0
    %3860 = vmatpush1.bf16.msra.mxu0 %v3695
    %3861 = vmatprep.subr.bf16.mxu0 0
    %3862 = vmatpush1.bf16.msra.mxu0 %v3696
    %3863 = vmatprep.subr.bf16.mxu0 0
    %3864 = vmatpush1.bf16.msra.mxu0 %v3697
    %3865 = vmatprep.subr.bf16.mxu0 0
    %3866 = vmatpush1.bf16.msra.mxu0 %v3698
    %3867 = vmatprep.mubr.bf16.mxu0 %v3271
    %3868 = vmatmul.mubr.bf16.gmra.mrb[0].mxu0 %v3270
    %v3869 = vpop.f32.mrb[0].mxu0
    %v3870 = vadd.f32 %v3830, %v3869
    %v3871 = vpop.f32.mrb[0].mxu0
    %v3872 = vpop.f32.mrb[0].mxu0
    %v3873 = vpop.f32.mrb[0].mxu0
    %3874 = vdwg.mxu0
    %3875 = vmatprep.subr.bf16.mxu0 0
    %3876 = vmatpush1.bf16.msra.mxu0 %v3699
    %3877 = vmatprep.subr.bf16.mxu0 0
    %3878 = vmatpush1.bf16.msra.mxu0 %v3700
    %3879 = vmatprep.subr.bf16.mxu0 0
    %3880 = vmatpush1.bf16.msra.mxu0 %v3701
    %3881 = vmatprep.subr.bf16.mxu0 0
    %3882 = vmatpush1.bf16.msra.mxu0 %v3702
    %3883 = vmatprep.subr.bf16.mxu0 0
    %3884 = vmatpush1.bf16.msra.mxu0 %v3703
    %3885 = vmatprep.subr.bf16.mxu0 0
    %3886 = vmatpush1.bf16.msra.mxu0 %v3704
    %3887 = vmatprep.subr.bf16.mxu0 0
    %3888 = vmatpush1.bf16.msra.mxu0 %v3705
    %3889 = vmatprep.subr.bf16.mxu0 0
    %3890 = vmatpush1.bf16.msra.mxu0 %v3706
    %3891 = vmatprep.subr.bf16.mxu0 0
    %3892 = vmatpush1.bf16.msra.mxu0 %v3707
    %3893 = vmatprep.subr.bf16.mxu0 0
    %3894 = vmatpush1.bf16.msra.mxu0 %v3708
    %3895 = vmatprep.subr.bf16.mxu0 0
    %3896 = vmatpush1.bf16.msra.mxu0 %v3709
    %3897 = vmatprep.subr.bf16.mxu0 0
    %3898 = vmatpush1.bf16.msra.mxu0 %v3710
    %3899 = vmatprep.subr.bf16.mxu0 0
    %3900 = vmatpush1.bf16.msra.mxu0 %v3711
    %3901 = vmatprep.subr.bf16.mxu0 0
    %3902 = vmatpush1.bf16.msra.mxu0 %v3712
    %3903 = vmatprep.subr.bf16.mxu0 0
    %3904 = vmatpush1.bf16.msra.mxu0 %v3713
    %3905 = vmatprep.subr.bf16.mxu0 0
    %3906 = vmatpush1.bf16.msra.mxu0 %v3714
    %3907 = vmatprep.mubr.bf16.mxu0 %v3273
    %3908 = vmatmul.mubr.bf16.gmra.mrb[0].mxu0 %v3272
    %v3909 = vpop.f32.mrb[0].mxu0
    %v3910 = vadd.f32 %v3870, %v3909
    %v3911 = vpop.f32.mrb[0].mxu0
    %v3912 = vpop.f32.mrb[0].mxu0
    %v3913 = vpop.f32.mrb[0].mxu0
    %3914 = vdwg.mxu0
    %3915 = vmatprep.subr.bf16.mxu0 0
    %3916 = vmatpush1.bf16.msra.mxu0 %v3715
    %3917 = vmatprep.subr.bf16.mxu0 0
    %3918 = vmatpush1.bf16.msra.mxu0 %v3716
    %3919 = vmatprep.subr.bf16.mxu0 0
    %3920 = vmatpush1.bf16.msra.mxu0 %v3717
    %3921 = vmatprep.subr.bf16.mxu0 0
    %3922 = vmatpush1.bf16.msra.mxu0 %v3718
    %3923 = vmatprep.subr.bf16.mxu0 0
    %3924 = vmatpush1.bf16.msra.mxu0 %v3719
    %3925 = vmatprep.subr.bf16.mxu0 0
    %3926 = vmatpush1.bf16.msra.mxu0 %v3720
    %3927 = vmatprep.subr.bf16.mxu0 0
    %3928 = vmatpush1.bf16.msra.mxu0 %v3721
    %3929 = vmatprep.subr.bf16.mxu0 0
    %3930 = vmatpush1.bf16.msra.mxu0 %v3722
    %3931 = vmatprep.subr.bf16.mxu0 0
    %3932 = vmatpush1.bf16.msra.mxu0 %v3723
    %3933 = vmatprep.subr.bf16.mxu0 0
    %3934 = vmatpush1.bf16.msra.mxu0 %v3724
    %3935 = vmatprep.subr.bf16.mxu0 0
    %3936 = vmatpush1.bf16.msra.mxu0 %v3725
    %3937 = vmatprep.subr.bf16.mxu0 0
    %3938 = vmatpush1.bf16.msra.mxu0 %v3726
    %3939 = vmatprep.subr.bf16.mxu0 0
    %3940 = vmatpush1.bf16.msra.mxu0 %v3727
    %3941 = vmatprep.subr.bf16.mxu0 0
    %3942 = vmatpush1.bf16.msra.mxu0 %v3728
    %3943 = vmatprep.subr.bf16.mxu0 0
    %3944 = vmatpush1.bf16.msra.mxu0 %v3729
    %3945 = vmatprep.subr.bf16.mxu0 0
    %3946 = vmatpush1.bf16.msra.mxu0 %v3730
    %3947 = vmatprep.mubr.bf16.mxu0 %v3275
    %3948 = vmatmul.mubr.bf16.gmra.mrb[0].mxu0 %v3274
    %v3949 = vpop.f32.mrb[0].mxu0
    %v3950 = vadd.f32 %v3910, %v3949
    %v3951 = vpop.f32.mrb[0].mxu0
    %v3952 = vpop.f32.mrb[0].mxu0
    %v3953 = vpop.f32.mrb[0].mxu0
    %3954 = vdwg.mxu0
    %v3955 = vtanh.pop %v3950
    %3956 = vst [vmem:[#allocation17] sm:$0xff] %v3955
    // Predicated region
    $region106: #{tpu_custom_call.1} parent=1 // pred_check
      _
    $region107: #{tpu_custom_call.1} parent=1 // pred_check_branch
      %3958 = sbr.rel (0) target = $region109
    $region108: #{tpu_custom_call.1} parent=1 // pred_region
      %s3960 = ssub.s32 128, 128
      %3961 = vsyncadd [#allocation4], %s3960
      %s3963 = sshll.u32 [#allocation17], 4
      %s3964 = int_to_ptr.vmem [resolvable:$true] %s3963
      %3966 = dma.vmem_to_hbm [thread:$0]  %s3964, 128, %s17, [#allocation4]
    $region109: #{tpu_custom_call.1} parent=1 // pred_fallthru
      _
    // Predicated region
    $region110: #{tpu_custom_call.1} parent=1 // pred_check
      _
    $region111: #{tpu_custom_call.1} parent=1 // pred_check_branch
      %3968 = sbr.rel (0) target = $region113
    $region112: #{tpu_custom_call.1} parent=1 // pred_region
      %3969 = dma.done [#allocation4], 128
    $region113: #{tpu_custom_call.1} parent=1 // pred_fallthru
      _
    %3970 = vsyncpa [#allocation3], 1
    %3971 = vsyncpa [#allocation6], 1
    %3972 = vsyncpa [#allocation9], 1
    %3973 = vsyncpa [#allocation12], 1
    %3974 = vsyncpa [#allocation15], 1
    %3975 = vsyncpa [#allocation4], 1

</llo_original>
